<compile_context>
chip_gen: v7x
topology: tpu7x:2x2x1
jax: 0.10.0
libtpu: 0.0.40
codegen_flags: <defaults>
</compile_context>

<pallas_src>
import numpy as np
import jax
import jax.numpy as jnp
from jax.experimental import pallas as pl
from jax.experimental.pallas import tpu as pltpu


def _make_mdconv_kernel(Kmax, stride, Ho, Wo):
    """Fused depthwise-conv kernel for one batch element (channels-last)."""

    def kernel(xph_ref, w_ref, b_ref, o_ref):
        # xph_ref: (stride, stride, Hd, Wd, C) phase-decimated padded input
        # w_ref  : (Kmax, Kmax, C) fused depthwise weights (channels on lanes)
        # b_ref  : (1, 1, C) bias
        # o_ref  : (Ho, Wo, C) output plane
        w = w_ref[...]
        # Load each decimation phase once (for stride==1 this is just the
        # full padded plane).  No strided slices inside the kernel.
        phases = [[xph_ref[py, px] for px in range(stride)]
                  for py in range(stride)]

        acc = jnp.zeros((Ho, Wo, w.shape[-1]), jnp.float32)
        for ky in range(Kmax):
            qy, py = divmod(ky, stride)
            for kx in range(Kmax):
                qx, px = divmod(kx, stride)
                # Contiguous static slice of the phase plane (a shifted view).
                patch = phases[py][px][qy:qy + Ho, qx:qx + Wo, :]
                # Per-channel weight row broadcast over the spatial dims:
                # one VPU multiply-add across the lane (channel) axis.
                acc = acc + patch * w[ky:ky + 1, kx:kx + 1, :]

        acc = acc + b_ref[...]          # bias added once, after the tap loop
        o_ref[...] = acc.astype(o_ref.dtype)

    return kernel


def mdconv_pallas(x, w_full, b_full, stride, Kmax):
    """Fused mixed depthwise conv.

    x      : (N, C, H, W) float32 (NCHW, matching the PyTorch module)
    w_full : (Kmax, Kmax, C) float32 fused depthwise filters (zero-padded)
    b_full : (1, 1, C) float32 bias
    """
    N, C, H, W = x.shape
    pad = Kmax // 2
    Ho = (H + 2 * pad - Kmax) // stride + 1
    Wo = (W + 2 * pad - Kmax) // stride + 1
    Hp, Wp = H + 2 * pad, W + 2 * pad
    Hd = -(-Hp // stride)   # ceil(Hp / stride)
    Wd = -(-Wp // stride)

    # NCHW -> NHWC (channels-last = lane-dense).  Pad ONCE for the fused Kmax
    # conv (extra bottom/right zeros only round Hp/Wp up to a stride multiple
    # and are never read by valid taps).
    x_nhwc = jnp.transpose(x, (0, 2, 3, 1))
    xp = jnp.pad(
        x_nhwc,
        ((0, 0),
         (pad, pad + Hd * stride - Hp),
         (pad, pad + Wd * stride - Wp),
         (0, 0)))
    # Phase-decimate so the kernel only ever does contiguous static slices:
    #   xph[n, py, px, i, j, c] = xp[n, i*stride + py, j*stride + px, c]
    xph = xp.reshape(N, Hd, stride, Wd, stride, C).transpose(0, 2, 4, 1, 3, 5)

    kernel = _make_mdconv_kernel(Kmax, stride, Ho, Wo)
    out_nhwc = pl.pallas_call(
        kernel,
        out_shape=jax.ShapeDtypeStruct((N, Ho, Wo, C), x.dtype),
        grid=(N,),
        in_specs=[
            # One batch element's full phase-decimated padded plane per step.
            pl.BlockSpec((None, stride, stride, Hd, Wd, C),
                         lambda n: (n, 0, 0, 0, 0, 0)),
            # Fused weights / bias: small, VMEM, channel axis on lanes.
            pl.BlockSpec((Kmax, Kmax, C), lambda n: (0, 0, 0)),
            pl.BlockSpec((1, 1, C), lambda n: (0, 0, 0)),
        ],
        out_specs=pl.BlockSpec((None, Ho, Wo, C), lambda n: (n, 0, 0, 0)),
        compiler_params=pltpu.CompilerParams(
            dimension_semantics=("parallel",),
            vmem_limit_bytes=64 * 1024 * 1024),
    )(xph, w_full, b_full)

    # Back to NCHW at the module boundary.
    return jnp.transpose(out_nhwc, (0, 3, 1, 2))


class MDConvPallas:
    """Pallas port of MDConv: channel-split mixed depthwise conv (fused)."""

    def __init__(self, nchannels, kernel_sizes, stride, key):
        self.nchannels = nchannels
        self.groups = len(kernel_sizes)
        self.split_channels = [nchannels // self.groups] * self.groups
        self.split_channels[0] += nchannels - sum(self.split_channels)
        self.kernel_sizes = list(kernel_sizes)
        self.stride = stride
        # TODO(synk): even kernel sizes would need per-group asymmetric
        # padding; MixNet only uses odd kernels, which the fused-Kmax
        # formulation reproduces exactly.
        assert all(k % 2 == 1 for k in self.kernel_sizes), \
            "MDConvPallas fused path supports odd kernel sizes only"
        self.Kmax = max(self.kernel_sizes)

        # Deterministic per-group init mimicking nn.Conv2d default
        # (fan_in = K*K for depthwise).
        self.params = []
        for cg, K in zip(self.split_channels, self.kernel_sizes):
            key, k1, k2 = jax.random.split(key, 3)
            bound = 1.0 / np.sqrt(K * K)
            w = jax.random.uniform(k1, (cg, K, K), jnp.float32, -bound, bound)
            b = jax.random.uniform(k2, (cg,), jnp.float32, -bound, bound)
            self.params.append((w, b))

        # Fused weight (Kmax, Kmax, C): each group's KxK filter zero-padded
        # and centered inside a Kmax x Kmax window (exact for odd K).
        blocks = []
        for (w, _), K in zip(self.params, self.kernel_sizes):
            d = (self.Kmax - K) // 2
            wk = jnp.transpose(w, (1, 2, 0))                       # (K, K, cg)
            wk = jnp.pad(wk, ((d, self.Kmax - K - d),
                              (d, self.Kmax - K - d), (0, 0)))
            blocks.append(wk)
        self.w_full = jnp.concatenate(blocks, axis=-1)             # (Kmax,Kmax,C)
        self.b_full = jnp.concatenate(
            [b for (_, b) in self.params]).reshape(1, 1, -1)       # (1,1,C)

    def __call__(self, x):
        return mdconv_pallas(x, self.w_full, self.b_full, self.stride, self.Kmax)


# ----------------------------- pure-JAX reference ---------------------------

def _depthwise_ref(x, w, b, stride):
    """Per-group depthwise conv reference (lax conv, NCHW)."""
    C, K, _ = w.shape
    pad = K // 2
    out = jax.lax.conv_general_dilated(
        x, w.reshape(C, 1, K, K),
        window_strides=(stride, stride),
        padding=((pad, pad), (pad, pad)),
        dimension_numbers=("NCHW", "OIHW", "NCHW"),
        feature_group_count=C)
    return out + b.reshape(1, C, 1, 1)


def _mdconv_ref(module: MDConvPallas, x):
    outs, start = [], 0
    for (w, b), cg in zip(module.params, module.split_channels):
        outs.append(_depthwise_ref(x[:, start:start + cg], w, b, module.stride))
        start += cg
    return jnp.concatenate(outs, axis=1)


if __name__ == "__main__":
    key = jax.random.PRNGKey(0)
    k_x, k_p = jax.random.split(key)

    # Small example consistent with the module: NCHW input.
    N, C, H, W = 2, 8, 16, 16
    kernel_sizes = [3, 5]

    x = jax.random.normal(k_x, (N, C, H, W), dtype=jnp.float32)

    # stride = 1 path
    mdconv1 = MDConvPallas(C, kernel_sizes, 1, k_p)
    out1 = jax.block_until_ready(mdconv1(x))
    ref1 = jax.block_until_ready(_mdconv_ref(mdconv1, x))
    np.testing.assert_allclose(np.asarray(out1), np.asarray(ref1),
                               rtol=1e-5, atol=1e-5)

    # stride = 2 path (exercises the phase-decimated layout)
    mdconv2 = MDConvPallas(C, kernel_sizes, 2, k_p)
    out2 = jax.block_until_ready(mdconv2(x))
    ref2 = jax.block_until_ready(_mdconv_ref(mdconv2, x))
    np.testing.assert_allclose(np.asarray(out2), np.asarray(ref2),
                               rtol=1e-5, atol=1e-5)

    print("KERNEL_OK")
</pallas_src>

<mosaic_0001>
module attributes {stable_mosaic.version = 11 : i64} {
  func.func @kernel(%arg0: i32, %arg1: memref<1x1x1x20x20x8xf32, #tpu.memory_space<vmem>>, %arg2: memref<5x5x8xf32, #tpu.memory_space<vmem>>, %arg3: memref<1x1x8xf32, #tpu.memory_space<vmem>>, %arg4: memref<1x16x16x8xf32, #tpu.memory_space<vmem>>) attributes {dimension_semantics = [#tpu.dimension_semantics<parallel>], iteration_bounds = array<i64: 2>, scalar_prefetch = 0 : i64, scratch_operands = 0 : i64, tpu.core_type = #tpu.core_type<tc>, window_params = [{transform_indices = @transform_0, window_bounds = array<i64: 1, 1, 1, 20, 20, 8>}, {pipeline_mode = #tpu.pipeline_mode<synchronous>, transform_indices = @transform_1, window_bounds = array<i64: 5, 5, 8>}, {pipeline_mode = #tpu.pipeline_mode<synchronous>, transform_indices = @transform_2, window_bounds = array<i64: 1, 1, 8>}, {transform_indices = @transform_3, window_bounds = array<i64: 1, 16, 16, 8>}]} {
    %c0 = arith.constant 0 : index
    %c0_0 = arith.constant 0 : index
    %c0_1 = arith.constant 0 : index
    %0 = vector.load %arg2[%c0, %c0_0, %c0_1] : memref<5x5x8xf32, #tpu.memory_space<vmem>>, vector<5x5x8xf32>
    %c0_2 = arith.constant 0 : index
    %c0_3 = arith.constant 0 : index
    %c0_4 = arith.constant 0 : index
    %c0_5 = arith.constant 0 : index
    %c0_6 = arith.constant 0 : index
    %c0_7 = arith.constant 0 : index
    %1 = vector.load %arg1[%c0_2, %c0_3, %c0_4, %c0_5, %c0_6, %c0_7] : memref<1x1x1x20x20x8xf32, #tpu.memory_space<vmem>>, vector<1x1x1x20x20x8xf32>
    %2 = vector.shape_cast %1 : vector<1x1x1x20x20x8xf32> to vector<20x20x8xf32>
    %cst = arith.constant 0.000000e+00 : f32
    %3 = vector.broadcast %cst : f32 to vector<16x16x8xf32>
    %4 = vector.extract_strided_slice %2 {offsets = [0, 0, 0], sizes = [16, 16, 8], strides = [1, 1, 1]} : vector<20x20x8xf32> to vector<16x16x8xf32>
    %5 = vector.extract_strided_slice %0 {offsets = [0, 0, 0], sizes = [1, 1, 8], strides = [1, 1, 1]} : vector<5x5x8xf32> to vector<1x1x8xf32>
    %6 = vector.broadcast %5 : vector<1x1x8xf32> to vector<16x16x8xf32>
    %7 = arith.mulf %4, %6 : vector<16x16x8xf32>
    %8 = arith.addf %3, %7 : vector<16x16x8xf32>
    %9 = vector.extract_strided_slice %2 {offsets = [0, 1, 0], sizes = [16, 16, 8], strides = [1, 1, 1]} : vector<20x20x8xf32> to vector<16x16x8xf32>
    %10 = vector.extract_strided_slice %0 {offsets = [0, 1, 0], sizes = [1, 1, 8], strides = [1, 1, 1]} : vector<5x5x8xf32> to vector<1x1x8xf32>
    %11 = vector.broadcast %10 : vector<1x1x8xf32> to vector<16x16x8xf32>
    %12 = arith.mulf %9, %11 : vector<16x16x8xf32>
    %13 = arith.addf %8, %12 : vector<16x16x8xf32>
    %14 = vector.extract_strided_slice %2 {offsets = [0, 2, 0], sizes = [16, 16, 8], strides = [1, 1, 1]} : vector<20x20x8xf32> to vector<16x16x8xf32>
    %15 = vector.extract_strided_slice %0 {offsets = [0, 2, 0], sizes = [1, 1, 8], strides = [1, 1, 1]} : vector<5x5x8xf32> to vector<1x1x8xf32>
    %16 = vector.broadcast %15 : vector<1x1x8xf32> to vector<16x16x8xf32>
    %17 = arith.mulf %14, %16 : vector<16x16x8xf32>
    %18 = arith.addf %13, %17 : vector<16x16x8xf32>
    %19 = vector.extract_strided_slice %2 {offsets = [0, 3, 0], sizes = [16, 16, 8], strides = [1, 1, 1]} : vector<20x20x8xf32> to vector<16x16x8xf32>
    %20 = vector.extract_strided_slice %0 {offsets = [0, 3, 0], sizes = [1, 1, 8], strides = [1, 1, 1]} : vector<5x5x8xf32> to vector<1x1x8xf32>
    %21 = vector.broadcast %20 : vector<1x1x8xf32> to vector<16x16x8xf32>
    %22 = arith.mulf %19, %21 : vector<16x16x8xf32>
    %23 = arith.addf %18, %22 : vector<16x16x8xf32>
    %24 = vector.extract_strided_slice %2 {offsets = [0, 4, 0], sizes = [16, 16, 8], strides = [1, 1, 1]} : vector<20x20x8xf32> to vector<16x16x8xf32>
    %25 = vector.extract_strided_slice %0 {offsets = [0, 4, 0], sizes = [1, 1, 8], strides = [1, 1, 1]} : vector<5x5x8xf32> to vector<1x1x8xf32>
    %26 = vector.broadcast %25 : vector<1x1x8xf32> to vector<16x16x8xf32>
    %27 = arith.mulf %24, %26 : vector<16x16x8xf32>
    %28 = arith.addf %23, %27 : vector<16x16x8xf32>
    %29 = vector.extract_strided_slice %2 {offsets = [1, 0, 0], sizes = [16, 16, 8], strides = [1, 1, 1]} : vector<20x20x8xf32> to vector<16x16x8xf32>
    %30 = vector.extract_strided_slice %0 {offsets = [1, 0, 0], sizes = [1, 1, 8], strides = [1, 1, 1]} : vector<5x5x8xf32> to vector<1x1x8xf32>
    %31 = vector.broadcast %30 : vector<1x1x8xf32> to vector<16x16x8xf32>
    %32 = arith.mulf %29, %31 : vector<16x16x8xf32>
    %33 = arith.addf %28, %32 : vector<16x16x8xf32>
    %34 = vector.extract_strided_slice %2 {offsets = [1, 1, 0], sizes = [16, 16, 8], strides = [1, 1, 1]} : vector<20x20x8xf32> to vector<16x16x8xf32>
    %35 = vector.extract_strided_slice %0 {offsets = [1, 1, 0], sizes = [1, 1, 8], strides = [1, 1, 1]} : vector<5x5x8xf32> to vector<1x1x8xf32>
    %36 = vector.broadcast %35 : vector<1x1x8xf32> to vector<16x16x8xf32>
    %37 = arith.mulf %34, %36 : vector<16x16x8xf32>
    %38 = arith.addf %33, %37 : vector<16x16x8xf32>
    %39 = vector.extract_strided_slice %2 {offsets = [1, 2, 0], sizes = [16, 16, 8], strides = [1, 1, 1]} : vector<20x20x8xf32> to vector<16x16x8xf32>
    %40 = vector.extract_strided_slice %0 {offsets = [1, 2, 0], sizes = [1, 1, 8], strides = [1, 1, 1]} : vector<5x5x8xf32> to vector<1x1x8xf32>
    %41 = vector.broadcast %40 : vector<1x1x8xf32> to vector<16x16x8xf32>
    %42 = arith.mulf %39, %41 : vector<16x16x8xf32>
    %43 = arith.addf %38, %42 : vector<16x16x8xf32>
    %44 = vector.extract_strided_slice %2 {offsets = [1, 3, 0], sizes = [16, 16, 8], strides = [1, 1, 1]} : vector<20x20x8xf32> to vector<16x16x8xf32>
    %45 = vector.extract_strided_slice %0 {offsets = [1, 3, 0], sizes = [1, 1, 8], strides = [1, 1, 1]} : vector<5x5x8xf32> to vector<1x1x8xf32>
    %46 = vector.broadcast %45 : vector<1x1x8xf32> to vector<16x16x8xf32>
    %47 = arith.mulf %44, %46 : vector<16x16x8xf32>
    %48 = arith.addf %43, %47 : vector<16x16x8xf32>
    %49 = vector.extract_strided_slice %2 {offsets = [1, 4, 0], sizes = [16, 16, 8], strides = [1, 1, 1]} : vector<20x20x8xf32> to vector<16x16x8xf32>
    %50 = vector.extract_strided_slice %0 {offsets = [1, 4, 0], sizes = [1, 1, 8], strides = [1, 1, 1]} : vector<5x5x8xf32> to vector<1x1x8xf32>
    %51 = vector.broadcast %50 : vector<1x1x8xf32> to vector<16x16x8xf32>
    %52 = arith.mulf %49, %51 : vector<16x16x8xf32>
    %53 = arith.addf %48, %52 : vector<16x16x8xf32>
    %54 = vector.extract_strided_slice %2 {offsets = [2, 0, 0], sizes = [16, 16, 8], strides = [1, 1, 1]} : vector<20x20x8xf32> to vector<16x16x8xf32>
    %55 = vector.extract_strided_slice %0 {offsets = [2, 0, 0], sizes = [1, 1, 8], strides = [1, 1, 1]} : vector<5x5x8xf32> to vector<1x1x8xf32>
    %56 = vector.broadcast %55 : vector<1x1x8xf32> to vector<16x16x8xf32>
    %57 = arith.mulf %54, %56 : vector<16x16x8xf32>
    %58 = arith.addf %53, %57 : vector<16x16x8xf32>
    %59 = vector.extract_strided_slice %2 {offsets = [2, 1, 0], sizes = [16, 16, 8], strides = [1, 1, 1]} : vector<20x20x8xf32> to vector<16x16x8xf32>
    %60 = vector.extract_strided_slice %0 {offsets = [2, 1, 0], sizes = [1, 1, 8], strides = [1, 1, 1]} : vector<5x5x8xf32> to vector<1x1x8xf32>
    %61 = vector.broadcast %60 : vector<1x1x8xf32> to vector<16x16x8xf32>
    %62 = arith.mulf %59, %61 : vector<16x16x8xf32>
    %63 = arith.addf %58, %62 : vector<16x16x8xf32>
    %64 = vector.extract_strided_slice %2 {offsets = [2, 2, 0], sizes = [16, 16, 8], strides = [1, 1, 1]} : vector<20x20x8xf32> to vector<16x16x8xf32>
    %65 = vector.extract_strided_slice %0 {offsets = [2, 2, 0], sizes = [1, 1, 8], strides = [1, 1, 1]} : vector<5x5x8xf32> to vector<1x1x8xf32>
    %66 = vector.broadcast %65 : vector<1x1x8xf32> to vector<16x16x8xf32>
    %67 = arith.mulf %64, %66 : vector<16x16x8xf32>
    %68 = arith.addf %63, %67 : vector<16x16x8xf32>
    %69 = vector.extract_strided_slice %2 {offsets = [2, 3, 0], sizes = [16, 16, 8], strides = [1, 1, 1]} : vector<20x20x8xf32> to vector<16x16x8xf32>
    %70 = vector.extract_strided_slice %0 {offsets = [2, 3, 0], sizes = [1, 1, 8], strides = [1, 1, 1]} : vector<5x5x8xf32> to vector<1x1x8xf32>
    %71 = vector.broadcast %70 : vector<1x1x8xf32> to vector<16x16x8xf32>
    %72 = arith.mulf %69, %71 : vector<16x16x8xf32>
    %73 = arith.addf %68, %72 : vector<16x16x8xf32>
    %74 = vector.extract_strided_slice %2 {offsets = [2, 4, 0], sizes = [16, 16, 8], strides = [1, 1, 1]} : vector<20x20x8xf32> to vector<16x16x8xf32>
    %75 = vector.extract_strided_slice %0 {offsets = [2, 4, 0], sizes = [1, 1, 8], strides = [1, 1, 1]} : vector<5x5x8xf32> to vector<1x1x8xf32>
    %76 = vector.broadcast %75 : vector<1x1x8xf32> to vector<16x16x8xf32>
    %77 = arith.mulf %74, %76 : vector<16x16x8xf32>
    %78 = arith.addf %73, %77 : vector<16x16x8xf32>
    %79 = vector.extract_strided_slice %2 {offsets = [3, 0, 0], sizes = [16, 16, 8], strides = [1, 1, 1]} : vector<20x20x8xf32> to vector<16x16x8xf32>
    %80 = vector.extract_strided_slice %0 {offsets = [3, 0, 0], sizes = [1, 1, 8], strides = [1, 1, 1]} : vector<5x5x8xf32> to vector<1x1x8xf32>
    %81 = vector.broadcast %80 : vector<1x1x8xf32> to vector<16x16x8xf32>
    %82 = arith.mulf %79, %81 : vector<16x16x8xf32>
    %83 = arith.addf %78, %82 : vector<16x16x8xf32>
    %84 = vector.extract_strided_slice %2 {offsets = [3, 1, 0], sizes = [16, 16, 8], strides = [1, 1, 1]} : vector<20x20x8xf32> to vector<16x16x8xf32>
    %85 = vector.extract_strided_slice %0 {offsets = [3, 1, 0], sizes = [1, 1, 8], strides = [1, 1, 1]} : vector<5x5x8xf32> to vector<1x1x8xf32>
    %86 = vector.broadcast %85 : vector<1x1x8xf32> to vector<16x16x8xf32>
    %87 = arith.mulf %84, %86 : vector<16x16x8xf32>
    %88 = arith.addf %83, %87 : vector<16x16x8xf32>
    %89 = vector.extract_strided_slice %2 {offsets = [3, 2, 0], sizes = [16, 16, 8], strides = [1, 1, 1]} : vector<20x20x8xf32> to vector<16x16x8xf32>
    %90 = vector.extract_strided_slice %0 {offsets = [3, 2, 0], sizes = [1, 1, 8], strides = [1, 1, 1]} : vector<5x5x8xf32> to vector<1x1x8xf32>
    %91 = vector.broadcast %90 : vector<1x1x8xf32> to vector<16x16x8xf32>
    %92 = arith.mulf %89, %91 : vector<16x16x8xf32>
    %93 = arith.addf %88, %92 : vector<16x16x8xf32>
    %94 = vector.extract_strided_slice %2 {offsets = [3, 3, 0], sizes = [16, 16, 8], strides = [1, 1, 1]} : vector<20x20x8xf32> to vector<16x16x8xf32>
    %95 = vector.extract_strided_slice %0 {offsets = [3, 3, 0], sizes = [1, 1, 8], strides = [1, 1, 1]} : vector<5x5x8xf32> to vector<1x1x8xf32>
    %96 = vector.broadcast %95 : vector<1x1x8xf32> to vector<16x16x8xf32>
    %97 = arith.mulf %94, %96 : vector<16x16x8xf32>
    %98 = arith.addf %93, %97 : vector<16x16x8xf32>
    %99 = vector.extract_strided_slice %2 {offsets = [3, 4, 0], sizes = [16, 16, 8], strides = [1, 1, 1]} : vector<20x20x8xf32> to vector<16x16x8xf32>
    %100 = vector.extract_strided_slice %0 {offsets = [3, 4, 0], sizes = [1, 1, 8], strides = [1, 1, 1]} : vector<5x5x8xf32> to vector<1x1x8xf32>
    %101 = vector.broadcast %100 : vector<1x1x8xf32> to vector<16x16x8xf32>
    %102 = arith.mulf %99, %101 : vector<16x16x8xf32>
    %103 = arith.addf %98, %102 : vector<16x16x8xf32>
    %104 = vector.extract_strided_slice %2 {offsets = [4, 0, 0], sizes = [16, 16, 8], strides = [1, 1, 1]} : vector<20x20x8xf32> to vector<16x16x8xf32>
    %105 = vector.extract_strided_slice %0 {offsets = [4, 0, 0], sizes = [1, 1, 8], strides = [1, 1, 1]} : vector<5x5x8xf32> to vector<1x1x8xf32>
    %106 = vector.broadcast %105 : vector<1x1x8xf32> to vector<16x16x8xf32>
    %107 = arith.mulf %104, %106 : vector<16x16x8xf32>
    %108 = arith.addf %103, %107 : vector<16x16x8xf32>
    %109 = vector.extract_strided_slice %2 {offsets = [4, 1, 0], sizes = [16, 16, 8], strides = [1, 1, 1]} : vector<20x20x8xf32> to vector<16x16x8xf32>
    %110 = vector.extract_strided_slice %0 {offsets = [4, 1, 0], sizes = [1, 1, 8], strides = [1, 1, 1]} : vector<5x5x8xf32> to vector<1x1x8xf32>
    %111 = vector.broadcast %110 : vector<1x1x8xf32> to vector<16x16x8xf32>
    %112 = arith.mulf %109, %111 : vector<16x16x8xf32>
    %113 = arith.addf %108, %112 : vector<16x16x8xf32>
    %114 = vector.extract_strided_slice %2 {offsets = [4, 2, 0], sizes = [16, 16, 8], strides = [1, 1, 1]} : vector<20x20x8xf32> to vector<16x16x8xf32>
    %115 = vector.extract_strided_slice %0 {offsets = [4, 2, 0], sizes = [1, 1, 8], strides = [1, 1, 1]} : vector<5x5x8xf32> to vector<1x1x8xf32>
    %116 = vector.broadcast %115 : vector<1x1x8xf32> to vector<16x16x8xf32>
    %117 = arith.mulf %114, %116 : vector<16x16x8xf32>
    %118 = arith.addf %113, %117 : vector<16x16x8xf32>
    %119 = vector.extract_strided_slice %2 {offsets = [4, 3, 0], sizes = [16, 16, 8], strides = [1, 1, 1]} : vector<20x20x8xf32> to vector<16x16x8xf32>
    %120 = vector.extract_strided_slice %0 {offsets = [4, 3, 0], sizes = [1, 1, 8], strides = [1, 1, 1]} : vector<5x5x8xf32> to vector<1x1x8xf32>
    %121 = vector.broadcast %120 : vector<1x1x8xf32> to vector<16x16x8xf32>
    %122 = arith.mulf %119, %121 : vector<16x16x8xf32>
    %123 = arith.addf %118, %122 : vector<16x16x8xf32>
    %124 = vector.extract_strided_slice %2 {offsets = [4, 4, 0], sizes = [16, 16, 8], strides = [1, 1, 1]} : vector<20x20x8xf32> to vector<16x16x8xf32>
    %125 = vector.extract_strided_slice %0 {offsets = [4, 4, 0], sizes = [1, 1, 8], strides = [1, 1, 1]} : vector<5x5x8xf32> to vector<1x1x8xf32>
    %126 = vector.broadcast %125 : vector<1x1x8xf32> to vector<16x16x8xf32>
    %127 = arith.mulf %124, %126 : vector<16x16x8xf32>
    %128 = arith.addf %123, %127 : vector<16x16x8xf32>
    %c0_8 = arith.constant 0 : index
    %c0_9 = arith.constant 0 : index
    %c0_10 = arith.constant 0 : index
    %129 = vector.load %arg3[%c0_8, %c0_9, %c0_10] : memref<1x1x8xf32, #tpu.memory_space<vmem>>, vector<1x1x8xf32>
    %130 = vector.broadcast %129 : vector<1x1x8xf32> to vector<16x16x8xf32>
    %131 = arith.addf %128, %130 : vector<16x16x8xf32>
    %c0_11 = arith.constant 0 : index
    %c0_12 = arith.constant 0 : index
    %c0_13 = arith.constant 0 : index
    %c0_14 = arith.constant 0 : index
    %132 = vector.load %arg4[%c0_11, %c0_12, %c0_13, %c0_14] : memref<1x16x16x8xf32, #tpu.memory_space<vmem>>, vector<1x16x16x8xf32>
    %133 = vector.shape_cast %132 : vector<1x16x16x8xf32> to vector<16x16x8xf32>
    %134 = vector.shape_cast %131 : vector<16x16x8xf32> to vector<1x16x16x8xf32>
    tpu.vector_store %arg4[%c0_11, %c0_12, %c0_13, %c0_14], %134 {strides = array<i32>} : memref<1x16x16x8xf32, #tpu.memory_space<vmem>>, vector<1x16x16x8xf32>,
    return
  }
  func.func @transform_0(%arg0: i32) -> (i32, i32, i32, i32, i32, i32) {
    %c0_i32 = arith.constant 0 : i32
    %c0_i32_0 = arith.constant 0 : i32
    %c0_i32_1 = arith.constant 0 : i32
    %c0_i32_2 = arith.constant 0 : i32
    %c0_i32_3 = arith.constant 0 : i32
    %c0_i32_4 = arith.constant 0 : i32
    return %arg0, %c0_i32, %c0_i32_0, %c0_i32_1, %c0_i32_2, %c0_i32_3 : i32, i32, i32, i32, i32, i32
  }
  func.func @transform_1(%arg0: i32) -> (i32, i32, i32) {
    %c0_i32 = arith.constant 0 : i32
    %c0_i32_0 = arith.constant 0 : i32
    %c0_i32_1 = arith.constant 0 : i32
    %c0_i32_2 = arith.constant 0 : i32
    return %c0_i32, %c0_i32_0, %c0_i32_1 : i32, i32, i32
  }
  func.func @transform_2(%arg0: i32) -> (i32, i32, i32) {
    %c0_i32 = arith.constant 0 : i32
    %c0_i32_0 = arith.constant 0 : i32
    %c0_i32_1 = arith.constant 0 : i32
    %c0_i32_2 = arith.constant 0 : i32
    return %c0_i32, %c0_i32_0, %c0_i32_1 : i32, i32, i32
  }
  func.func @transform_3(%arg0: i32) -> (i32, i32, i32, i32) {
    %c0_i32 = arith.constant 0 : i32
    %c0_i32_0 = arith.constant 0 : i32
    %c0_i32_1 = arith.constant 0 : i32
    %c0_i32_2 = arith.constant 0 : i32
    return %arg0, %c0_i32, %c0_i32_0, %c0_i32_1 : i32, i32, i32, i32
  }
}

</mosaic_0001>

<llo_original>
// kernel: tpu_custom_call.1
$region0: #{tpu_custom_call.1}
  #allocation0 [shape = 'u32[]', space=smem, size = 0x4, offset = 0x4, fixed_abs, tag = 'smem constant byte address 0x4 - core index']
  #allocation1 [shape = 'u32[144,128]{1,0:T(1,128)}', space=vmem, size = 0x12000, scoped, tag = 'internal scratch']
  %s0 = inlined_call_operand.hbm [shape: f32[2,1,1,20,20,8], index: 0, kind: input, shape index: {}]
  %s1 = inlined_call_operand.hbm [shape: f32[5,5,8], index: 1, kind: input, shape index: {}]
  %s2 = inlined_call_operand.hbm [shape: f32[1,1,8], index: 2, kind: input, shape index: {}]
  %s3 = inlined_call_operand.hbm [shape: f32[2,16,16,8], index: 3, kind: output, shape index: {}]
  %s4 = sld [smem:[#allocation0]]
  $region57: #{tpu_custom_call.1} parent=0
    _
  %s6 = ssub.s32 1, %s4
  %s7 = scalar_select 0, %s6, %s4
  $region1: #{tpu_custom_call.1} parent=0
    #allocation2 [shape = 'u8[491520]{0}', space=vmem, size = 0x78000, scoped, tag = 'input window, operand 0']
    #allocation3 [shape = 's32[2]{0}', space=sflag, size = 0x8, scoped, tag = 'scoped memory for tpu_custom_call.1']
    #allocation4 [shape = 's32[2]{0}', space=sflag, size = 0x8, scoped, tag = 'scoped memory for tpu_custom_call.1']
    #allocation5 [shape = 'u8[20480]{0}', space=vmem, size = 0x5000, scoped, tag = 'input window, operand 1, single buffered']
    #allocation6 [shape = 's32[1]{0}', space=sflag, size = 0x4, scoped, tag = 'scoped memory for tpu_custom_call.1']
    #allocation7 [shape = 'u8[512]{0}', space=vmem, size = 0x400, scoped, tag = 'input window, operand 2, single buffered']
    #allocation8 [shape = 'u8[262144]{0}', space=vmem, size = 0x40000, scoped, tag = 'output window, operand 0']
    %8 = vsyncpa [#allocation3], 0
    %s9 = scalar_lea.sflag [#allocation3], 1
    %10 = vsyncpa %s9, 0
    %11 = vsyncpa [#allocation6], 0
    %12 = vsyncpa [#allocation4], 0
    %s13 = scalar_lea.sflag [#allocation4], 1
    %14 = vsyncpa %s13, 0
    loop: start=0, step=1, limit=4
    $region2: #{tpu_custom_call.1} parent=1 // loop_pre_header
      _
    $region3: #{tpu_custom_call.1} parent=1 // loop_header
      %s16 = sphi 0, %s20
      %p17 = scmp.ge.s32.totalorder %s16, 4
      %s26 = sphi 0, %s28
      %s29 = sphi 0, %s26
      %s30 = sphi 0, %s29
      %s46 = sphi 0, %s30
      %s50 = sphi 0, %s50
      %s52 = sphi 0, %s50
      %s53 = sphi 0, %s52
      %s67 = sphi 0, %s53
      %s71 = sphi 0, %s71
      %s73 = sphi 0, %s71
      %s74 = sphi 0, %s73
      %s88 = sphi 0, %s74
      %s94 = sphi 0, %s96
      %s97 = sphi 0, %s94
      %s98 = sphi 0, %s97
      %s114 = sphi 0, %s98
    $region4: #{tpu_custom_call.1} parent=1 // loop_header_branch
      %19 = sbr.rel (%p17) target = $region8
    $region5: #{tpu_custom_call.1} parent=1 // loop_body
      %s21 = ssub.s32 %s16, 1
      %s22 = ssub.s32 %s16, 2
      %s23 = sadd.s32 %s16, 1
      %s24 = ssub.s32 %s16, %s23
      %p25 = scmp.eq.s32.totalorder %s24, 0
      %s27 = sadd.s32 %s26, 1
      %s28 = scalar_select %p25, %s26, %s27
      %p31 = pneg %p25
      %p32 = scmp.eq.s32.totalorder %s16, 1
      %p33 = por %p31, %p32
      %p34 = scmp.ne.s32.totalorder %s26, %s29
      %p35 = scmp.eq.s32.totalorder %s16, 0
      %p36 = por %p34, %p35
      %p37 = scmp.ne.s32.totalorder %s26, %s29
      %p38 = scmp.eq.s32.totalorder %s21, 1
      %p39 = por %p37, %p38
      %p40 = scmp.ne.s32.totalorder %s29, %s30
      %p41 = scmp.eq.s32.totalorder %s21, 0
      %p42 = por %p40, %p41
      %p43 = scmp.ne.s32.totalorder %s29, %s30
      %p44 = scmp.eq.s32.totalorder %s22, 1
      %p45 = por %p43, %p44
      %p47 = scmp.ne.s32.totalorder %s30, %s46
      %p48 = scmp.eq.s32.totalorder %s22, 0
      %p49 = por %p47, %p48
      %s51 = sadd.s32 %s50, 1
      %p54 = scmp.eq.s32.totalorder %s16, 1
      %p55 = scmp.ne.s32.totalorder %s50, %s52
      %p56 = scmp.eq.s32.totalorder %s16, 0
      %p57 = por %p55, %p56
      %p58 = scmp.ne.s32.totalorder %s50, %s52
      %p59 = scmp.eq.s32.totalorder %s21, 1
      %p60 = por %p58, %p59
      %p61 = scmp.ne.s32.totalorder %s52, %s53
      %p62 = scmp.eq.s32.totalorder %s21, 0
      %p63 = por %p61, %p62
      %p64 = scmp.ne.s32.totalorder %s52, %s53
      %p65 = scmp.eq.s32.totalorder %s22, 1
      %p66 = por %p64, %p65
      %p68 = scmp.ne.s32.totalorder %s53, %s67
      %p69 = scmp.eq.s32.totalorder %s22, 0
      %p70 = por %p68, %p69
      %s72 = sadd.s32 %s71, 1
      %p75 = scmp.eq.s32.totalorder %s16, 1
      %p76 = scmp.ne.s32.totalorder %s71, %s73
      %p77 = scmp.eq.s32.totalorder %s16, 0
      %p78 = por %p76, %p77
      %p79 = scmp.ne.s32.totalorder %s71, %s73
      %p80 = scmp.eq.s32.totalorder %s21, 1
      %p81 = por %p79, %p80
      %p82 = scmp.ne.s32.totalorder %s73, %s74
      %p83 = scmp.eq.s32.totalorder %s21, 0
      %p84 = por %p82, %p83
      %p85 = scmp.ne.s32.totalorder %s73, %s74
      %p86 = scmp.eq.s32.totalorder %s22, 1
      %p87 = por %p85, %p86
      %p89 = scmp.ne.s32.totalorder %s74, %s88
      %p90 = scmp.eq.s32.totalorder %s22, 0
      %p91 = por %p89, %p90
      %s92 = ssub.s32 %s16, %s23
      %p93 = scmp.eq.s32.totalorder %s92, 0
      %s95 = sadd.s32 %s94, 1
      %s96 = scalar_select %p93, %s94, %s95
      %p99 = pneg %p93
      %p100 = scmp.eq.s32.totalorder %s16, 1
      %p101 = por %p99, %p100
      %p102 = scmp.ne.s32.totalorder %s94, %s97
      %p103 = scmp.eq.s32.totalorder %s16, 0
      %p104 = por %p102, %p103
      %p105 = scmp.ne.s32.totalorder %s94, %s97
      %p106 = scmp.eq.s32.totalorder %s21, 1
      %p107 = por %p105, %p106
      %p108 = scmp.ne.s32.totalorder %s97, %s98
      %p109 = scmp.eq.s32.totalorder %s21, 0
      %p110 = por %p108, %p109
      %p111 = scmp.ne.s32.totalorder %s97, %s98
      %p112 = scmp.eq.s32.totalorder %s22, 1
      %p113 = por %p111, %p112
      %p115 = scmp.ne.s32.totalorder %s98, %s114
      %p116 = scmp.eq.s32.totalorder %s22, 0
      %p117 = por %p115, %p116
      %p118 = scmp.le.s32.totalorder 1, %s16
      %p119 = scmp.lt.s32.totalorder %s16, 3
      %p120 = pnand %p118, %p119
      %p121 = pneg %p120
      // Predicated region
      $region9: #{tpu_custom_call.1} parent=5 // pred_check
        _
      $region10: #{tpu_custom_call.1} parent=5 // pred_check_branch
        %123 = sbr.rel (%p120) target = $region12
      $region11: #{tpu_custom_call.1} parent=5 // pred_region
        %s124 = ssub.s32 %s16, 1
        // Predicated region
        $region13: #{tpu_custom_call.1} parent=11 // pred_check
          %p125 = pneg %p63
        $region14: #{tpu_custom_call.1} parent=11 // pred_check_branch
          %127 = sbr.rel (%p125) target = $region16
        $region15: #{tpu_custom_call.1} parent=11 // pred_region
          %s129 = ssub.s32 640, 640
          %130 = vsyncadd [#allocation6], %s129
          %s131 = sshll.u32 [#allocation5], 4
          %s132 = int_to_ptr.vmem [resolvable:$true] %s131
          %137 = dma.hbm_to_vmem [thread:$0]  %s1, 640, %s132, [#allocation6], 128, 128, 8
        $region16: #{tpu_custom_call.1} parent=11 // pred_fallthru
          _
        // Predicated region
        $region17: #{tpu_custom_call.1} parent=11 // pred_check
          %p138 = pneg %p84
        $region18: #{tpu_custom_call.1} parent=11 // pred_check_branch
          %140 = sbr.rel (%p138) target = $region20
        $region19: #{tpu_custom_call.1} parent=11 // pred_region
          %s142 = ssub.s32 16, 16
          %143 = vsyncadd [#allocation6], %s142
          %s145 = sshll.u32 [#allocation7], 4
          %s146 = int_to_ptr.vmem [resolvable:$true] %s145
          %148 = dma.hbm_to_vmem [thread:$0]  %s2, 16, %s146, [#allocation6]
        $region20: #{tpu_custom_call.1} parent=11 // pred_fallthru
          _
      $region12: #{tpu_custom_call.1} parent=5 // pred_fallthru
        _
      %p149 = scmp.lt.s32.totalorder %s16, 2
      // Predicated region
      $region21: #{tpu_custom_call.1} parent=5 // pred_check
        %p150 = pneg %p149
      $region22: #{tpu_custom_call.1} parent=5 // pred_check_branch
        %152 = sbr.rel (%p150) target = $region24
      $region23: #{tpu_custom_call.1} parent=5 // pred_region
        // Predicated region
        $region25: #{tpu_custom_call.1} parent=23 // pred_check
          %p153 = pneg %p36
        $region26: #{tpu_custom_call.1} parent=23 // pred_check_branch
          %155 = sbr.rel (%p153) target = $region28
        $region27: #{tpu_custom_call.1} parent=23 // pred_region
          %s156 = sand.u32 %s26, 1
          %s157 = scalar_lea.sflag [#allocation3], %s156
          %s158 = sand.u32 %s26, 1
          %s159 = smul.addr %s158, 480
          %s160 = scalar_lea.vmem [#allocation2], %s159
          %s162 = ssub.s32 7680, 7680
          %163 = vsyncadd %s157, %s162
          %s164 = smul.addr %s16, 60
          %s165 = smul.addr %s164, 128
          %s166 = scalar_lea.hbm %s0, %s165
          %s167 = sshll.u32 %s160, 4
          %s168 = int_to_ptr.vmem [resolvable:$true] %s167
          %173 = dma.hbm_to_vmem [thread:$0]  %s166, 7680, %s168, %s157, 128, 128, 8
        $region28: #{tpu_custom_call.1} parent=23 // pred_fallthru
          _
      $region24: #{tpu_custom_call.1} parent=5 // pred_fallthru
        _
      %p174 = scmp.le.s32.totalorder 1, %s16
      %p175 = scmp.lt.s32.totalorder %s16, 3
      %p176 = pnand %p174, %p175
      %p177 = pneg %p176
      // Predicated region
      $region29: #{tpu_custom_call.1} parent=5 // pred_check
        _
      $region30: #{tpu_custom_call.1} parent=5 // pred_check_branch
        %179 = sbr.rel (%p176) target = $region32
      $region31: #{tpu_custom_call.1} parent=5 // pred_region
        %s180 = ssub.s32 %s16, 1
        %s181 = sand.u32 %s29, 1
        %s182 = scalar_lea.sflag [#allocation3], %s181
        %s183 = sand.u32 %s29, 1
        %s184 = smul.addr %s183, 480
        %s185 = scalar_lea.vmem [#allocation2], %s184
        // Predicated region
        $region33: #{tpu_custom_call.1} parent=31 // pred_check
          %p186 = pneg %p42
        $region34: #{tpu_custom_call.1} parent=31 // pred_check_branch
          %188 = sbr.rel (%p186) target = $region36
        $region35: #{tpu_custom_call.1} parent=31 // pred_region
          %189 = dma.done %s182, 7680
        $region36: #{tpu_custom_call.1} parent=31 // pred_fallthru
          _
        // Predicated region
        $region37: #{tpu_custom_call.1} parent=31 // pred_check
          %p190 = pneg %p63
        $region38: #{tpu_custom_call.1} parent=31 // pred_check_branch
          %192 = sbr.rel (%p190) target = $region40
        $region39: #{tpu_custom_call.1} parent=31 // pred_region
          %193 = dma.done [#allocation6], 640
        $region40: #{tpu_custom_call.1} parent=31 // pred_fallthru
          _
        // Predicated region
        $region41: #{tpu_custom_call.1} parent=31 // pred_check
          %p194 = pneg %p84
        $region42: #{tpu_custom_call.1} parent=31 // pred_check_branch
          %196 = sbr.rel (%p194) target = $region44
        $region43: #{tpu_custom_call.1} parent=31 // pred_region
          %197 = dma.done [#allocation6], 16
        $region44: #{tpu_custom_call.1} parent=31 // pred_fallthru
          _
        %s198 = sand.u32 %s29, 1
        %s199 = scalar_lea.sflag [#allocation3], %s198
        %s200 = sand.u32 %s29, 1
        %s201 = smul.addr %s200, 480
        %s202 = scalar_lea.vmem [#allocation2], %s201
        %p203 = pneg %p42
        %p204 = pneg %p39
        %p205 = pneg %p63
        %p206 = pneg %p60
        %p207 = pneg %p84
        %p208 = pneg %p81
        %p209 = pneg %p110
        %p210 = pneg %p107
        %s211 = sand.u32 %s97, 1
        %s212 = scalar_lea.sflag [#allocation4], %s211
        %s213 = sand.u32 %s97, 1
        %s214 = smul.addr %s213, 256
        %s215 = scalar_lea.vmem [#allocation8], %s214
        %v216 = vld [vmem:[#allocation5] sm:$0x1f]
        %v217 = vld [vmem:[#allocation5 + $0x8] sm:$0x1f]
        %v218 = vld [vmem:[#allocation5 + $0x10] sm:$0x1f]
        %v219 = vld [vmem:[#allocation5 + $0x18] sm:$0x1f]
        %v220 = vld [vmem:[#allocation5 + $0x20] sm:$0x1f]
        %v221 = vld [vmem:[%s185] sm:$0xff]
        %v222 = vld [vmem:[%s185 + $0x8] sm:$0xff]
        %v223 = vld [vmem:[%s185 + $0x10] sm:$0xf]
        %v224 = vld [vmem:[%s185 + $0x18] sm:$0xff]
        %v225 = vld [vmem:[%s185 + $0x20] sm:$0xff]
        %v226 = vld [vmem:[%s185 + $0x28] sm:$0xf]
        %v227 = vld [vmem:[%s185 + $0x30] sm:$0xff]
        %v228 = vld [vmem:[%s185 + $0x38] sm:$0xff]
        %v229 = vld [vmem:[%s185 + $0x40] sm:$0xf]
        %v230 = vld [vmem:[%s185 + $0x48] sm:$0xff]
        %v231 = vld [vmem:[%s185 + $0x50] sm:$0xff]
        %v232 = vld [vmem:[%s185 + $0x58] sm:$0xf]
        %v233 = vld [vmem:[%s185 + $0x60] sm:$0xff]
        %v234 = vld [vmem:[%s185 + $0x68] sm:$0xff]
        %v235 = vld [vmem:[%s185 + $0x70] sm:$0xf]
        %v236 = vld [vmem:[%s185 + $0x78] sm:$0xff]
        %v237 = vld [vmem:[%s185 + $0x80] sm:$0xff]
        %v238 = vld [vmem:[%s185 + $0x88] sm:$0xf]
        %v239 = vld [vmem:[%s185 + $0x90] sm:$0xff]
        %v240 = vld [vmem:[%s185 + $0x98] sm:$0xff]
        %v241 = vld [vmem:[%s185 + $0xa0] sm:$0xf]
        %v242 = vld [vmem:[%s185 + $0xa8] sm:$0xff]
        %v243 = vld [vmem:[%s185 + $0xb0] sm:$0xff]
        %v244 = vld [vmem:[%s185 + $0xb8] sm:$0xf]
        %v245 = vld [vmem:[%s185 + $0xc0] sm:$0xff]
        %v246 = vld [vmem:[%s185 + $0xc8] sm:$0xff]
        %v247 = vld [vmem:[%s185 + $0xd0] sm:$0xf]
        %v248 = vld [vmem:[%s185 + $0xd8] sm:$0xff]
        %v249 = vld [vmem:[%s185 + $0xe0] sm:$0xff]
        %v250 = vld [vmem:[%s185 + $0xe8] sm:$0xf]
        %v251 = vld [vmem:[%s185 + $0xf0] sm:$0xff]
        %v252 = vld [vmem:[%s185 + $0xf8] sm:$0xff]
        %v253 = vld [vmem:[%s185 + $0x100] sm:$0xf]
        %v254 = vld [vmem:[%s185 + $0x108] sm:$0xff]
        %v255 = vld [vmem:[%s185 + $0x110] sm:$0xff]
        %v256 = vld [vmem:[%s185 + $0x118] sm:$0xf]
        %v257 = vld [vmem:[%s185 + $0x120] sm:$0xff]
        %v258 = vld [vmem:[%s185 + $0x128] sm:$0xff]
        %v259 = vld [vmem:[%s185 + $0x130] sm:$0xf]
        %v260 = vld [vmem:[%s185 + $0x138] sm:$0xff]
        %v261 = vld [vmem:[%s185 + $0x140] sm:$0xff]
        %v262 = vld [vmem:[%s185 + $0x148] sm:$0xf]
        %v263 = vld [vmem:[%s185 + $0x150] sm:$0xff]
        %v264 = vld [vmem:[%s185 + $0x158] sm:$0xff]
        %v265 = vld [vmem:[%s185 + $0x160] sm:$0xf]
        %v266 = vld [vmem:[%s185 + $0x168] sm:$0xff]
        %v267 = vld [vmem:[%s185 + $0x170] sm:$0xff]
        %v268 = vld [vmem:[%s185 + $0x178] sm:$0xf]
        %v269 = vld [vmem:[%s185 + $0x180] sm:$0xff]
        %v270 = vld [vmem:[%s185 + $0x188] sm:$0xff]
        %v271 = vld [vmem:[%s185 + $0x190] sm:$0xf]
        %v272 = vld [vmem:[%s185 + $0x198] sm:$0xff]
        %v273 = vld [vmem:[%s185 + $0x1a0] sm:$0xff]
        %v274 = vld [vmem:[%s185 + $0x1a8] sm:$0xf]
        %v275 = vld [vmem:[%s185 + $0x1b0] sm:$0xff]
        %v276 = vld [vmem:[%s185 + $0x1b8] sm:$0xff]
        %v277 = vld [vmem:[%s185 + $0x1c0] sm:$0xf]
        %v278 = vld [vmem:[%s185 + $0x1c8] sm:$0xff]
        %v279 = vld [vmem:[%s185 + $0x1d0] sm:$0xff]
        %v280 = vld [vmem:[%s185 + $0x1d8] sm:$0xf]
        %v281 = vlaneseq
        %v282 = vshrl.u32 %v281, 7
        %v283 = vsub.s32 0, %v282
        %v284 = vrot.slane %v216, %v283
        %v285 = vmul.f32 %v221, %v284
        %v286 = vmul.f32 %v222, %v284
        %v287 = vmul.f32 %v224, %v284
        %v288 = vmul.f32 %v225, %v284
        %v289 = vmul.f32 %v227, %v284
        %v290 = vmul.f32 %v228, %v284
        %v291 = vmul.f32 %v230, %v284
        %v292 = vmul.f32 %v231, %v284
        %v293 = vmul.f32 %v233, %v284
        %v294 = vmul.f32 %v234, %v284
        %v295 = vmul.f32 %v236, %v284
        %v296 = vmul.f32 %v237, %v284
        %v297 = vmul.f32 %v239, %v284
        %v298 = vmul.f32 %v240, %v284
        %v299 = vmul.f32 %v242, %v284
        %v300 = vmul.f32 %v243, %v284
        %v301 = vmul.f32 %v245, %v284
        %v302 = vmul.f32 %v246, %v284
        %v303 = vmul.f32 %v248, %v284
        %v304 = vmul.f32 %v249, %v284
        %v305 = vmul.f32 %v251, %v284
        %v306 = vmul.f32 %v252, %v284
        %v307 = vmul.f32 %v254, %v284
        %v308 = vmul.f32 %v255, %v284
        %v309 = vmul.f32 %v257, %v284
        %v310 = vmul.f32 %v258, %v284
        %v311 = vmul.f32 %v260, %v284
        %v312 = vmul.f32 %v261, %v284
        %v313 = vmul.f32 %v263, %v284
        %v314 = vmul.f32 %v264, %v284
        %v315 = vmul.f32 %v266, %v284
        %v316 = vmul.f32 %v267, %v284
        %v317 = vadd.f32 %v285, 0.0
        %v318 = vadd.f32 %v286, 0.0
        %v319 = vadd.f32 %v287, 0.0
        %v320 = vadd.f32 %v288, 0.0
        %v321 = vadd.f32 %v289, 0.0
        %v322 = vadd.f32 %v290, 0.0
        %v323 = vadd.f32 %v291, 0.0
        %v324 = vadd.f32 %v292, 0.0
        %v325 = vadd.f32 %v293, 0.0
        %v326 = vadd.f32 %v294, 0.0
        %v327 = vadd.f32 %v295, 0.0
        %v328 = vadd.f32 %v296, 0.0
        %v329 = vadd.f32 %v297, 0.0
        %v330 = vadd.f32 %v298, 0.0
        %v331 = vadd.f32 %v299, 0.0
        %v332 = vadd.f32 %v300, 0.0
        %v333 = vadd.f32 %v301, 0.0
        %v334 = vadd.f32 %v302, 0.0
        %v335 = vadd.f32 %v303, 0.0
        %v336 = vadd.f32 %v304, 0.0
        %v337 = vadd.f32 %v305, 0.0
        %v338 = vadd.f32 %v306, 0.0
        %v339 = vadd.f32 %v307, 0.0
        %v340 = vadd.f32 %v308, 0.0
        %v341 = vadd.f32 %v309, 0.0
        %v342 = vadd.f32 %v310, 0.0
        %v343 = vadd.f32 %v311, 0.0
        %v344 = vadd.f32 %v312, 0.0
        %v345 = vadd.f32 %v313, 0.0
        %v346 = vadd.f32 %v314, 0.0
        %v347 = vadd.f32 %v315, 0.0
        %v348 = vadd.f32 %v316, 0.0
        %v349 = vlaneseq
        %v350 = vshrl.u32 %v349, 7
        %v351 = vsub.s32 1, %v350
        %v352 = vrot.slane %v216, %v351
        %v353 = vmul.f32 %v221, %v352
        %v354 = vmul.f32 %v222, %v352
        %v355 = vmul.f32 %v223, %v352
        %v356 = vmul.f32 %v224, %v352
        %v357 = vmul.f32 %v225, %v352
        %v358 = vmul.f32 %v226, %v352
        %v359 = vmul.f32 %v227, %v352
        %v360 = vmul.f32 %v228, %v352
        %v361 = vmul.f32 %v229, %v352
        %v362 = vmul.f32 %v230, %v352
        %v363 = vmul.f32 %v231, %v352
        %v364 = vmul.f32 %v232, %v352
        %v365 = vmul.f32 %v233, %v352
        %v366 = vmul.f32 %v234, %v352
        %v367 = vmul.f32 %v235, %v352
        %v368 = vmul.f32 %v236, %v352
        %v369 = vmul.f32 %v237, %v352
        %v370 = vmul.f32 %v238, %v352
        %v371 = vmul.f32 %v239, %v352
        %v372 = vmul.f32 %v240, %v352
        %v373 = vmul.f32 %v241, %v352
        %v374 = vmul.f32 %v242, %v352
        %v375 = vmul.f32 %v243, %v352
        %v376 = vmul.f32 %v244, %v352
        %v377 = vmul.f32 %v245, %v352
        %v378 = vmul.f32 %v246, %v352
        %v379 = vmul.f32 %v247, %v352
        %v380 = vmul.f32 %v248, %v352
        %v381 = vmul.f32 %v249, %v352
        %v382 = vmul.f32 %v250, %v352
        %v383 = vmul.f32 %v251, %v352
        %v384 = vmul.f32 %v252, %v352
        %v385 = vmul.f32 %v253, %v352
        %v386 = vmul.f32 %v254, %v352
        %v387 = vmul.f32 %v255, %v352
        %v388 = vmul.f32 %v256, %v352
        %v389 = vmul.f32 %v257, %v352
        %v390 = vmul.f32 %v258, %v352
        %v391 = vmul.f32 %v259, %v352
        %v392 = vmul.f32 %v260, %v352
        %v393 = vmul.f32 %v261, %v352
        %v394 = vmul.f32 %v262, %v352
        %v395 = vmul.f32 %v263, %v352
        %v396 = vmul.f32 %v264, %v352
        %v397 = vmul.f32 %v265, %v352
        %v398 = vmul.f32 %v266, %v352
        %v399 = vmul.f32 %v267, %v352
        %v400 = vmul.f32 %v268, %v352
        %vm449 = vcmask 1046528
        %v450 = vrot.slane %v353, 1
        %v451 = vrot.slane %v354, 1
        %v452 = vsel %vm449, %v450, %v451
        %v453 = vrot.slane %v355, 1
        %v454 = vsel %vm449, %v451, %v453
        %v455 = vrot.slane %v356, 1
        %v456 = vrot.slane %v357, 1
        %v457 = vsel %vm449, %v455, %v456
        %v458 = vrot.slane %v358, 1
        %v459 = vsel %vm449, %v456, %v458
        %v460 = vrot.slane %v359, 1
        %v461 = vrot.slane %v360, 1
        %v462 = vsel %vm449, %v460, %v461
        %v463 = vrot.slane %v361, 1
        %v464 = vsel %vm449, %v461, %v463
        %v465 = vrot.slane %v362, 1
        %v466 = vrot.slane %v363, 1
        %v467 = vsel %vm449, %v465, %v466
        %v468 = vrot.slane %v364, 1
        %v469 = vsel %vm449, %v466, %v468
        %v470 = vrot.slane %v365, 1
        %v471 = vrot.slane %v366, 1
        %v472 = vsel %vm449, %v470, %v471
        %v473 = vrot.slane %v367, 1
        %v474 = vsel %vm449, %v471, %v473
        %v475 = vrot.slane %v368, 1
        %v476 = vrot.slane %v369, 1
        %v477 = vsel %vm449, %v475, %v476
        %v478 = vrot.slane %v370, 1
        %v479 = vsel %vm449, %v476, %v478
        %v480 = vrot.slane %v371, 1
        %v481 = vrot.slane %v372, 1
        %v482 = vsel %vm449, %v480, %v481
        %v483 = vrot.slane %v373, 1
        %v484 = vsel %vm449, %v481, %v483
        %v485 = vrot.slane %v374, 1
        %v486 = vrot.slane %v375, 1
        %v487 = vsel %vm449, %v485, %v486
        %v488 = vrot.slane %v376, 1
        %v489 = vsel %vm449, %v486, %v488
        %v490 = vrot.slane %v377, 1
        %v491 = vrot.slane %v378, 1
        %v492 = vsel %vm449, %v490, %v491
        %v493 = vrot.slane %v379, 1
        %v494 = vsel %vm449, %v491, %v493
        %v495 = vrot.slane %v380, 1
        %v496 = vrot.slane %v381, 1
        %v497 = vsel %vm449, %v495, %v496
        %v498 = vrot.slane %v382, 1
        %v499 = vsel %vm449, %v496, %v498
        %v500 = vrot.slane %v383, 1
        %v501 = vrot.slane %v384, 1
        %v502 = vsel %vm449, %v500, %v501
        %v503 = vrot.slane %v385, 1
        %v504 = vsel %vm449, %v501, %v503
        %v505 = vrot.slane %v386, 1
        %v506 = vrot.slane %v387, 1
        %v507 = vsel %vm449, %v505, %v506
        %v508 = vrot.slane %v388, 1
        %v509 = vsel %vm449, %v506, %v508
        %v510 = vrot.slane %v389, 1
        %v511 = vrot.slane %v390, 1
        %v512 = vsel %vm449, %v510, %v511
        %v513 = vrot.slane %v391, 1
        %v514 = vsel %vm449, %v511, %v513
        %v515 = vrot.slane %v392, 1
        %v516 = vrot.slane %v393, 1
        %v517 = vsel %vm449, %v515, %v516
        %v518 = vrot.slane %v394, 1
        %v519 = vsel %vm449, %v516, %v518
        %v520 = vrot.slane %v395, 1
        %v521 = vrot.slane %v396, 1
        %v522 = vsel %vm449, %v520, %v521
        %v523 = vrot.slane %v397, 1
        %v524 = vsel %vm449, %v521, %v523
        %v525 = vrot.slane %v398, 1
        %v526 = vrot.slane %v399, 1
        %v527 = vsel %vm449, %v525, %v526
        %v528 = vrot.slane %v400, 1
        %v529 = vsel %vm449, %v526, %v528
        %v562 = vadd.f32 %v317, %v452
        %v563 = vadd.f32 %v318, %v454
        %v564 = vadd.f32 %v319, %v457
        %v565 = vadd.f32 %v320, %v459
        %v566 = vadd.f32 %v321, %v462
        %v567 = vadd.f32 %v322, %v464
        %v568 = vadd.f32 %v323, %v467
        %v569 = vadd.f32 %v324, %v469
        %v570 = vadd.f32 %v325, %v472
        %v571 = vadd.f32 %v326, %v474
        %v572 = vadd.f32 %v327, %v477
        %v573 = vadd.f32 %v328, %v479
        %v574 = vadd.f32 %v329, %v482
        %v575 = vadd.f32 %v330, %v484
        %v576 = vadd.f32 %v331, %v487
        %v577 = vadd.f32 %v332, %v489
        %v578 = vadd.f32 %v333, %v492
        %v579 = vadd.f32 %v334, %v494
        %v580 = vadd.f32 %v335, %v497
        %v581 = vadd.f32 %v336, %v499
        %v582 = vadd.f32 %v337, %v502
        %v583 = vadd.f32 %v338, %v504
        %v584 = vadd.f32 %v339, %v507
        %v585 = vadd.f32 %v340, %v509
        %v586 = vadd.f32 %v341, %v512
        %v587 = vadd.f32 %v342, %v514
        %v588 = vadd.f32 %v343, %v517
        %v589 = vadd.f32 %v344, %v519
        %v590 = vadd.f32 %v345, %v522
        %v591 = vadd.f32 %v346, %v524
        %v592 = vadd.f32 %v347, %v527
        %v593 = vadd.f32 %v348, %v529
        %v594 = vlaneseq
        %v595 = vshrl.u32 %v594, 7
        %v596 = vsub.s32 2, %v595
        %v597 = vrot.slane %v216, %v596
        %v598 = vmul.f32 %v221, %v597
        %v599 = vmul.f32 %v222, %v597
        %v600 = vmul.f32 %v223, %v597
        %v601 = vmul.f32 %v224, %v597
        %v602 = vmul.f32 %v225, %v597
        %v603 = vmul.f32 %v226, %v597
        %v604 = vmul.f32 %v227, %v597
        %v605 = vmul.f32 %v228, %v597
        %v606 = vmul.f32 %v229, %v597
        %v607 = vmul.f32 %v230, %v597
        %v608 = vmul.f32 %v231, %v597
        %v609 = vmul.f32 %v232, %v597
        %v610 = vmul.f32 %v233, %v597
        %v611 = vmul.f32 %v234, %v597
        %v612 = vmul.f32 %v235, %v597
        %v613 = vmul.f32 %v236, %v597
        %v614 = vmul.f32 %v237, %v597
        %v615 = vmul.f32 %v238, %v597
        %v616 = vmul.f32 %v239, %v597
        %v617 = vmul.f32 %v240, %v597
        %v618 = vmul.f32 %v241, %v597
        %v619 = vmul.f32 %v242, %v597
        %v620 = vmul.f32 %v243, %v597
        %v621 = vmul.f32 %v244, %v597
        %v622 = vmul.f32 %v245, %v597
        %v623 = vmul.f32 %v246, %v597
        %v624 = vmul.f32 %v247, %v597
        %v625 = vmul.f32 %v248, %v597
        %v626 = vmul.f32 %v249, %v597
        %v627 = vmul.f32 %v250, %v597
        %v628 = vmul.f32 %v251, %v597
        %v629 = vmul.f32 %v252, %v597
        %v630 = vmul.f32 %v253, %v597
        %v631 = vmul.f32 %v254, %v597
        %v632 = vmul.f32 %v255, %v597
        %v633 = vmul.f32 %v256, %v597
        %v634 = vmul.f32 %v257, %v597
        %v635 = vmul.f32 %v258, %v597
        %v636 = vmul.f32 %v259, %v597
        %v637 = vmul.f32 %v260, %v597
        %v638 = vmul.f32 %v261, %v597
        %v639 = vmul.f32 %v262, %v597
        %v640 = vmul.f32 %v263, %v597
        %v641 = vmul.f32 %v264, %v597
        %v642 = vmul.f32 %v265, %v597
        %v643 = vmul.f32 %v266, %v597
        %v644 = vmul.f32 %v267, %v597
        %v645 = vmul.f32 %v268, %v597
        %vm694 = vcmask 1045504
        %v695 = vrot.slane %v598, 2
        %v696 = vrot.slane %v599, 2
        %v697 = vsel %vm694, %v695, %v696
        %v698 = vrot.slane %v600, 2
        %v699 = vsel %vm694, %v696, %v698
        %v700 = vrot.slane %v601, 2
        %v701 = vrot.slane %v602, 2
        %v702 = vsel %vm694, %v700, %v701
        %v703 = vrot.slane %v603, 2
        %v704 = vsel %vm694, %v701, %v703
        %v705 = vrot.slane %v604, 2
        %v706 = vrot.slane %v605, 2
        %v707 = vsel %vm694, %v705, %v706
        %v708 = vrot.slane %v606, 2
        %v709 = vsel %vm694, %v706, %v708
        %v710 = vrot.slane %v607, 2
        %v711 = vrot.slane %v608, 2
        %v712 = vsel %vm694, %v710, %v711
        %v713 = vrot.slane %v609, 2
        %v714 = vsel %vm694, %v711, %v713
        %v715 = vrot.slane %v610, 2
        %v716 = vrot.slane %v611, 2
        %v717 = vsel %vm694, %v715, %v716
        %v718 = vrot.slane %v612, 2
        %v719 = vsel %vm694, %v716, %v718
        %v720 = vrot.slane %v613, 2
        %v721 = vrot.slane %v614, 2
        %v722 = vsel %vm694, %v720, %v721
        %v723 = vrot.slane %v615, 2
        %v724 = vsel %vm694, %v721, %v723
        %v725 = vrot.slane %v616, 2
        %v726 = vrot.slane %v617, 2
        %v727 = vsel %vm694, %v725, %v726
        %v728 = vrot.slane %v618, 2
        %v729 = vsel %vm694, %v726, %v728
        %v730 = vrot.slane %v619, 2
        %v731 = vrot.slane %v620, 2
        %v732 = vsel %vm694, %v730, %v731
        %v733 = vrot.slane %v621, 2
        %v734 = vsel %vm694, %v731, %v733
        %v735 = vrot.slane %v622, 2
        %v736 = vrot.slane %v623, 2
        %v737 = vsel %vm694, %v735, %v736
        %v738 = vrot.slane %v624, 2
        %v739 = vsel %vm694, %v736, %v738
        %v740 = vrot.slane %v625, 2
        %v741 = vrot.slane %v626, 2
        %v742 = vsel %vm694, %v740, %v741
        %v743 = vrot.slane %v627, 2
        %v744 = vsel %vm694, %v741, %v743
        %v745 = vrot.slane %v628, 2
        %v746 = vrot.slane %v629, 2
        %v747 = vsel %vm694, %v745, %v746
        %v748 = vrot.slane %v630, 2
        %v749 = vsel %vm694, %v746, %v748
        %v750 = vrot.slane %v631, 2
        %v751 = vrot.slane %v632, 2
        %v752 = vsel %vm694, %v750, %v751
        %v753 = vrot.slane %v633, 2
        %v754 = vsel %vm694, %v751, %v753
        %v755 = vrot.slane %v634, 2
        %v756 = vrot.slane %v635, 2
        %v757 = vsel %vm694, %v755, %v756
        %v758 = vrot.slane %v636, 2
        %v759 = vsel %vm694, %v756, %v758
        %v760 = vrot.slane %v637, 2
        %v761 = vrot.slane %v638, 2
        %v762 = vsel %vm694, %v760, %v761
        %v763 = vrot.slane %v639, 2
        %v764 = vsel %vm694, %v761, %v763
        %v765 = vrot.slane %v640, 2
        %v766 = vrot.slane %v641, 2
        %v767 = vsel %vm694, %v765, %v766
        %v768 = vrot.slane %v642, 2
        %v769 = vsel %vm694, %v766, %v768
        %v770 = vrot.slane %v643, 2
        %v771 = vrot.slane %v644, 2
        %v772 = vsel %vm694, %v770, %v771
        %v773 = vrot.slane %v645, 2
        %v774 = vsel %vm694, %v771, %v773
        %v807 = vadd.f32 %v562, %v697
        %v808 = vadd.f32 %v563, %v699
        %v809 = vadd.f32 %v564, %v702
        %v810 = vadd.f32 %v565, %v704
        %v811 = vadd.f32 %v566, %v707
        %v812 = vadd.f32 %v567, %v709
        %v813 = vadd.f32 %v568, %v712
        %v814 = vadd.f32 %v569, %v714
        %v815 = vadd.f32 %v570, %v717
        %v816 = vadd.f32 %v571, %v719
        %v817 = vadd.f32 %v572, %v722
        %v818 = vadd.f32 %v573, %v724
        %v819 = vadd.f32 %v574, %v727
        %v820 = vadd.f32 %v575, %v729
        %v821 = vadd.f32 %v576, %v732
        %v822 = vadd.f32 %v577, %v734
        %v823 = vadd.f32 %v578, %v737
        %v824 = vadd.f32 %v579, %v739
        %v825 = vadd.f32 %v580, %v742
        %v826 = vadd.f32 %v581, %v744
        %v827 = vadd.f32 %v582, %v747
        %v828 = vadd.f32 %v583, %v749
        %v829 = vadd.f32 %v584, %v752
        %v830 = vadd.f32 %v585, %v754
        %v831 = vadd.f32 %v586, %v757
        %v832 = vadd.f32 %v587, %v759
        %v833 = vadd.f32 %v588, %v762
        %v834 = vadd.f32 %v589, %v764
        %v835 = vadd.f32 %v590, %v767
        %v836 = vadd.f32 %v591, %v769
        %v837 = vadd.f32 %v592, %v772
        %v838 = vadd.f32 %v593, %v774
        %v839 = vlaneseq
        %v840 = vshrl.u32 %v839, 7
        %v841 = vsub.s32 3, %v840
        %v842 = vrot.slane %v216, %v841
        %v843 = vmul.f32 %v221, %v842
        %v844 = vmul.f32 %v222, %v842
        %v845 = vmul.f32 %v223, %v842
        %v846 = vmul.f32 %v224, %v842
        %v847 = vmul.f32 %v225, %v842
        %v848 = vmul.f32 %v226, %v842
        %v849 = vmul.f32 %v227, %v842
        %v850 = vmul.f32 %v228, %v842
        %v851 = vmul.f32 %v229, %v842
        %v852 = vmul.f32 %v230, %v842
        %v853 = vmul.f32 %v231, %v842
        %v854 = vmul.f32 %v232, %v842
        %v855 = vmul.f32 %v233, %v842
        %v856 = vmul.f32 %v234, %v842
        %v857 = vmul.f32 %v235, %v842
        %v858 = vmul.f32 %v236, %v842
        %v859 = vmul.f32 %v237, %v842
        %v860 = vmul.f32 %v238, %v842
        %v861 = vmul.f32 %v239, %v842
        %v862 = vmul.f32 %v240, %v842
        %v863 = vmul.f32 %v241, %v842
        %v864 = vmul.f32 %v242, %v842
        %v865 = vmul.f32 %v243, %v842
        %v866 = vmul.f32 %v244, %v842
        %v867 = vmul.f32 %v245, %v842
        %v868 = vmul.f32 %v246, %v842
        %v869 = vmul.f32 %v247, %v842
        %v870 = vmul.f32 %v248, %v842
        %v871 = vmul.f32 %v249, %v842
        %v872 = vmul.f32 %v250, %v842
        %v873 = vmul.f32 %v251, %v842
        %v874 = vmul.f32 %v252, %v842
        %v875 = vmul.f32 %v253, %v842
        %v876 = vmul.f32 %v254, %v842
        %v877 = vmul.f32 %v255, %v842
        %v878 = vmul.f32 %v256, %v842
        %v879 = vmul.f32 %v257, %v842
        %v880 = vmul.f32 %v258, %v842
        %v881 = vmul.f32 %v259, %v842
        %v882 = vmul.f32 %v260, %v842
        %v883 = vmul.f32 %v261, %v842
        %v884 = vmul.f32 %v262, %v842
        %v885 = vmul.f32 %v263, %v842
        %v886 = vmul.f32 %v264, %v842
        %v887 = vmul.f32 %v265, %v842
        %v888 = vmul.f32 %v266, %v842
        %v889 = vmul.f32 %v267, %v842
        %v890 = vmul.f32 %v268, %v842
        %vm939 = vcmask 1044480
        %v940 = vrot.slane %v843, 3
        %v941 = vrot.slane %v844, 3
        %v942 = vsel %vm939, %v940, %v941
        %v943 = vrot.slane %v845, 3
        %v944 = vsel %vm939, %v941, %v943
        %v945 = vrot.slane %v846, 3
        %v946 = vrot.slane %v847, 3
        %v947 = vsel %vm939, %v945, %v946
        %v948 = vrot.slane %v848, 3
        %v949 = vsel %vm939, %v946, %v948
        %v950 = vrot.slane %v849, 3
        %v951 = vrot.slane %v850, 3
        %v952 = vsel %vm939, %v950, %v951
        %v953 = vrot.slane %v851, 3
        %v954 = vsel %vm939, %v951, %v953
        %v955 = vrot.slane %v852, 3
        %v956 = vrot.slane %v853, 3
        %v957 = vsel %vm939, %v955, %v956
        %v958 = vrot.slane %v854, 3
        %v959 = vsel %vm939, %v956, %v958
        %v960 = vrot.slane %v855, 3
        %v961 = vrot.slane %v856, 3
        %v962 = vsel %vm939, %v960, %v961
        %v963 = vrot.slane %v857, 3
        %v964 = vsel %vm939, %v961, %v963
        %v965 = vrot.slane %v858, 3
        %v966 = vrot.slane %v859, 3
        %v967 = vsel %vm939, %v965, %v966
        %v968 = vrot.slane %v860, 3
        %v969 = vsel %vm939, %v966, %v968
        %v970 = vrot.slane %v861, 3
        %v971 = vrot.slane %v862, 3
        %v972 = vsel %vm939, %v970, %v971
        %v973 = vrot.slane %v863, 3
        %v974 = vsel %vm939, %v971, %v973
        %v975 = vrot.slane %v864, 3
        %v976 = vrot.slane %v865, 3
        %v977 = vsel %vm939, %v975, %v976
        %v978 = vrot.slane %v866, 3
        %v979 = vsel %vm939, %v976, %v978
        %v980 = vrot.slane %v867, 3
        %v981 = vrot.slane %v868, 3
        %v982 = vsel %vm939, %v980, %v981
        %v983 = vrot.slane %v869, 3
        %v984 = vsel %vm939, %v981, %v983
        %v985 = vrot.slane %v870, 3
        %v986 = vrot.slane %v871, 3
        %v987 = vsel %vm939, %v985, %v986
        %v988 = vrot.slane %v872, 3
        %v989 = vsel %vm939, %v986, %v988
        %v990 = vrot.slane %v873, 3
        %v991 = vrot.slane %v874, 3
        %v992 = vsel %vm939, %v990, %v991
        %v993 = vrot.slane %v875, 3
        %v994 = vsel %vm939, %v991, %v993
        %v995 = vrot.slane %v876, 3
        %v996 = vrot.slane %v877, 3
        %v997 = vsel %vm939, %v995, %v996
        %v998 = vrot.slane %v878, 3
        %v999 = vsel %vm939, %v996, %v998
        %v1000 = vrot.slane %v879, 3
        %v1001 = vrot.slane %v880, 3
        %v1002 = vsel %vm939, %v1000, %v1001
        %v1003 = vrot.slane %v881, 3
        %v1004 = vsel %vm939, %v1001, %v1003
        %v1005 = vrot.slane %v882, 3
        %v1006 = vrot.slane %v883, 3
        %v1007 = vsel %vm939, %v1005, %v1006
        %v1008 = vrot.slane %v884, 3
        %v1009 = vsel %vm939, %v1006, %v1008
        %v1010 = vrot.slane %v885, 3
        %v1011 = vrot.slane %v886, 3
        %v1012 = vsel %vm939, %v1010, %v1011
        %v1013 = vrot.slane %v887, 3
        %v1014 = vsel %vm939, %v1011, %v1013
        %v1015 = vrot.slane %v888, 3
        %v1016 = vrot.slane %v889, 3
        %v1017 = vsel %vm939, %v1015, %v1016
        %v1018 = vrot.slane %v890, 3
        %v1019 = vsel %vm939, %v1016, %v1018
        %v1052 = vadd.f32 %v807, %v942
        %v1053 = vadd.f32 %v808, %v944
        %v1054 = vadd.f32 %v809, %v947
        %v1055 = vadd.f32 %v810, %v949
        %v1056 = vadd.f32 %v811, %v952
        %v1057 = vadd.f32 %v812, %v954
        %v1058 = vadd.f32 %v813, %v957
        %v1059 = vadd.f32 %v814, %v959
        %v1060 = vadd.f32 %v815, %v962
        %v1061 = vadd.f32 %v816, %v964
        %v1062 = vadd.f32 %v817, %v967
        %v1063 = vadd.f32 %v818, %v969
        %v1064 = vadd.f32 %v819, %v972
        %v1065 = vadd.f32 %v820, %v974
        %v1066 = vadd.f32 %v821, %v977
        %v1067 = vadd.f32 %v822, %v979
        %v1068 = vadd.f32 %v823, %v982
        %v1069 = vadd.f32 %v824, %v984
        %v1070 = vadd.f32 %v825, %v987
        %v1071 = vadd.f32 %v826, %v989
        %v1072 = vadd.f32 %v827, %v992
        %v1073 = vadd.f32 %v828, %v994
        %v1074 = vadd.f32 %v829, %v997
        %v1075 = vadd.f32 %v830, %v999
        %v1076 = vadd.f32 %v831, %v1002
        %v1077 = vadd.f32 %v832, %v1004
        %v1078 = vadd.f32 %v833, %v1007
        %v1079 = vadd.f32 %v834, %v1009
        %v1080 = vadd.f32 %v835, %v1012
        %v1081 = vadd.f32 %v836, %v1014
        %v1082 = vadd.f32 %v837, %v1017
        %v1083 = vadd.f32 %v838, %v1019
        %v1084 = vlaneseq
        %v1085 = vshrl.u32 %v1084, 7
        %v1086 = vsub.s32 4, %v1085
        %v1087 = vrot.slane %v216, %v1086
        %v1088 = vmul.f32 %v221, %v1087
        %v1089 = vmul.f32 %v222, %v1087
        %v1090 = vmul.f32 %v223, %v1087
        %v1091 = vmul.f32 %v224, %v1087
        %v1092 = vmul.f32 %v225, %v1087
        %v1093 = vmul.f32 %v226, %v1087
        %v1094 = vmul.f32 %v227, %v1087
        %v1095 = vmul.f32 %v228, %v1087
        %v1096 = vmul.f32 %v229, %v1087
        %v1097 = vmul.f32 %v230, %v1087
        %v1098 = vmul.f32 %v231, %v1087
        %v1099 = vmul.f32 %v232, %v1087
        %v1100 = vmul.f32 %v233, %v1087
        %v1101 = vmul.f32 %v234, %v1087
        %v1102 = vmul.f32 %v235, %v1087
        %v1103 = vmul.f32 %v236, %v1087
        %v1104 = vmul.f32 %v237, %v1087
        %v1105 = vmul.f32 %v238, %v1087
        %v1106 = vmul.f32 %v239, %v1087
        %v1107 = vmul.f32 %v240, %v1087
        %v1108 = vmul.f32 %v241, %v1087
        %v1109 = vmul.f32 %v242, %v1087
        %v1110 = vmul.f32 %v243, %v1087
        %v1111 = vmul.f32 %v244, %v1087
        %v1112 = vmul.f32 %v245, %v1087
        %v1113 = vmul.f32 %v246, %v1087
        %v1114 = vmul.f32 %v247, %v1087
        %v1115 = vmul.f32 %v248, %v1087
        %v1116 = vmul.f32 %v249, %v1087
        %v1117 = vmul.f32 %v250, %v1087
        %v1118 = vmul.f32 %v251, %v1087
        %v1119 = vmul.f32 %v252, %v1087
        %v1120 = vmul.f32 %v253, %v1087
        %v1121 = vmul.f32 %v254, %v1087
        %v1122 = vmul.f32 %v255, %v1087
        %v1123 = vmul.f32 %v256, %v1087
        %v1124 = vmul.f32 %v257, %v1087
        %v1125 = vmul.f32 %v258, %v1087
        %v1126 = vmul.f32 %v259, %v1087
        %v1127 = vmul.f32 %v260, %v1087
        %v1128 = vmul.f32 %v261, %v1087
        %v1129 = vmul.f32 %v262, %v1087
        %v1130 = vmul.f32 %v263, %v1087
        %v1131 = vmul.f32 %v264, %v1087
        %v1132 = vmul.f32 %v265, %v1087
        %v1133 = vmul.f32 %v266, %v1087
        %v1134 = vmul.f32 %v267, %v1087
        %v1135 = vmul.f32 %v268, %v1087
        %vm1184 = vcmask 1043456
        %v1185 = vrot.slane %v1088, 4
        %v1186 = vrot.slane %v1089, 4
        %v1187 = vsel %vm1184, %v1185, %v1186
        %v1188 = vrot.slane %v1090, 4
        %v1189 = vsel %vm1184, %v1186, %v1188
        %v1190 = vrot.slane %v1091, 4
        %v1191 = vrot.slane %v1092, 4
        %v1192 = vsel %vm1184, %v1190, %v1191
        %v1193 = vrot.slane %v1093, 4
        %v1194 = vsel %vm1184, %v1191, %v1193
        %v1195 = vrot.slane %v1094, 4
        %v1196 = vrot.slane %v1095, 4
        %v1197 = vsel %vm1184, %v1195, %v1196
        %v1198 = vrot.slane %v1096, 4
        %v1199 = vsel %vm1184, %v1196, %v1198
        %v1200 = vrot.slane %v1097, 4
        %v1201 = vrot.slane %v1098, 4
        %v1202 = vsel %vm1184, %v1200, %v1201
        %v1203 = vrot.slane %v1099, 4
        %v1204 = vsel %vm1184, %v1201, %v1203
        %v1205 = vrot.slane %v1100, 4
        %v1206 = vrot.slane %v1101, 4
        %v1207 = vsel %vm1184, %v1205, %v1206
        %v1208 = vrot.slane %v1102, 4
        %v1209 = vsel %vm1184, %v1206, %v1208
        %v1210 = vrot.slane %v1103, 4
        %v1211 = vrot.slane %v1104, 4
        %v1212 = vsel %vm1184, %v1210, %v1211
        %v1213 = vrot.slane %v1105, 4
        %v1214 = vsel %vm1184, %v1211, %v1213
        %v1215 = vrot.slane %v1106, 4
        %v1216 = vrot.slane %v1107, 4
        %v1217 = vsel %vm1184, %v1215, %v1216
        %v1218 = vrot.slane %v1108, 4
        %v1219 = vsel %vm1184, %v1216, %v1218
        %v1220 = vrot.slane %v1109, 4
        %v1221 = vrot.slane %v1110, 4
        %v1222 = vsel %vm1184, %v1220, %v1221
        %v1223 = vrot.slane %v1111, 4
        %v1224 = vsel %vm1184, %v1221, %v1223
        %v1225 = vrot.slane %v1112, 4
        %v1226 = vrot.slane %v1113, 4
        %v1227 = vsel %vm1184, %v1225, %v1226
        %v1228 = vrot.slane %v1114, 4
        %v1229 = vsel %vm1184, %v1226, %v1228
        %v1230 = vrot.slane %v1115, 4
        %v1231 = vrot.slane %v1116, 4
        %v1232 = vsel %vm1184, %v1230, %v1231
        %v1233 = vrot.slane %v1117, 4
        %v1234 = vsel %vm1184, %v1231, %v1233
        %v1235 = vrot.slane %v1118, 4
        %v1236 = vrot.slane %v1119, 4
        %v1237 = vsel %vm1184, %v1235, %v1236
        %v1238 = vrot.slane %v1120, 4
        %v1239 = vsel %vm1184, %v1236, %v1238
        %v1240 = vrot.slane %v1121, 4
        %v1241 = vrot.slane %v1122, 4
        %v1242 = vsel %vm1184, %v1240, %v1241
        %v1243 = vrot.slane %v1123, 4
        %v1244 = vsel %vm1184, %v1241, %v1243
        %v1245 = vrot.slane %v1124, 4
        %v1246 = vrot.slane %v1125, 4
        %v1247 = vsel %vm1184, %v1245, %v1246
        %v1248 = vrot.slane %v1126, 4
        %v1249 = vsel %vm1184, %v1246, %v1248
        %v1250 = vrot.slane %v1127, 4
        %v1251 = vrot.slane %v1128, 4
        %v1252 = vsel %vm1184, %v1250, %v1251
        %v1253 = vrot.slane %v1129, 4
        %v1254 = vsel %vm1184, %v1251, %v1253
        %v1255 = vrot.slane %v1130, 4
        %v1256 = vrot.slane %v1131, 4
        %v1257 = vsel %vm1184, %v1255, %v1256
        %v1258 = vrot.slane %v1132, 4
        %v1259 = vsel %vm1184, %v1256, %v1258
        %v1260 = vrot.slane %v1133, 4
        %v1261 = vrot.slane %v1134, 4
        %v1262 = vsel %vm1184, %v1260, %v1261
        %v1263 = vrot.slane %v1135, 4
        %v1264 = vsel %vm1184, %v1261, %v1263
        %v1297 = vadd.f32 %v1052, %v1187
        %v1298 = vadd.f32 %v1053, %v1189
        %v1299 = vadd.f32 %v1054, %v1192
        %v1300 = vadd.f32 %v1055, %v1194
        %v1301 = vadd.f32 %v1056, %v1197
        %v1302 = vadd.f32 %v1057, %v1199
        %v1303 = vadd.f32 %v1058, %v1202
        %v1304 = vadd.f32 %v1059, %v1204
        %v1305 = vadd.f32 %v1060, %v1207
        %v1306 = vadd.f32 %v1061, %v1209
        %v1307 = vadd.f32 %v1062, %v1212
        %v1308 = vadd.f32 %v1063, %v1214
        %v1309 = vadd.f32 %v1064, %v1217
        %v1310 = vadd.f32 %v1065, %v1219
        %v1311 = vadd.f32 %v1066, %v1222
        %v1312 = vadd.f32 %v1067, %v1224
        %v1313 = vadd.f32 %v1068, %v1227
        %v1314 = vadd.f32 %v1069, %v1229
        %v1315 = vadd.f32 %v1070, %v1232
        %v1316 = vadd.f32 %v1071, %v1234
        %v1317 = vadd.f32 %v1072, %v1237
        %v1318 = vadd.f32 %v1073, %v1239
        %v1319 = vadd.f32 %v1074, %v1242
        %v1320 = vadd.f32 %v1075, %v1244
        %v1321 = vadd.f32 %v1076, %v1247
        %v1322 = vadd.f32 %v1077, %v1249
        %v1323 = vadd.f32 %v1078, %v1252
        %v1324 = vadd.f32 %v1079, %v1254
        %v1325 = vadd.f32 %v1080, %v1257
        %v1326 = vadd.f32 %v1081, %v1259
        %v1327 = vadd.f32 %v1082, %v1262
        %v1328 = vadd.f32 %v1083, %v1264
        %v1329 = vlaneseq
        %v1330 = vshrl.u32 %v1329, 7
        %v1331 = vsub.s32 0, %v1330
        %v1332 = vrot.slane %v217, %v1331
        %v1333 = vmul.f32 %v224, %v1332
        %v1334 = vmul.f32 %v225, %v1332
        %v1335 = vmul.f32 %v227, %v1332
        %v1336 = vmul.f32 %v228, %v1332
        %v1337 = vmul.f32 %v230, %v1332
        %v1338 = vmul.f32 %v231, %v1332
        %v1339 = vmul.f32 %v233, %v1332
        %v1340 = vmul.f32 %v234, %v1332
        %v1341 = vmul.f32 %v236, %v1332
        %v1342 = vmul.f32 %v237, %v1332
        %v1343 = vmul.f32 %v239, %v1332
        %v1344 = vmul.f32 %v240, %v1332
        %v1345 = vmul.f32 %v242, %v1332
        %v1346 = vmul.f32 %v243, %v1332
        %v1347 = vmul.f32 %v245, %v1332
        %v1348 = vmul.f32 %v246, %v1332
        %v1349 = vmul.f32 %v248, %v1332
        %v1350 = vmul.f32 %v249, %v1332
        %v1351 = vmul.f32 %v251, %v1332
        %v1352 = vmul.f32 %v252, %v1332
        %v1353 = vmul.f32 %v254, %v1332
        %v1354 = vmul.f32 %v255, %v1332
        %v1355 = vmul.f32 %v257, %v1332
        %v1356 = vmul.f32 %v258, %v1332
        %v1357 = vmul.f32 %v260, %v1332
        %v1358 = vmul.f32 %v261, %v1332
        %v1359 = vmul.f32 %v263, %v1332
        %v1360 = vmul.f32 %v264, %v1332
        %v1361 = vmul.f32 %v266, %v1332
        %v1362 = vmul.f32 %v267, %v1332
        %v1363 = vmul.f32 %v269, %v1332
        %v1364 = vmul.f32 %v270, %v1332
        %v1365 = vadd.f32 %v1297, %v1333
        %v1366 = vadd.f32 %v1298, %v1334
        %v1367 = vadd.f32 %v1299, %v1335
        %v1368 = vadd.f32 %v1300, %v1336
        %v1369 = vadd.f32 %v1301, %v1337
        %v1370 = vadd.f32 %v1302, %v1338
        %v1371 = vadd.f32 %v1303, %v1339
        %v1372 = vadd.f32 %v1304, %v1340
        %v1373 = vadd.f32 %v1305, %v1341
        %v1374 = vadd.f32 %v1306, %v1342
        %v1375 = vadd.f32 %v1307, %v1343
        %v1376 = vadd.f32 %v1308, %v1344
        %v1377 = vadd.f32 %v1309, %v1345
        %v1378 = vadd.f32 %v1310, %v1346
        %v1379 = vadd.f32 %v1311, %v1347
        %v1380 = vadd.f32 %v1312, %v1348
        %v1381 = vadd.f32 %v1313, %v1349
        %v1382 = vadd.f32 %v1314, %v1350
        %v1383 = vadd.f32 %v1315, %v1351
        %v1384 = vadd.f32 %v1316, %v1352
        %v1385 = vadd.f32 %v1317, %v1353
        %v1386 = vadd.f32 %v1318, %v1354
        %v1387 = vadd.f32 %v1319, %v1355
        %v1388 = vadd.f32 %v1320, %v1356
        %v1389 = vadd.f32 %v1321, %v1357
        %v1390 = vadd.f32 %v1322, %v1358
        %v1391 = vadd.f32 %v1323, %v1359
        %v1392 = vadd.f32 %v1324, %v1360
        %v1393 = vadd.f32 %v1325, %v1361
        %v1394 = vadd.f32 %v1326, %v1362
        %v1395 = vadd.f32 %v1327, %v1363
        %v1396 = vadd.f32 %v1328, %v1364
        %v1397 = vlaneseq
        %v1398 = vshrl.u32 %v1397, 7
        %v1399 = vsub.s32 1, %v1398
        %v1400 = vrot.slane %v217, %v1399
        %v1401 = vmul.f32 %v224, %v1400
        %v1402 = vmul.f32 %v225, %v1400
        %v1403 = vmul.f32 %v226, %v1400
        %v1404 = vmul.f32 %v227, %v1400
        %v1405 = vmul.f32 %v228, %v1400
        %v1406 = vmul.f32 %v229, %v1400
        %v1407 = vmul.f32 %v230, %v1400
        %v1408 = vmul.f32 %v231, %v1400
        %v1409 = vmul.f32 %v232, %v1400
        %v1410 = vmul.f32 %v233, %v1400
        %v1411 = vmul.f32 %v234, %v1400
        %v1412 = vmul.f32 %v235, %v1400
        %v1413 = vmul.f32 %v236, %v1400
        %v1414 = vmul.f32 %v237, %v1400
        %v1415 = vmul.f32 %v238, %v1400
        %v1416 = vmul.f32 %v239, %v1400
        %v1417 = vmul.f32 %v240, %v1400
        %v1418 = vmul.f32 %v241, %v1400
        %v1419 = vmul.f32 %v242, %v1400
        %v1420 = vmul.f32 %v243, %v1400
        %v1421 = vmul.f32 %v244, %v1400
        %v1422 = vmul.f32 %v245, %v1400
        %v1423 = vmul.f32 %v246, %v1400
        %v1424 = vmul.f32 %v247, %v1400
        %v1425 = vmul.f32 %v248, %v1400
        %v1426 = vmul.f32 %v249, %v1400
        %v1427 = vmul.f32 %v250, %v1400
        %v1428 = vmul.f32 %v251, %v1400
        %v1429 = vmul.f32 %v252, %v1400
        %v1430 = vmul.f32 %v253, %v1400
        %v1431 = vmul.f32 %v254, %v1400
        %v1432 = vmul.f32 %v255, %v1400
        %v1433 = vmul.f32 %v256, %v1400
        %v1434 = vmul.f32 %v257, %v1400
        %v1435 = vmul.f32 %v258, %v1400
        %v1436 = vmul.f32 %v259, %v1400
        %v1437 = vmul.f32 %v260, %v1400
        %v1438 = vmul.f32 %v261, %v1400
        %v1439 = vmul.f32 %v262, %v1400
        %v1440 = vmul.f32 %v263, %v1400
        %v1441 = vmul.f32 %v264, %v1400
        %v1442 = vmul.f32 %v265, %v1400
        %v1443 = vmul.f32 %v266, %v1400
        %v1444 = vmul.f32 %v267, %v1400
        %v1445 = vmul.f32 %v268, %v1400
        %v1446 = vmul.f32 %v269, %v1400
        %v1447 = vmul.f32 %v270, %v1400
        %v1448 = vmul.f32 %v271, %v1400
        %v1497 = vrot.slane %v1401, 1
        %v1498 = vrot.slane %v1402, 1
        %v1499 = vsel %vm449, %v1497, %v1498
        %v1500 = vrot.slane %v1403, 1
        %v1501 = vsel %vm449, %v1498, %v1500
        %v1502 = vrot.slane %v1404, 1
        %v1503 = vrot.slane %v1405, 1
        %v1504 = vsel %vm449, %v1502, %v1503
        %v1505 = vrot.slane %v1406, 1
        %v1506 = vsel %vm449, %v1503, %v1505
        %v1507 = vrot.slane %v1407, 1
        %v1508 = vrot.slane %v1408, 1
        %v1509 = vsel %vm449, %v1507, %v1508
        %v1510 = vrot.slane %v1409, 1
        %v1511 = vsel %vm449, %v1508, %v1510
        %v1512 = vrot.slane %v1410, 1
        %v1513 = vrot.slane %v1411, 1
        %v1514 = vsel %vm449, %v1512, %v1513
        %v1515 = vrot.slane %v1412, 1
        %v1516 = vsel %vm449, %v1513, %v1515
        %v1517 = vrot.slane %v1413, 1
        %v1518 = vrot.slane %v1414, 1
        %v1519 = vsel %vm449, %v1517, %v1518
        %v1520 = vrot.slane %v1415, 1
        %v1521 = vsel %vm449, %v1518, %v1520
        %v1522 = vrot.slane %v1416, 1
        %v1523 = vrot.slane %v1417, 1
        %v1524 = vsel %vm449, %v1522, %v1523
        %v1525 = vrot.slane %v1418, 1
        %v1526 = vsel %vm449, %v1523, %v1525
        %v1527 = vrot.slane %v1419, 1
        %v1528 = vrot.slane %v1420, 1
        %v1529 = vsel %vm449, %v1527, %v1528
        %v1530 = vrot.slane %v1421, 1
        %v1531 = vsel %vm449, %v1528, %v1530
        %v1532 = vrot.slane %v1422, 1
        %v1533 = vrot.slane %v1423, 1
        %v1534 = vsel %vm449, %v1532, %v1533
        %v1535 = vrot.slane %v1424, 1
        %v1536 = vsel %vm449, %v1533, %v1535
        %v1537 = vrot.slane %v1425, 1
        %v1538 = vrot.slane %v1426, 1
        %v1539 = vsel %vm449, %v1537, %v1538
        %v1540 = vrot.slane %v1427, 1
        %v1541 = vsel %vm449, %v1538, %v1540
        %v1542 = vrot.slane %v1428, 1
        %v1543 = vrot.slane %v1429, 1
        %v1544 = vsel %vm449, %v1542, %v1543
        %v1545 = vrot.slane %v1430, 1
        %v1546 = vsel %vm449, %v1543, %v1545
        %v1547 = vrot.slane %v1431, 1
        %v1548 = vrot.slane %v1432, 1
        %v1549 = vsel %vm449, %v1547, %v1548
        %v1550 = vrot.slane %v1433, 1
        %v1551 = vsel %vm449, %v1548, %v1550
        %v1552 = vrot.slane %v1434, 1
        %v1553 = vrot.slane %v1435, 1
        %v1554 = vsel %vm449, %v1552, %v1553
        %v1555 = vrot.slane %v1436, 1
        %v1556 = vsel %vm449, %v1553, %v1555
        %v1557 = vrot.slane %v1437, 1
        %v1558 = vrot.slane %v1438, 1
        %v1559 = vsel %vm449, %v1557, %v1558
        %v1560 = vrot.slane %v1439, 1
        %v1561 = vsel %vm449, %v1558, %v1560
        %v1562 = vrot.slane %v1440, 1
        %v1563 = vrot.slane %v1441, 1
        %v1564 = vsel %vm449, %v1562, %v1563
        %v1565 = vrot.slane %v1442, 1
        %v1566 = vsel %vm449, %v1563, %v1565
        %v1567 = vrot.slane %v1443, 1
        %v1568 = vrot.slane %v1444, 1
        %v1569 = vsel %vm449, %v1567, %v1568
        %v1570 = vrot.slane %v1445, 1
        %v1571 = vsel %vm449, %v1568, %v1570
        %v1572 = vrot.slane %v1446, 1
        %v1573 = vrot.slane %v1447, 1
        %v1574 = vsel %vm449, %v1572, %v1573
        %v1575 = vrot.slane %v1448, 1
        %v1576 = vsel %vm449, %v1573, %v1575
        %v1609 = vadd.f32 %v1365, %v1499
        %v1610 = vadd.f32 %v1366, %v1501
        %v1611 = vadd.f32 %v1367, %v1504
        %v1612 = vadd.f32 %v1368, %v1506
        %v1613 = vadd.f32 %v1369, %v1509
        %v1614 = vadd.f32 %v1370, %v1511
        %v1615 = vadd.f32 %v1371, %v1514
        %v1616 = vadd.f32 %v1372, %v1516
        %v1617 = vadd.f32 %v1373, %v1519
        %v1618 = vadd.f32 %v1374, %v1521
        %v1619 = vadd.f32 %v1375, %v1524
        %v1620 = vadd.f32 %v1376, %v1526
        %v1621 = vadd.f32 %v1377, %v1529
        %v1622 = vadd.f32 %v1378, %v1531
        %v1623 = vadd.f32 %v1379, %v1534
        %v1624 = vadd.f32 %v1380, %v1536
        %v1625 = vadd.f32 %v1381, %v1539
        %v1626 = vadd.f32 %v1382, %v1541
        %v1627 = vadd.f32 %v1383, %v1544
        %v1628 = vadd.f32 %v1384, %v1546
        %v1629 = vadd.f32 %v1385, %v1549
        %v1630 = vadd.f32 %v1386, %v1551
        %v1631 = vadd.f32 %v1387, %v1554
        %v1632 = vadd.f32 %v1388, %v1556
        %v1633 = vadd.f32 %v1389, %v1559
        %v1634 = vadd.f32 %v1390, %v1561
        %v1635 = vadd.f32 %v1391, %v1564
        %v1636 = vadd.f32 %v1392, %v1566
        %v1637 = vadd.f32 %v1393, %v1569
        %v1638 = vadd.f32 %v1394, %v1571
        %v1639 = vadd.f32 %v1395, %v1574
        %v1640 = vadd.f32 %v1396, %v1576
        %v1641 = vlaneseq
        %v1642 = vshrl.u32 %v1641, 7
        %v1643 = vsub.s32 2, %v1642
        %v1644 = vrot.slane %v217, %v1643
        %v1645 = vmul.f32 %v224, %v1644
        %v1646 = vmul.f32 %v225, %v1644
        %v1647 = vmul.f32 %v226, %v1644
        %v1648 = vmul.f32 %v227, %v1644
        %v1649 = vmul.f32 %v228, %v1644
        %v1650 = vmul.f32 %v229, %v1644
        %v1651 = vmul.f32 %v230, %v1644
        %v1652 = vmul.f32 %v231, %v1644
        %v1653 = vmul.f32 %v232, %v1644
        %v1654 = vmul.f32 %v233, %v1644
        %v1655 = vmul.f32 %v234, %v1644
        %v1656 = vmul.f32 %v235, %v1644
        %v1657 = vmul.f32 %v236, %v1644
        %v1658 = vmul.f32 %v237, %v1644
        %v1659 = vmul.f32 %v238, %v1644
        %v1660 = vmul.f32 %v239, %v1644
        %v1661 = vmul.f32 %v240, %v1644
        %v1662 = vmul.f32 %v241, %v1644
        %v1663 = vmul.f32 %v242, %v1644
        %v1664 = vmul.f32 %v243, %v1644
        %v1665 = vmul.f32 %v244, %v1644
        %v1666 = vmul.f32 %v245, %v1644
        %v1667 = vmul.f32 %v246, %v1644
        %v1668 = vmul.f32 %v247, %v1644
        %v1669 = vmul.f32 %v248, %v1644
        %v1670 = vmul.f32 %v249, %v1644
        %v1671 = vmul.f32 %v250, %v1644
        %v1672 = vmul.f32 %v251, %v1644
        %v1673 = vmul.f32 %v252, %v1644
        %v1674 = vmul.f32 %v253, %v1644
        %v1675 = vmul.f32 %v254, %v1644
        %v1676 = vmul.f32 %v255, %v1644
        %v1677 = vmul.f32 %v256, %v1644
        %v1678 = vmul.f32 %v257, %v1644
        %v1679 = vmul.f32 %v258, %v1644
        %v1680 = vmul.f32 %v259, %v1644
        %v1681 = vmul.f32 %v260, %v1644
        %v1682 = vmul.f32 %v261, %v1644
        %v1683 = vmul.f32 %v262, %v1644
        %v1684 = vmul.f32 %v263, %v1644
        %v1685 = vmul.f32 %v264, %v1644
        %v1686 = vmul.f32 %v265, %v1644
        %v1687 = vmul.f32 %v266, %v1644
        %v1688 = vmul.f32 %v267, %v1644
        %v1689 = vmul.f32 %v268, %v1644
        %v1690 = vmul.f32 %v269, %v1644
        %v1691 = vmul.f32 %v270, %v1644
        %v1692 = vmul.f32 %v271, %v1644
        %v1741 = vrot.slane %v1645, 2
        %v1742 = vrot.slane %v1646, 2
        %v1743 = vsel %vm694, %v1741, %v1742
        %v1744 = vrot.slane %v1647, 2
        %v1745 = vsel %vm694, %v1742, %v1744
        %v1746 = vrot.slane %v1648, 2
        %v1747 = vrot.slane %v1649, 2
        %v1748 = vsel %vm694, %v1746, %v1747
        %v1749 = vrot.slane %v1650, 2
        %v1750 = vsel %vm694, %v1747, %v1749
        %v1751 = vrot.slane %v1651, 2
        %v1752 = vrot.slane %v1652, 2
        %v1753 = vsel %vm694, %v1751, %v1752
        %v1754 = vrot.slane %v1653, 2
        %v1755 = vsel %vm694, %v1752, %v1754
        %v1756 = vrot.slane %v1654, 2
        %v1757 = vrot.slane %v1655, 2
        %v1758 = vsel %vm694, %v1756, %v1757
        %v1759 = vrot.slane %v1656, 2
        %v1760 = vsel %vm694, %v1757, %v1759
        %v1761 = vrot.slane %v1657, 2
        %v1762 = vrot.slane %v1658, 2
        %v1763 = vsel %vm694, %v1761, %v1762
        %v1764 = vrot.slane %v1659, 2
        %v1765 = vsel %vm694, %v1762, %v1764
        %v1766 = vrot.slane %v1660, 2
        %v1767 = vrot.slane %v1661, 2
        %v1768 = vsel %vm694, %v1766, %v1767
        %v1769 = vrot.slane %v1662, 2
        %v1770 = vsel %vm694, %v1767, %v1769
        %v1771 = vrot.slane %v1663, 2
        %v1772 = vrot.slane %v1664, 2
        %v1773 = vsel %vm694, %v1771, %v1772
        %v1774 = vrot.slane %v1665, 2
        %v1775 = vsel %vm694, %v1772, %v1774
        %v1776 = vrot.slane %v1666, 2
        %v1777 = vrot.slane %v1667, 2
        %v1778 = vsel %vm694, %v1776, %v1777
        %v1779 = vrot.slane %v1668, 2
        %v1780 = vsel %vm694, %v1777, %v1779
        %v1781 = vrot.slane %v1669, 2
        %v1782 = vrot.slane %v1670, 2
        %v1783 = vsel %vm694, %v1781, %v1782
        %v1784 = vrot.slane %v1671, 2
        %v1785 = vsel %vm694, %v1782, %v1784
        %v1786 = vrot.slane %v1672, 2
        %v1787 = vrot.slane %v1673, 2
        %v1788 = vsel %vm694, %v1786, %v1787
        %v1789 = vrot.slane %v1674, 2
        %v1790 = vsel %vm694, %v1787, %v1789
        %v1791 = vrot.slane %v1675, 2
        %v1792 = vrot.slane %v1676, 2
        %v1793 = vsel %vm694, %v1791, %v1792
        %v1794 = vrot.slane %v1677, 2
        %v1795 = vsel %vm694, %v1792, %v1794
        %v1796 = vrot.slane %v1678, 2
        %v1797 = vrot.slane %v1679, 2
        %v1798 = vsel %vm694, %v1796, %v1797
        %v1799 = vrot.slane %v1680, 2
        %v1800 = vsel %vm694, %v1797, %v1799
        %v1801 = vrot.slane %v1681, 2
        %v1802 = vrot.slane %v1682, 2
        %v1803 = vsel %vm694, %v1801, %v1802
        %v1804 = vrot.slane %v1683, 2
        %v1805 = vsel %vm694, %v1802, %v1804
        %v1806 = vrot.slane %v1684, 2
        %v1807 = vrot.slane %v1685, 2
        %v1808 = vsel %vm694, %v1806, %v1807
        %v1809 = vrot.slane %v1686, 2
        %v1810 = vsel %vm694, %v1807, %v1809
        %v1811 = vrot.slane %v1687, 2
        %v1812 = vrot.slane %v1688, 2
        %v1813 = vsel %vm694, %v1811, %v1812
        %v1814 = vrot.slane %v1689, 2
        %v1815 = vsel %vm694, %v1812, %v1814
        %v1816 = vrot.slane %v1690, 2
        %v1817 = vrot.slane %v1691, 2
        %v1818 = vsel %vm694, %v1816, %v1817
        %v1819 = vrot.slane %v1692, 2
        %v1820 = vsel %vm694, %v1817, %v1819
        %v1853 = vadd.f32 %v1609, %v1743
        %v1854 = vadd.f32 %v1610, %v1745
        %v1855 = vadd.f32 %v1611, %v1748
        %v1856 = vadd.f32 %v1612, %v1750
        %v1857 = vadd.f32 %v1613, %v1753
        %v1858 = vadd.f32 %v1614, %v1755
        %v1859 = vadd.f32 %v1615, %v1758
        %v1860 = vadd.f32 %v1616, %v1760
        %v1861 = vadd.f32 %v1617, %v1763
        %v1862 = vadd.f32 %v1618, %v1765
        %v1863 = vadd.f32 %v1619, %v1768
        %v1864 = vadd.f32 %v1620, %v1770
        %v1865 = vadd.f32 %v1621, %v1773
        %v1866 = vadd.f32 %v1622, %v1775
        %v1867 = vadd.f32 %v1623, %v1778
        %v1868 = vadd.f32 %v1624, %v1780
        %v1869 = vadd.f32 %v1625, %v1783
        %v1870 = vadd.f32 %v1626, %v1785
        %v1871 = vadd.f32 %v1627, %v1788
        %v1872 = vadd.f32 %v1628, %v1790
        %v1873 = vadd.f32 %v1629, %v1793
        %v1874 = vadd.f32 %v1630, %v1795
        %v1875 = vadd.f32 %v1631, %v1798
        %v1876 = vadd.f32 %v1632, %v1800
        %v1877 = vadd.f32 %v1633, %v1803
        %v1878 = vadd.f32 %v1634, %v1805
        %v1879 = vadd.f32 %v1635, %v1808
        %v1880 = vadd.f32 %v1636, %v1810
        %v1881 = vadd.f32 %v1637, %v1813
        %v1882 = vadd.f32 %v1638, %v1815
        %v1883 = vadd.f32 %v1639, %v1818
        %v1884 = vadd.f32 %v1640, %v1820
        %v1885 = vlaneseq
        %v1886 = vshrl.u32 %v1885, 7
        %v1887 = vsub.s32 3, %v1886
        %v1888 = vrot.slane %v217, %v1887
        %v1889 = vmul.f32 %v224, %v1888
        %v1890 = vmul.f32 %v225, %v1888
        %v1891 = vmul.f32 %v226, %v1888
        %v1892 = vmul.f32 %v227, %v1888
        %v1893 = vmul.f32 %v228, %v1888
        %v1894 = vmul.f32 %v229, %v1888
        %v1895 = vmul.f32 %v230, %v1888
        %v1896 = vmul.f32 %v231, %v1888
        %v1897 = vmul.f32 %v232, %v1888
        %v1898 = vmul.f32 %v233, %v1888
        %v1899 = vmul.f32 %v234, %v1888
        %v1900 = vmul.f32 %v235, %v1888
        %v1901 = vmul.f32 %v236, %v1888
        %v1902 = vmul.f32 %v237, %v1888
        %v1903 = vmul.f32 %v238, %v1888
        %v1904 = vmul.f32 %v239, %v1888
        %v1905 = vmul.f32 %v240, %v1888
        %v1906 = vmul.f32 %v241, %v1888
        %v1907 = vmul.f32 %v242, %v1888
        %v1908 = vmul.f32 %v243, %v1888
        %v1909 = vmul.f32 %v244, %v1888
        %v1910 = vmul.f32 %v245, %v1888
        %v1911 = vmul.f32 %v246, %v1888
        %v1912 = vmul.f32 %v247, %v1888
        %v1913 = vmul.f32 %v248, %v1888
        %v1914 = vmul.f32 %v249, %v1888
        %v1915 = vmul.f32 %v250, %v1888
        %v1916 = vmul.f32 %v251, %v1888
        %v1917 = vmul.f32 %v252, %v1888
        %v1918 = vmul.f32 %v253, %v1888
        %v1919 = vmul.f32 %v254, %v1888
        %v1920 = vmul.f32 %v255, %v1888
        %v1921 = vmul.f32 %v256, %v1888
        %v1922 = vmul.f32 %v257, %v1888
        %v1923 = vmul.f32 %v258, %v1888
        %v1924 = vmul.f32 %v259, %v1888
        %v1925 = vmul.f32 %v260, %v1888
        %v1926 = vmul.f32 %v261, %v1888
        %v1927 = vmul.f32 %v262, %v1888
        %v1928 = vmul.f32 %v263, %v1888
        %v1929 = vmul.f32 %v264, %v1888
        %v1930 = vmul.f32 %v265, %v1888
        %v1931 = vmul.f32 %v266, %v1888
        %v1932 = vmul.f32 %v267, %v1888
        %v1933 = vmul.f32 %v268, %v1888
        %v1934 = vmul.f32 %v269, %v1888
        %v1935 = vmul.f32 %v270, %v1888
        %v1936 = vmul.f32 %v271, %v1888
        %v1985 = vrot.slane %v1889, 3
        %v1986 = vrot.slane %v1890, 3
        %v1987 = vsel %vm939, %v1985, %v1986
        %v1988 = vrot.slane %v1891, 3
        %v1989 = vsel %vm939, %v1986, %v1988
        %v1990 = vrot.slane %v1892, 3
        %v1991 = vrot.slane %v1893, 3
        %v1992 = vsel %vm939, %v1990, %v1991
        %v1993 = vrot.slane %v1894, 3
        %v1994 = vsel %vm939, %v1991, %v1993
        %v1995 = vrot.slane %v1895, 3
        %v1996 = vrot.slane %v1896, 3
        %v1997 = vsel %vm939, %v1995, %v1996
        %v1998 = vrot.slane %v1897, 3
        %v1999 = vsel %vm939, %v1996, %v1998
        %v2000 = vrot.slane %v1898, 3
        %v2001 = vrot.slane %v1899, 3
        %v2002 = vsel %vm939, %v2000, %v2001
        %v2003 = vrot.slane %v1900, 3
        %v2004 = vsel %vm939, %v2001, %v2003
        %v2005 = vrot.slane %v1901, 3
        %v2006 = vrot.slane %v1902, 3
        %v2007 = vsel %vm939, %v2005, %v2006
        %v2008 = vrot.slane %v1903, 3
        %v2009 = vsel %vm939, %v2006, %v2008
        %v2010 = vrot.slane %v1904, 3
        %v2011 = vrot.slane %v1905, 3
        %v2012 = vsel %vm939, %v2010, %v2011
        %v2013 = vrot.slane %v1906, 3
        %v2014 = vsel %vm939, %v2011, %v2013
        %v2015 = vrot.slane %v1907, 3
        %v2016 = vrot.slane %v1908, 3
        %v2017 = vsel %vm939, %v2015, %v2016
        %v2018 = vrot.slane %v1909, 3
        %v2019 = vsel %vm939, %v2016, %v2018
        %v2020 = vrot.slane %v1910, 3
        %v2021 = vrot.slane %v1911, 3
        %v2022 = vsel %vm939, %v2020, %v2021
        %v2023 = vrot.slane %v1912, 3
        %v2024 = vsel %vm939, %v2021, %v2023
        %v2025 = vrot.slane %v1913, 3
        %v2026 = vrot.slane %v1914, 3
        %v2027 = vsel %vm939, %v2025, %v2026
        %v2028 = vrot.slane %v1915, 3
        %v2029 = vsel %vm939, %v2026, %v2028
        %v2030 = vrot.slane %v1916, 3
        %v2031 = vrot.slane %v1917, 3
        %v2032 = vsel %vm939, %v2030, %v2031
        %v2033 = vrot.slane %v1918, 3
        %v2034 = vsel %vm939, %v2031, %v2033
        %v2035 = vrot.slane %v1919, 3
        %v2036 = vrot.slane %v1920, 3
        %v2037 = vsel %vm939, %v2035, %v2036
        %v2038 = vrot.slane %v1921, 3
        %v2039 = vsel %vm939, %v2036, %v2038
        %v2040 = vrot.slane %v1922, 3
        %v2041 = vrot.slane %v1923, 3
        %v2042 = vsel %vm939, %v2040, %v2041
        %v2043 = vrot.slane %v1924, 3
        %v2044 = vsel %vm939, %v2041, %v2043
        %v2045 = vrot.slane %v1925, 3
        %v2046 = vrot.slane %v1926, 3
        %v2047 = vsel %vm939, %v2045, %v2046
        %v2048 = vrot.slane %v1927, 3
        %v2049 = vsel %vm939, %v2046, %v2048
        %v2050 = vrot.slane %v1928, 3
        %v2051 = vrot.slane %v1929, 3
        %v2052 = vsel %vm939, %v2050, %v2051
        %v2053 = vrot.slane %v1930, 3
        %v2054 = vsel %vm939, %v2051, %v2053
        %v2055 = vrot.slane %v1931, 3
        %v2056 = vrot.slane %v1932, 3
        %v2057 = vsel %vm939, %v2055, %v2056
        %v2058 = vrot.slane %v1933, 3
        %v2059 = vsel %vm939, %v2056, %v2058
        %v2060 = vrot.slane %v1934, 3
        %v2061 = vrot.slane %v1935, 3
        %v2062 = vsel %vm939, %v2060, %v2061
        %v2063 = vrot.slane %v1936, 3
        %v2064 = vsel %vm939, %v2061, %v2063
        %v2097 = vadd.f32 %v1853, %v1987
        %v2098 = vadd.f32 %v1854, %v1989
        %v2099 = vadd.f32 %v1855, %v1992
        %v2100 = vadd.f32 %v1856, %v1994
        %v2101 = vadd.f32 %v1857, %v1997
        %v2102 = vadd.f32 %v1858, %v1999
        %v2103 = vadd.f32 %v1859, %v2002
        %v2104 = vadd.f32 %v1860, %v2004
        %v2105 = vadd.f32 %v1861, %v2007
        %v2106 = vadd.f32 %v1862, %v2009
        %v2107 = vadd.f32 %v1863, %v2012
        %v2108 = vadd.f32 %v1864, %v2014
        %v2109 = vadd.f32 %v1865, %v2017
        %v2110 = vadd.f32 %v1866, %v2019
        %v2111 = vadd.f32 %v1867, %v2022
        %v2112 = vadd.f32 %v1868, %v2024
        %v2113 = vadd.f32 %v1869, %v2027
        %v2114 = vadd.f32 %v1870, %v2029
        %v2115 = vadd.f32 %v1871, %v2032
        %v2116 = vadd.f32 %v1872, %v2034
        %v2117 = vadd.f32 %v1873, %v2037
        %v2118 = vadd.f32 %v1874, %v2039
        %v2119 = vadd.f32 %v1875, %v2042
        %v2120 = vadd.f32 %v1876, %v2044
        %v2121 = vadd.f32 %v1877, %v2047
        %v2122 = vadd.f32 %v1878, %v2049
        %v2123 = vadd.f32 %v1879, %v2052
        %v2124 = vadd.f32 %v1880, %v2054
        %v2125 = vadd.f32 %v1881, %v2057
        %v2126 = vadd.f32 %v1882, %v2059
        %v2127 = vadd.f32 %v1883, %v2062
        %v2128 = vadd.f32 %v1884, %v2064
        %v2129 = vlaneseq
        %v2130 = vshrl.u32 %v2129, 7
        %v2131 = vsub.s32 4, %v2130
        %v2132 = vrot.slane %v217, %v2131
        %v2133 = vmul.f32 %v224, %v2132
        %v2134 = vmul.f32 %v225, %v2132
        %v2135 = vmul.f32 %v226, %v2132
        %v2136 = vmul.f32 %v227, %v2132
        %v2137 = vmul.f32 %v228, %v2132
        %v2138 = vmul.f32 %v229, %v2132
        %v2139 = vmul.f32 %v230, %v2132
        %v2140 = vmul.f32 %v231, %v2132
        %v2141 = vmul.f32 %v232, %v2132
        %v2142 = vmul.f32 %v233, %v2132
        %v2143 = vmul.f32 %v234, %v2132
        %v2144 = vmul.f32 %v235, %v2132
        %v2145 = vmul.f32 %v236, %v2132
        %v2146 = vmul.f32 %v237, %v2132
        %v2147 = vmul.f32 %v238, %v2132
        %v2148 = vmul.f32 %v239, %v2132
        %v2149 = vmul.f32 %v240, %v2132
        %v2150 = vmul.f32 %v241, %v2132
        %v2151 = vmul.f32 %v242, %v2132
        %v2152 = vmul.f32 %v243, %v2132
        %v2153 = vmul.f32 %v244, %v2132
        %v2154 = vmul.f32 %v245, %v2132
        %v2155 = vmul.f32 %v246, %v2132
        %v2156 = vmul.f32 %v247, %v2132
        %v2157 = vmul.f32 %v248, %v2132
        %v2158 = vmul.f32 %v249, %v2132
        %v2159 = vmul.f32 %v250, %v2132
        %v2160 = vmul.f32 %v251, %v2132
        %v2161 = vmul.f32 %v252, %v2132
        %v2162 = vmul.f32 %v253, %v2132
        %v2163 = vmul.f32 %v254, %v2132
        %v2164 = vmul.f32 %v255, %v2132
        %v2165 = vmul.f32 %v256, %v2132
        %v2166 = vmul.f32 %v257, %v2132
        %v2167 = vmul.f32 %v258, %v2132
        %v2168 = vmul.f32 %v259, %v2132
        %v2169 = vmul.f32 %v260, %v2132
        %v2170 = vmul.f32 %v261, %v2132
        %v2171 = vmul.f32 %v262, %v2132
        %v2172 = vmul.f32 %v263, %v2132
        %v2173 = vmul.f32 %v264, %v2132
        %v2174 = vmul.f32 %v265, %v2132
        %v2175 = vmul.f32 %v266, %v2132
        %v2176 = vmul.f32 %v267, %v2132
        %v2177 = vmul.f32 %v268, %v2132
        %v2178 = vmul.f32 %v269, %v2132
        %v2179 = vmul.f32 %v270, %v2132
        %v2180 = vmul.f32 %v271, %v2132
        %v2229 = vrot.slane %v2133, 4
        %v2230 = vrot.slane %v2134, 4
        %v2231 = vsel %vm1184, %v2229, %v2230
        %v2232 = vrot.slane %v2135, 4
        %v2233 = vsel %vm1184, %v2230, %v2232
        %v2234 = vrot.slane %v2136, 4
        %v2235 = vrot.slane %v2137, 4
        %v2236 = vsel %vm1184, %v2234, %v2235
        %v2237 = vrot.slane %v2138, 4
        %v2238 = vsel %vm1184, %v2235, %v2237
        %v2239 = vrot.slane %v2139, 4
        %v2240 = vrot.slane %v2140, 4
        %v2241 = vsel %vm1184, %v2239, %v2240
        %v2242 = vrot.slane %v2141, 4
        %v2243 = vsel %vm1184, %v2240, %v2242
        %v2244 = vrot.slane %v2142, 4
        %v2245 = vrot.slane %v2143, 4
        %v2246 = vsel %vm1184, %v2244, %v2245
        %v2247 = vrot.slane %v2144, 4
        %v2248 = vsel %vm1184, %v2245, %v2247
        %v2249 = vrot.slane %v2145, 4
        %v2250 = vrot.slane %v2146, 4
        %v2251 = vsel %vm1184, %v2249, %v2250
        %v2252 = vrot.slane %v2147, 4
        %v2253 = vsel %vm1184, %v2250, %v2252
        %v2254 = vrot.slane %v2148, 4
        %v2255 = vrot.slane %v2149, 4
        %v2256 = vsel %vm1184, %v2254, %v2255
        %v2257 = vrot.slane %v2150, 4
        %v2258 = vsel %vm1184, %v2255, %v2257
        %v2259 = vrot.slane %v2151, 4
        %v2260 = vrot.slane %v2152, 4
        %v2261 = vsel %vm1184, %v2259, %v2260
        %v2262 = vrot.slane %v2153, 4
        %v2263 = vsel %vm1184, %v2260, %v2262
        %v2264 = vrot.slane %v2154, 4
        %v2265 = vrot.slane %v2155, 4
        %v2266 = vsel %vm1184, %v2264, %v2265
        %v2267 = vrot.slane %v2156, 4
        %v2268 = vsel %vm1184, %v2265, %v2267
        %v2269 = vrot.slane %v2157, 4
        %v2270 = vrot.slane %v2158, 4
        %v2271 = vsel %vm1184, %v2269, %v2270
        %v2272 = vrot.slane %v2159, 4
        %v2273 = vsel %vm1184, %v2270, %v2272
        %v2274 = vrot.slane %v2160, 4
        %v2275 = vrot.slane %v2161, 4
        %v2276 = vsel %vm1184, %v2274, %v2275
        %v2277 = vrot.slane %v2162, 4
        %v2278 = vsel %vm1184, %v2275, %v2277
        %v2279 = vrot.slane %v2163, 4
        %v2280 = vrot.slane %v2164, 4
        %v2281 = vsel %vm1184, %v2279, %v2280
        %v2282 = vrot.slane %v2165, 4
        %v2283 = vsel %vm1184, %v2280, %v2282
        %v2284 = vrot.slane %v2166, 4
        %v2285 = vrot.slane %v2167, 4
        %v2286 = vsel %vm1184, %v2284, %v2285
        %v2287 = vrot.slane %v2168, 4
        %v2288 = vsel %vm1184, %v2285, %v2287
        %v2289 = vrot.slane %v2169, 4
        %v2290 = vrot.slane %v2170, 4
        %v2291 = vsel %vm1184, %v2289, %v2290
        %v2292 = vrot.slane %v2171, 4
        %v2293 = vsel %vm1184, %v2290, %v2292
        %v2294 = vrot.slane %v2172, 4
        %v2295 = vrot.slane %v2173, 4
        %v2296 = vsel %vm1184, %v2294, %v2295
        %v2297 = vrot.slane %v2174, 4
        %v2298 = vsel %vm1184, %v2295, %v2297
        %v2299 = vrot.slane %v2175, 4
        %v2300 = vrot.slane %v2176, 4
        %v2301 = vsel %vm1184, %v2299, %v2300
        %v2302 = vrot.slane %v2177, 4
        %v2303 = vsel %vm1184, %v2300, %v2302
        %v2304 = vrot.slane %v2178, 4
        %v2305 = vrot.slane %v2179, 4
        %v2306 = vsel %vm1184, %v2304, %v2305
        %v2307 = vrot.slane %v2180, 4
        %v2308 = vsel %vm1184, %v2305, %v2307
        %v2341 = vadd.f32 %v2097, %v2231
        %v2342 = vadd.f32 %v2098, %v2233
        %v2343 = vadd.f32 %v2099, %v2236
        %v2344 = vadd.f32 %v2100, %v2238
        %v2345 = vadd.f32 %v2101, %v2241
        %v2346 = vadd.f32 %v2102, %v2243
        %v2347 = vadd.f32 %v2103, %v2246
        %v2348 = vadd.f32 %v2104, %v2248
        %v2349 = vadd.f32 %v2105, %v2251
        %v2350 = vadd.f32 %v2106, %v2253
        %v2351 = vadd.f32 %v2107, %v2256
        %v2352 = vadd.f32 %v2108, %v2258
        %v2353 = vadd.f32 %v2109, %v2261
        %v2354 = vadd.f32 %v2110, %v2263
        %v2355 = vadd.f32 %v2111, %v2266
        %v2356 = vadd.f32 %v2112, %v2268
        %v2357 = vadd.f32 %v2113, %v2271
        %v2358 = vadd.f32 %v2114, %v2273
        %v2359 = vadd.f32 %v2115, %v2276
        %v2360 = vadd.f32 %v2116, %v2278
        %v2361 = vadd.f32 %v2117, %v2281
        %v2362 = vadd.f32 %v2118, %v2283
        %v2363 = vadd.f32 %v2119, %v2286
        %v2364 = vadd.f32 %v2120, %v2288
        %v2365 = vadd.f32 %v2121, %v2291
        %v2366 = vadd.f32 %v2122, %v2293
        %v2367 = vadd.f32 %v2123, %v2296
        %v2368 = vadd.f32 %v2124, %v2298
        %v2369 = vadd.f32 %v2125, %v2301
        %v2370 = vadd.f32 %v2126, %v2303
        %v2371 = vadd.f32 %v2127, %v2306
        %v2372 = vadd.f32 %v2128, %v2308
        %v2373 = vlaneseq
        %v2374 = vshrl.u32 %v2373, 7
        %v2375 = vsub.s32 0, %v2374
        %v2376 = vrot.slane %v218, %v2375
        %v2377 = vmul.f32 %v227, %v2376
        %v2378 = vmul.f32 %v228, %v2376
        %v2379 = vmul.f32 %v230, %v2376
        %v2380 = vmul.f32 %v231, %v2376
        %v2381 = vmul.f32 %v233, %v2376
        %v2382 = vmul.f32 %v234, %v2376
        %v2383 = vmul.f32 %v236, %v2376
        %v2384 = vmul.f32 %v237, %v2376
        %v2385 = vmul.f32 %v239, %v2376
        %v2386 = vmul.f32 %v240, %v2376
        %v2387 = vmul.f32 %v242, %v2376
        %v2388 = vmul.f32 %v243, %v2376
        %v2389 = vmul.f32 %v245, %v2376
        %v2390 = vmul.f32 %v246, %v2376
        %v2391 = vmul.f32 %v248, %v2376
        %v2392 = vmul.f32 %v249, %v2376
        %v2393 = vmul.f32 %v251, %v2376
        %v2394 = vmul.f32 %v252, %v2376
        %v2395 = vmul.f32 %v254, %v2376
        %v2396 = vmul.f32 %v255, %v2376
        %v2397 = vmul.f32 %v257, %v2376
        %v2398 = vmul.f32 %v258, %v2376
        %v2399 = vmul.f32 %v260, %v2376
        %v2400 = vmul.f32 %v261, %v2376
        %v2401 = vmul.f32 %v263, %v2376
        %v2402 = vmul.f32 %v264, %v2376
        %v2403 = vmul.f32 %v266, %v2376
        %v2404 = vmul.f32 %v267, %v2376
        %v2405 = vmul.f32 %v269, %v2376
        %v2406 = vmul.f32 %v270, %v2376
        %v2407 = vmul.f32 %v272, %v2376
        %v2408 = vmul.f32 %v273, %v2376
        %v2409 = vadd.f32 %v2341, %v2377
        %v2410 = vadd.f32 %v2342, %v2378
        %v2411 = vadd.f32 %v2343, %v2379
        %v2412 = vadd.f32 %v2344, %v2380
        %v2413 = vadd.f32 %v2345, %v2381
        %v2414 = vadd.f32 %v2346, %v2382
        %v2415 = vadd.f32 %v2347, %v2383
        %v2416 = vadd.f32 %v2348, %v2384
        %v2417 = vadd.f32 %v2349, %v2385
        %v2418 = vadd.f32 %v2350, %v2386
        %v2419 = vadd.f32 %v2351, %v2387
        %v2420 = vadd.f32 %v2352, %v2388
        %v2421 = vadd.f32 %v2353, %v2389
        %v2422 = vadd.f32 %v2354, %v2390
        %v2423 = vadd.f32 %v2355, %v2391
        %v2424 = vadd.f32 %v2356, %v2392
        %v2425 = vadd.f32 %v2357, %v2393
        %v2426 = vadd.f32 %v2358, %v2394
        %v2427 = vadd.f32 %v2359, %v2395
        %v2428 = vadd.f32 %v2360, %v2396
        %v2429 = vadd.f32 %v2361, %v2397
        %v2430 = vadd.f32 %v2362, %v2398
        %v2431 = vadd.f32 %v2363, %v2399
        %v2432 = vadd.f32 %v2364, %v2400
        %v2433 = vadd.f32 %v2365, %v2401
        %v2434 = vadd.f32 %v2366, %v2402
        %v2435 = vadd.f32 %v2367, %v2403
        %v2436 = vadd.f32 %v2368, %v2404
        %v2437 = vadd.f32 %v2369, %v2405
        %v2438 = vadd.f32 %v2370, %v2406
        %v2439 = vadd.f32 %v2371, %v2407
        %v2440 = vadd.f32 %v2372, %v2408
        %v2441 = vlaneseq
        %v2442 = vshrl.u32 %v2441, 7
        %v2443 = vsub.s32 1, %v2442
        %v2444 = vrot.slane %v218, %v2443
        %v2445 = vmul.f32 %v227, %v2444
        %v2446 = vmul.f32 %v228, %v2444
        %v2447 = vmul.f32 %v229, %v2444
        %v2448 = vmul.f32 %v230, %v2444
        %v2449 = vmul.f32 %v231, %v2444
        %v2450 = vmul.f32 %v232, %v2444
        %v2451 = vmul.f32 %v233, %v2444
        %v2452 = vmul.f32 %v234, %v2444
        %v2453 = vmul.f32 %v235, %v2444
        %v2454 = vmul.f32 %v236, %v2444
        %v2455 = vmul.f32 %v237, %v2444
        %v2456 = vmul.f32 %v238, %v2444
        %v2457 = vmul.f32 %v239, %v2444
        %v2458 = vmul.f32 %v240, %v2444
        %v2459 = vmul.f32 %v241, %v2444
        %v2460 = vmul.f32 %v242, %v2444
        %v2461 = vmul.f32 %v243, %v2444
        %v2462 = vmul.f32 %v244, %v2444
        %v2463 = vmul.f32 %v245, %v2444
        %v2464 = vmul.f32 %v246, %v2444
        %v2465 = vmul.f32 %v247, %v2444
        %v2466 = vmul.f32 %v248, %v2444
        %v2467 = vmul.f32 %v249, %v2444
        %v2468 = vmul.f32 %v250, %v2444
        %v2469 = vmul.f32 %v251, %v2444
        %v2470 = vmul.f32 %v252, %v2444
        %v2471 = vmul.f32 %v253, %v2444
        %v2472 = vmul.f32 %v254, %v2444
        %v2473 = vmul.f32 %v255, %v2444
        %v2474 = vmul.f32 %v256, %v2444
        %v2475 = vmul.f32 %v257, %v2444
        %v2476 = vmul.f32 %v258, %v2444
        %v2477 = vmul.f32 %v259, %v2444
        %v2478 = vmul.f32 %v260, %v2444
        %v2479 = vmul.f32 %v261, %v2444
        %v2480 = vmul.f32 %v262, %v2444
        %v2481 = vmul.f32 %v263, %v2444
        %v2482 = vmul.f32 %v264, %v2444
        %v2483 = vmul.f32 %v265, %v2444
        %v2484 = vmul.f32 %v266, %v2444
        %v2485 = vmul.f32 %v267, %v2444
        %v2486 = vmul.f32 %v268, %v2444
        %v2487 = vmul.f32 %v269, %v2444
        %v2488 = vmul.f32 %v270, %v2444
        %v2489 = vmul.f32 %v271, %v2444
        %v2490 = vmul.f32 %v272, %v2444
        %v2491 = vmul.f32 %v273, %v2444
        %v2492 = vmul.f32 %v274, %v2444
        %v2541 = vrot.slane %v2445, 1
        %v2542 = vrot.slane %v2446, 1
        %v2543 = vsel %vm449, %v2541, %v2542
        %v2544 = vrot.slane %v2447, 1
        %v2545 = vsel %vm449, %v2542, %v2544
        %v2546 = vrot.slane %v2448, 1
        %v2547 = vrot.slane %v2449, 1
        %v2548 = vsel %vm449, %v2546, %v2547
        %v2549 = vrot.slane %v2450, 1
        %v2550 = vsel %vm449, %v2547, %v2549
        %v2551 = vrot.slane %v2451, 1
        %v2552 = vrot.slane %v2452, 1
        %v2553 = vsel %vm449, %v2551, %v2552
        %v2554 = vrot.slane %v2453, 1
        %v2555 = vsel %vm449, %v2552, %v2554
        %v2556 = vrot.slane %v2454, 1
        %v2557 = vrot.slane %v2455, 1
        %v2558 = vsel %vm449, %v2556, %v2557
        %v2559 = vrot.slane %v2456, 1
        %v2560 = vsel %vm449, %v2557, %v2559
        %v2561 = vrot.slane %v2457, 1
        %v2562 = vrot.slane %v2458, 1
        %v2563 = vsel %vm449, %v2561, %v2562
        %v2564 = vrot.slane %v2459, 1
        %v2565 = vsel %vm449, %v2562, %v2564
        %v2566 = vrot.slane %v2460, 1
        %v2567 = vrot.slane %v2461, 1
        %v2568 = vsel %vm449, %v2566, %v2567
        %v2569 = vrot.slane %v2462, 1
        %v2570 = vsel %vm449, %v2567, %v2569
        %v2571 = vrot.slane %v2463, 1
        %v2572 = vrot.slane %v2464, 1
        %v2573 = vsel %vm449, %v2571, %v2572
        %v2574 = vrot.slane %v2465, 1
        %v2575 = vsel %vm449, %v2572, %v2574
        %v2576 = vrot.slane %v2466, 1
        %v2577 = vrot.slane %v2467, 1
        %v2578 = vsel %vm449, %v2576, %v2577
        %v2579 = vrot.slane %v2468, 1
        %v2580 = vsel %vm449, %v2577, %v2579
        %v2581 = vrot.slane %v2469, 1
        %v2582 = vrot.slane %v2470, 1
        %v2583 = vsel %vm449, %v2581, %v2582
        %v2584 = vrot.slane %v2471, 1
        %v2585 = vsel %vm449, %v2582, %v2584
        %v2586 = vrot.slane %v2472, 1
        %v2587 = vrot.slane %v2473, 1
        %v2588 = vsel %vm449, %v2586, %v2587
        %v2589 = vrot.slane %v2474, 1
        %v2590 = vsel %vm449, %v2587, %v2589
        %v2591 = vrot.slane %v2475, 1
        %v2592 = vrot.slane %v2476, 1
        %v2593 = vsel %vm449, %v2591, %v2592
        %v2594 = vrot.slane %v2477, 1
        %v2595 = vsel %vm449, %v2592, %v2594
        %v2596 = vrot.slane %v2478, 1
        %v2597 = vrot.slane %v2479, 1
        %v2598 = vsel %vm449, %v2596, %v2597
        %v2599 = vrot.slane %v2480, 1
        %v2600 = vsel %vm449, %v2597, %v2599
        %v2601 = vrot.slane %v2481, 1
        %v2602 = vrot.slane %v2482, 1
        %v2603 = vsel %vm449, %v2601, %v2602
        %v2604 = vrot.slane %v2483, 1
        %v2605 = vsel %vm449, %v2602, %v2604
        %v2606 = vrot.slane %v2484, 1
        %v2607 = vrot.slane %v2485, 1
        %v2608 = vsel %vm449, %v2606, %v2607
        %v2609 = vrot.slane %v2486, 1
        %v2610 = vsel %vm449, %v2607, %v2609
        %v2611 = vrot.slane %v2487, 1
        %v2612 = vrot.slane %v2488, 1
        %v2613 = vsel %vm449, %v2611, %v2612
        %v2614 = vrot.slane %v2489, 1
        %v2615 = vsel %vm449, %v2612, %v2614
        %v2616 = vrot.slane %v2490, 1
        %v2617 = vrot.slane %v2491, 1
        %v2618 = vsel %vm449, %v2616, %v2617
        %v2619 = vrot.slane %v2492, 1
        %v2620 = vsel %vm449, %v2617, %v2619
        %v2653 = vadd.f32 %v2409, %v2543
        %v2654 = vadd.f32 %v2410, %v2545
        %v2655 = vadd.f32 %v2411, %v2548
        %v2656 = vadd.f32 %v2412, %v2550
        %v2657 = vadd.f32 %v2413, %v2553
        %v2658 = vadd.f32 %v2414, %v2555
        %v2659 = vadd.f32 %v2415, %v2558
        %v2660 = vadd.f32 %v2416, %v2560
        %v2661 = vadd.f32 %v2417, %v2563
        %v2662 = vadd.f32 %v2418, %v2565
        %v2663 = vadd.f32 %v2419, %v2568
        %v2664 = vadd.f32 %v2420, %v2570
        %v2665 = vadd.f32 %v2421, %v2573
        %v2666 = vadd.f32 %v2422, %v2575
        %v2667 = vadd.f32 %v2423, %v2578
        %v2668 = vadd.f32 %v2424, %v2580
        %v2669 = vadd.f32 %v2425, %v2583
        %v2670 = vadd.f32 %v2426, %v2585
        %v2671 = vadd.f32 %v2427, %v2588
        %v2672 = vadd.f32 %v2428, %v2590
        %v2673 = vadd.f32 %v2429, %v2593
        %v2674 = vadd.f32 %v2430, %v2595
        %v2675 = vadd.f32 %v2431, %v2598
        %v2676 = vadd.f32 %v2432, %v2600
        %v2677 = vadd.f32 %v2433, %v2603
        %v2678 = vadd.f32 %v2434, %v2605
        %v2679 = vadd.f32 %v2435, %v2608
        %v2680 = vadd.f32 %v2436, %v2610
        %v2681 = vadd.f32 %v2437, %v2613
        %v2682 = vadd.f32 %v2438, %v2615
        %v2683 = vadd.f32 %v2439, %v2618
        %v2684 = vadd.f32 %v2440, %v2620
        %v2685 = vlaneseq
        %v2686 = vshrl.u32 %v2685, 7
        %v2687 = vsub.s32 2, %v2686
        %v2688 = vrot.slane %v218, %v2687
        %v2689 = vmul.f32 %v227, %v2688
        %v2690 = vmul.f32 %v228, %v2688
        %v2691 = vmul.f32 %v229, %v2688
        %v2692 = vmul.f32 %v230, %v2688
        %v2693 = vmul.f32 %v231, %v2688
        %v2694 = vmul.f32 %v232, %v2688
        %v2695 = vmul.f32 %v233, %v2688
        %v2696 = vmul.f32 %v234, %v2688
        %v2697 = vmul.f32 %v235, %v2688
        %v2698 = vmul.f32 %v236, %v2688
        %v2699 = vmul.f32 %v237, %v2688
        %v2700 = vmul.f32 %v238, %v2688
        %v2701 = vmul.f32 %v239, %v2688
        %v2702 = vmul.f32 %v240, %v2688
        %v2703 = vmul.f32 %v241, %v2688
        %v2704 = vmul.f32 %v242, %v2688
        %v2705 = vmul.f32 %v243, %v2688
        %v2706 = vmul.f32 %v244, %v2688
        %v2707 = vmul.f32 %v245, %v2688
        %v2708 = vmul.f32 %v246, %v2688
        %v2709 = vmul.f32 %v247, %v2688
        %v2710 = vmul.f32 %v248, %v2688
        %v2711 = vmul.f32 %v249, %v2688
        %v2712 = vmul.f32 %v250, %v2688
        %v2713 = vmul.f32 %v251, %v2688
        %v2714 = vmul.f32 %v252, %v2688
        %v2715 = vmul.f32 %v253, %v2688
        %v2716 = vmul.f32 %v254, %v2688
        %v2717 = vmul.f32 %v255, %v2688
        %v2718 = vmul.f32 %v256, %v2688
        %v2719 = vmul.f32 %v257, %v2688
        %v2720 = vmul.f32 %v258, %v2688
        %v2721 = vmul.f32 %v259, %v2688
        %v2722 = vmul.f32 %v260, %v2688
        %v2723 = vmul.f32 %v261, %v2688
        %v2724 = vmul.f32 %v262, %v2688
        %v2725 = vmul.f32 %v263, %v2688
        %v2726 = vmul.f32 %v264, %v2688
        %v2727 = vmul.f32 %v265, %v2688
        %v2728 = vmul.f32 %v266, %v2688
        %v2729 = vmul.f32 %v267, %v2688
        %v2730 = vmul.f32 %v268, %v2688
        %v2731 = vmul.f32 %v269, %v2688
        %v2732 = vmul.f32 %v270, %v2688
        %v2733 = vmul.f32 %v271, %v2688
        %v2734 = vmul.f32 %v272, %v2688
        %v2735 = vmul.f32 %v273, %v2688
        %v2736 = vmul.f32 %v274, %v2688
        %v2785 = vrot.slane %v2689, 2
        %v2786 = vrot.slane %v2690, 2
        %v2787 = vsel %vm694, %v2785, %v2786
        %v2788 = vrot.slane %v2691, 2
        %v2789 = vsel %vm694, %v2786, %v2788
        %v2790 = vrot.slane %v2692, 2
        %v2791 = vrot.slane %v2693, 2
        %v2792 = vsel %vm694, %v2790, %v2791
        %v2793 = vrot.slane %v2694, 2
        %v2794 = vsel %vm694, %v2791, %v2793
        %v2795 = vrot.slane %v2695, 2
        %v2796 = vrot.slane %v2696, 2
        %v2797 = vsel %vm694, %v2795, %v2796
        %v2798 = vrot.slane %v2697, 2
        %v2799 = vsel %vm694, %v2796, %v2798
        %v2800 = vrot.slane %v2698, 2
        %v2801 = vrot.slane %v2699, 2
        %v2802 = vsel %vm694, %v2800, %v2801
        %v2803 = vrot.slane %v2700, 2
        %v2804 = vsel %vm694, %v2801, %v2803
        %v2805 = vrot.slane %v2701, 2
        %v2806 = vrot.slane %v2702, 2
        %v2807 = vsel %vm694, %v2805, %v2806
        %v2808 = vrot.slane %v2703, 2
        %v2809 = vsel %vm694, %v2806, %v2808
        %v2810 = vrot.slane %v2704, 2
        %v2811 = vrot.slane %v2705, 2
        %v2812 = vsel %vm694, %v2810, %v2811
        %v2813 = vrot.slane %v2706, 2
        %v2814 = vsel %vm694, %v2811, %v2813
        %v2815 = vrot.slane %v2707, 2
        %v2816 = vrot.slane %v2708, 2
        %v2817 = vsel %vm694, %v2815, %v2816
        %v2818 = vrot.slane %v2709, 2
        %v2819 = vsel %vm694, %v2816, %v2818
        %v2820 = vrot.slane %v2710, 2
        %v2821 = vrot.slane %v2711, 2
        %v2822 = vsel %vm694, %v2820, %v2821
        %v2823 = vrot.slane %v2712, 2
        %v2824 = vsel %vm694, %v2821, %v2823
        %v2825 = vrot.slane %v2713, 2
        %v2826 = vrot.slane %v2714, 2
        %v2827 = vsel %vm694, %v2825, %v2826
        %v2828 = vrot.slane %v2715, 2
        %v2829 = vsel %vm694, %v2826, %v2828
        %v2830 = vrot.slane %v2716, 2
        %v2831 = vrot.slane %v2717, 2
        %v2832 = vsel %vm694, %v2830, %v2831
        %v2833 = vrot.slane %v2718, 2
        %v2834 = vsel %vm694, %v2831, %v2833
        %v2835 = vrot.slane %v2719, 2
        %v2836 = vrot.slane %v2720, 2
        %v2837 = vsel %vm694, %v2835, %v2836
        %v2838 = vrot.slane %v2721, 2
        %v2839 = vsel %vm694, %v2836, %v2838
        %v2840 = vrot.slane %v2722, 2
        %v2841 = vrot.slane %v2723, 2
        %v2842 = vsel %vm694, %v2840, %v2841
        %v2843 = vrot.slane %v2724, 2
        %v2844 = vsel %vm694, %v2841, %v2843
        %v2845 = vrot.slane %v2725, 2
        %v2846 = vrot.slane %v2726, 2
        %v2847 = vsel %vm694, %v2845, %v2846
        %v2848 = vrot.slane %v2727, 2
        %v2849 = vsel %vm694, %v2846, %v2848
        %v2850 = vrot.slane %v2728, 2
        %v2851 = vrot.slane %v2729, 2
        %v2852 = vsel %vm694, %v2850, %v2851
        %v2853 = vrot.slane %v2730, 2
        %v2854 = vsel %vm694, %v2851, %v2853
        %v2855 = vrot.slane %v2731, 2
        %v2856 = vrot.slane %v2732, 2
        %v2857 = vsel %vm694, %v2855, %v2856
        %v2858 = vrot.slane %v2733, 2
        %v2859 = vsel %vm694, %v2856, %v2858
        %v2860 = vrot.slane %v2734, 2
        %v2861 = vrot.slane %v2735, 2
        %v2862 = vsel %vm694, %v2860, %v2861
        %v2863 = vrot.slane %v2736, 2
        %v2864 = vsel %vm694, %v2861, %v2863
        %v2897 = vadd.f32 %v2653, %v2787
        %v2898 = vadd.f32 %v2654, %v2789
        %v2899 = vadd.f32 %v2655, %v2792
        %v2900 = vadd.f32 %v2656, %v2794
        %v2901 = vadd.f32 %v2657, %v2797
        %v2902 = vadd.f32 %v2658, %v2799
        %v2903 = vadd.f32 %v2659, %v2802
        %v2904 = vadd.f32 %v2660, %v2804
        %v2905 = vadd.f32 %v2661, %v2807
        %v2906 = vadd.f32 %v2662, %v2809
        %v2907 = vadd.f32 %v2663, %v2812
        %v2908 = vadd.f32 %v2664, %v2814
        %v2909 = vadd.f32 %v2665, %v2817
        %v2910 = vadd.f32 %v2666, %v2819
        %v2911 = vadd.f32 %v2667, %v2822
        %v2912 = vadd.f32 %v2668, %v2824
        %v2913 = vadd.f32 %v2669, %v2827
        %v2914 = vadd.f32 %v2670, %v2829
        %v2915 = vadd.f32 %v2671, %v2832
        %v2916 = vadd.f32 %v2672, %v2834
        %v2917 = vadd.f32 %v2673, %v2837
        %v2918 = vadd.f32 %v2674, %v2839
        %v2919 = vadd.f32 %v2675, %v2842
        %v2920 = vadd.f32 %v2676, %v2844
        %v2921 = vadd.f32 %v2677, %v2847
        %v2922 = vadd.f32 %v2678, %v2849
        %v2923 = vadd.f32 %v2679, %v2852
        %v2924 = vadd.f32 %v2680, %v2854
        %v2925 = vadd.f32 %v2681, %v2857
        %v2926 = vadd.f32 %v2682, %v2859
        %v2927 = vadd.f32 %v2683, %v2862
        %v2928 = vadd.f32 %v2684, %v2864
        %v2929 = vlaneseq
        %v2930 = vshrl.u32 %v2929, 7
        %v2931 = vsub.s32 3, %v2930
        %v2932 = vrot.slane %v218, %v2931
        %v2933 = vmul.f32 %v227, %v2932
        %v2934 = vmul.f32 %v228, %v2932
        %v2935 = vmul.f32 %v229, %v2932
        %v2936 = vmul.f32 %v230, %v2932
        %v2937 = vmul.f32 %v231, %v2932
        %v2938 = vmul.f32 %v232, %v2932
        %v2939 = vmul.f32 %v233, %v2932
        %v2940 = vmul.f32 %v234, %v2932
        %v2941 = vmul.f32 %v235, %v2932
        %v2942 = vmul.f32 %v236, %v2932
        %v2943 = vmul.f32 %v237, %v2932
        %v2944 = vmul.f32 %v238, %v2932
        %v2945 = vmul.f32 %v239, %v2932
        %v2946 = vmul.f32 %v240, %v2932
        %v2947 = vmul.f32 %v241, %v2932
        %v2948 = vmul.f32 %v242, %v2932
        %v2949 = vmul.f32 %v243, %v2932
        %v2950 = vmul.f32 %v244, %v2932
        %v2951 = vmul.f32 %v245, %v2932
        %v2952 = vmul.f32 %v246, %v2932
        %v2953 = vmul.f32 %v247, %v2932
        %v2954 = vmul.f32 %v248, %v2932
        %v2955 = vmul.f32 %v249, %v2932
        %v2956 = vmul.f32 %v250, %v2932
        %v2957 = vmul.f32 %v251, %v2932
        %v2958 = vmul.f32 %v252, %v2932
        %v2959 = vmul.f32 %v253, %v2932
        %v2960 = vmul.f32 %v254, %v2932
        %v2961 = vmul.f32 %v255, %v2932
        %v2962 = vmul.f32 %v256, %v2932
        %v2963 = vmul.f32 %v257, %v2932
        %v2964 = vmul.f32 %v258, %v2932
        %v2965 = vmul.f32 %v259, %v2932
        %v2966 = vmul.f32 %v260, %v2932
        %v2967 = vmul.f32 %v261, %v2932
        %v2968 = vmul.f32 %v262, %v2932
        %v2969 = vmul.f32 %v263, %v2932
        %v2970 = vmul.f32 %v264, %v2932
        %v2971 = vmul.f32 %v265, %v2932
        %v2972 = vmul.f32 %v266, %v2932
        %v2973 = vmul.f32 %v267, %v2932
        %v2974 = vmul.f32 %v268, %v2932
        %v2975 = vmul.f32 %v269, %v2932
        %v2976 = vmul.f32 %v270, %v2932
        %v2977 = vmul.f32 %v271, %v2932
        %v2978 = vmul.f32 %v272, %v2932
        %v2979 = vmul.f32 %v273, %v2932
        %v2980 = vmul.f32 %v274, %v2932
        %v3029 = vrot.slane %v2933, 3
        %v3030 = vrot.slane %v2934, 3
        %v3031 = vsel %vm939, %v3029, %v3030
        %v3032 = vrot.slane %v2935, 3
        %v3033 = vsel %vm939, %v3030, %v3032
        %v3034 = vrot.slane %v2936, 3
        %v3035 = vrot.slane %v2937, 3
        %v3036 = vsel %vm939, %v3034, %v3035
        %v3037 = vrot.slane %v2938, 3
        %v3038 = vsel %vm939, %v3035, %v3037
        %v3039 = vrot.slane %v2939, 3
        %v3040 = vrot.slane %v2940, 3
        %v3041 = vsel %vm939, %v3039, %v3040
        %v3042 = vrot.slane %v2941, 3
        %v3043 = vsel %vm939, %v3040, %v3042
        %v3044 = vrot.slane %v2942, 3
        %v3045 = vrot.slane %v2943, 3
        %v3046 = vsel %vm939, %v3044, %v3045
        %v3047 = vrot.slane %v2944, 3
        %v3048 = vsel %vm939, %v3045, %v3047
        %v3049 = vrot.slane %v2945, 3
        %v3050 = vrot.slane %v2946, 3
        %v3051 = vsel %vm939, %v3049, %v3050
        %v3052 = vrot.slane %v2947, 3
        %v3053 = vsel %vm939, %v3050, %v3052
        %v3054 = vrot.slane %v2948, 3
        %v3055 = vrot.slane %v2949, 3
        %v3056 = vsel %vm939, %v3054, %v3055
        %v3057 = vrot.slane %v2950, 3
        %v3058 = vsel %vm939, %v3055, %v3057
        %v3059 = vrot.slane %v2951, 3
        %v3060 = vrot.slane %v2952, 3
        %v3061 = vsel %vm939, %v3059, %v3060
        %v3062 = vrot.slane %v2953, 3
        %v3063 = vsel %vm939, %v3060, %v3062
        %v3064 = vrot.slane %v2954, 3
        %v3065 = vrot.slane %v2955, 3
        %v3066 = vsel %vm939, %v3064, %v3065
        %v3067 = vrot.slane %v2956, 3
        %v3068 = vsel %vm939, %v3065, %v3067
        %v3069 = vrot.slane %v2957, 3
        %v3070 = vrot.slane %v2958, 3
        %v3071 = vsel %vm939, %v3069, %v3070
        %v3072 = vrot.slane %v2959, 3
        %v3073 = vsel %vm939, %v3070, %v3072
        %v3074 = vrot.slane %v2960, 3
        %v3075 = vrot.slane %v2961, 3
        %v3076 = vsel %vm939, %v3074, %v3075
        %v3077 = vrot.slane %v2962, 3
        %v3078 = vsel %vm939, %v3075, %v3077
        %v3079 = vrot.slane %v2963, 3
        %v3080 = vrot.slane %v2964, 3
        %v3081 = vsel %vm939, %v3079, %v3080
        %v3082 = vrot.slane %v2965, 3
        %v3083 = vsel %vm939, %v3080, %v3082
        %v3084 = vrot.slane %v2966, 3
        %v3085 = vrot.slane %v2967, 3
        %v3086 = vsel %vm939, %v3084, %v3085
        %v3087 = vrot.slane %v2968, 3
        %v3088 = vsel %vm939, %v3085, %v3087
        %v3089 = vrot.slane %v2969, 3
        %v3090 = vrot.slane %v2970, 3
        %v3091 = vsel %vm939, %v3089, %v3090
        %v3092 = vrot.slane %v2971, 3
        %v3093 = vsel %vm939, %v3090, %v3092
        %v3094 = vrot.slane %v2972, 3
        %v3095 = vrot.slane %v2973, 3
        %v3096 = vsel %vm939, %v3094, %v3095
        %v3097 = vrot.slane %v2974, 3
        %v3098 = vsel %vm939, %v3095, %v3097
        %v3099 = vrot.slane %v2975, 3
        %v3100 = vrot.slane %v2976, 3
        %v3101 = vsel %vm939, %v3099, %v3100
        %v3102 = vrot.slane %v2977, 3
        %v3103 = vsel %vm939, %v3100, %v3102
        %v3104 = vrot.slane %v2978, 3
        %v3105 = vrot.slane %v2979, 3
        %v3106 = vsel %vm939, %v3104, %v3105
        %v3107 = vrot.slane %v2980, 3
        %v3108 = vsel %vm939, %v3105, %v3107
        %v3141 = vadd.f32 %v2897, %v3031
        %v3142 = vadd.f32 %v2898, %v3033
        %v3143 = vadd.f32 %v2899, %v3036
        %v3144 = vadd.f32 %v2900, %v3038
        %v3145 = vadd.f32 %v2901, %v3041
        %v3146 = vadd.f32 %v2902, %v3043
        %v3147 = vadd.f32 %v2903, %v3046
        %v3148 = vadd.f32 %v2904, %v3048
        %v3149 = vadd.f32 %v2905, %v3051
        %v3150 = vadd.f32 %v2906, %v3053
        %v3151 = vadd.f32 %v2907, %v3056
        %v3152 = vadd.f32 %v2908, %v3058
        %v3153 = vadd.f32 %v2909, %v3061
        %v3154 = vadd.f32 %v2910, %v3063
        %v3155 = vadd.f32 %v2911, %v3066
        %v3156 = vadd.f32 %v2912, %v3068
        %v3157 = vadd.f32 %v2913, %v3071
        %v3158 = vadd.f32 %v2914, %v3073
        %v3159 = vadd.f32 %v2915, %v3076
        %v3160 = vadd.f32 %v2916, %v3078
        %v3161 = vadd.f32 %v2917, %v3081
        %v3162 = vadd.f32 %v2918, %v3083
        %v3163 = vadd.f32 %v2919, %v3086
        %v3164 = vadd.f32 %v2920, %v3088
        %v3165 = vadd.f32 %v2921, %v3091
        %v3166 = vadd.f32 %v2922, %v3093
        %v3167 = vadd.f32 %v2923, %v3096
        %v3168 = vadd.f32 %v2924, %v3098
        %v3169 = vadd.f32 %v2925, %v3101
        %v3170 = vadd.f32 %v2926, %v3103
        %v3171 = vadd.f32 %v2927, %v3106
        %v3172 = vadd.f32 %v2928, %v3108
        %v3173 = vlaneseq
        %v3174 = vshrl.u32 %v3173, 7
        %v3175 = vsub.s32 4, %v3174
        %v3176 = vrot.slane %v218, %v3175
        %v3177 = vmul.f32 %v227, %v3176
        %v3178 = vmul.f32 %v228, %v3176
        %v3179 = vmul.f32 %v229, %v3176
        %v3180 = vmul.f32 %v230, %v3176
        %v3181 = vmul.f32 %v231, %v3176
        %v3182 = vmul.f32 %v232, %v3176
        %v3183 = vmul.f32 %v233, %v3176
        %v3184 = vmul.f32 %v234, %v3176
        %v3185 = vmul.f32 %v235, %v3176
        %v3186 = vmul.f32 %v236, %v3176
        %v3187 = vmul.f32 %v237, %v3176
        %v3188 = vmul.f32 %v238, %v3176
        %v3189 = vmul.f32 %v239, %v3176
        %v3190 = vmul.f32 %v240, %v3176
        %v3191 = vmul.f32 %v241, %v3176
        %v3192 = vmul.f32 %v242, %v3176
        %v3193 = vmul.f32 %v243, %v3176
        %v3194 = vmul.f32 %v244, %v3176
        %v3195 = vmul.f32 %v245, %v3176
        %v3196 = vmul.f32 %v246, %v3176
        %v3197 = vmul.f32 %v247, %v3176
        %v3198 = vmul.f32 %v248, %v3176
        %v3199 = vmul.f32 %v249, %v3176
        %v3200 = vmul.f32 %v250, %v3176
        %v3201 = vmul.f32 %v251, %v3176
        %v3202 = vmul.f32 %v252, %v3176
        %v3203 = vmul.f32 %v253, %v3176
        %v3204 = vmul.f32 %v254, %v3176
        %v3205 = vmul.f32 %v255, %v3176
        %v3206 = vmul.f32 %v256, %v3176
        %v3207 = vmul.f32 %v257, %v3176
        %v3208 = vmul.f32 %v258, %v3176
        %v3209 = vmul.f32 %v259, %v3176
        %v3210 = vmul.f32 %v260, %v3176
        %v3211 = vmul.f32 %v261, %v3176
        %v3212 = vmul.f32 %v262, %v3176
        %v3213 = vmul.f32 %v263, %v3176
        %v3214 = vmul.f32 %v264, %v3176
        %v3215 = vmul.f32 %v265, %v3176
        %v3216 = vmul.f32 %v266, %v3176
        %v3217 = vmul.f32 %v267, %v3176
        %v3218 = vmul.f32 %v268, %v3176
        %v3219 = vmul.f32 %v269, %v3176
        %v3220 = vmul.f32 %v270, %v3176
        %v3221 = vmul.f32 %v271, %v3176
        %v3222 = vmul.f32 %v272, %v3176
        %v3223 = vmul.f32 %v273, %v3176
        %v3224 = vmul.f32 %v274, %v3176
        %v3273 = vrot.slane %v3177, 4
        %v3274 = vrot.slane %v3178, 4
        %v3275 = vsel %vm1184, %v3273, %v3274
        %v3276 = vrot.slane %v3179, 4
        %v3277 = vsel %vm1184, %v3274, %v3276
        %v3278 = vrot.slane %v3180, 4
        %v3279 = vrot.slane %v3181, 4
        %v3280 = vsel %vm1184, %v3278, %v3279
        %v3281 = vrot.slane %v3182, 4
        %v3282 = vsel %vm1184, %v3279, %v3281
        %v3283 = vrot.slane %v3183, 4
        %v3284 = vrot.slane %v3184, 4
        %v3285 = vsel %vm1184, %v3283, %v3284
        %v3286 = vrot.slane %v3185, 4
        %v3287 = vsel %vm1184, %v3284, %v3286
        %v3288 = vrot.slane %v3186, 4
        %v3289 = vrot.slane %v3187, 4
        %v3290 = vsel %vm1184, %v3288, %v3289
        %v3291 = vrot.slane %v3188, 4
        %v3292 = vsel %vm1184, %v3289, %v3291
        %v3293 = vrot.slane %v3189, 4
        %v3294 = vrot.slane %v3190, 4
        %v3295 = vsel %vm1184, %v3293, %v3294
        %v3296 = vrot.slane %v3191, 4
        %v3297 = vsel %vm1184, %v3294, %v3296
        %v3298 = vrot.slane %v3192, 4
        %v3299 = vrot.slane %v3193, 4
        %v3300 = vsel %vm1184, %v3298, %v3299
        %v3301 = vrot.slane %v3194, 4
        %v3302 = vsel %vm1184, %v3299, %v3301
        %v3303 = vrot.slane %v3195, 4
        %v3304 = vrot.slane %v3196, 4
        %v3305 = vsel %vm1184, %v3303, %v3304
        %v3306 = vrot.slane %v3197, 4
        %v3307 = vsel %vm1184, %v3304, %v3306
        %v3308 = vrot.slane %v3198, 4
        %v3309 = vrot.slane %v3199, 4
        %v3310 = vsel %vm1184, %v3308, %v3309
        %v3311 = vrot.slane %v3200, 4
        %v3312 = vsel %vm1184, %v3309, %v3311
        %v3313 = vrot.slane %v3201, 4
        %v3314 = vrot.slane %v3202, 4
        %v3315 = vsel %vm1184, %v3313, %v3314
        %v3316 = vrot.slane %v3203, 4
        %v3317 = vsel %vm1184, %v3314, %v3316
        %v3318 = vrot.slane %v3204, 4
        %v3319 = vrot.slane %v3205, 4
        %v3320 = vsel %vm1184, %v3318, %v3319
        %v3321 = vrot.slane %v3206, 4
        %v3322 = vsel %vm1184, %v3319, %v3321
        %v3323 = vrot.slane %v3207, 4
        %v3324 = vrot.slane %v3208, 4
        %v3325 = vsel %vm1184, %v3323, %v3324
        %v3326 = vrot.slane %v3209, 4
        %v3327 = vsel %vm1184, %v3324, %v3326
        %v3328 = vrot.slane %v3210, 4
        %v3329 = vrot.slane %v3211, 4
        %v3330 = vsel %vm1184, %v3328, %v3329
        %v3331 = vrot.slane %v3212, 4
        %v3332 = vsel %vm1184, %v3329, %v3331
        %v3333 = vrot.slane %v3213, 4
        %v3334 = vrot.slane %v3214, 4
        %v3335 = vsel %vm1184, %v3333, %v3334
        %v3336 = vrot.slane %v3215, 4
        %v3337 = vsel %vm1184, %v3334, %v3336
        %v3338 = vrot.slane %v3216, 4
        %v3339 = vrot.slane %v3217, 4
        %v3340 = vsel %vm1184, %v3338, %v3339
        %v3341 = vrot.slane %v3218, 4
        %v3342 = vsel %vm1184, %v3339, %v3341
        %v3343 = vrot.slane %v3219, 4
        %v3344 = vrot.slane %v3220, 4
        %v3345 = vsel %vm1184, %v3343, %v3344
        %v3346 = vrot.slane %v3221, 4
        %v3347 = vsel %vm1184, %v3344, %v3346
        %v3348 = vrot.slane %v3222, 4
        %v3349 = vrot.slane %v3223, 4
        %v3350 = vsel %vm1184, %v3348, %v3349
        %v3351 = vrot.slane %v3224, 4
        %v3352 = vsel %vm1184, %v3349, %v3351
        %v3385 = vadd.f32 %v3141, %v3275
        %v3386 = vadd.f32 %v3142, %v3277
        %v3387 = vadd.f32 %v3143, %v3280
        %v3388 = vadd.f32 %v3144, %v3282
        %v3389 = vadd.f32 %v3145, %v3285
        %v3390 = vadd.f32 %v3146, %v3287
        %v3391 = vadd.f32 %v3147, %v3290
        %v3392 = vadd.f32 %v3148, %v3292
        %v3393 = vadd.f32 %v3149, %v3295
        %v3394 = vadd.f32 %v3150, %v3297
        %v3395 = vadd.f32 %v3151, %v3300
        %v3396 = vadd.f32 %v3152, %v3302
        %v3397 = vadd.f32 %v3153, %v3305
        %v3398 = vadd.f32 %v3154, %v3307
        %v3399 = vadd.f32 %v3155, %v3310
        %v3400 = vadd.f32 %v3156, %v3312
        %v3401 = vadd.f32 %v3157, %v3315
        %v3402 = vadd.f32 %v3158, %v3317
        %v3403 = vadd.f32 %v3159, %v3320
        %v3404 = vadd.f32 %v3160, %v3322
        %v3405 = vadd.f32 %v3161, %v3325
        %v3406 = vadd.f32 %v3162, %v3327
        %v3407 = vadd.f32 %v3163, %v3330
        %v3408 = vadd.f32 %v3164, %v3332
        %v3409 = vadd.f32 %v3165, %v3335
        %v3410 = vadd.f32 %v3166, %v3337
        %v3411 = vadd.f32 %v3167, %v3340
        %v3412 = vadd.f32 %v3168, %v3342
        %v3413 = vadd.f32 %v3169, %v3345
        %v3414 = vadd.f32 %v3170, %v3347
        %v3415 = vadd.f32 %v3171, %v3350
        %v3416 = vadd.f32 %v3172, %v3352
        %v3417 = vlaneseq
        %v3418 = vshrl.u32 %v3417, 7
        %v3419 = vsub.s32 0, %v3418
        %v3420 = vrot.slane %v219, %v3419
        %v3421 = vmul.f32 %v230, %v3420
        %v3422 = vmul.f32 %v231, %v3420
        %v3423 = vmul.f32 %v233, %v3420
        %v3424 = vmul.f32 %v234, %v3420
        %v3425 = vmul.f32 %v236, %v3420
        %v3426 = vmul.f32 %v237, %v3420
        %v3427 = vmul.f32 %v239, %v3420
        %v3428 = vmul.f32 %v240, %v3420
        %v3429 = vmul.f32 %v242, %v3420
        %v3430 = vmul.f32 %v243, %v3420
        %v3431 = vmul.f32 %v245, %v3420
        %v3432 = vmul.f32 %v246, %v3420
        %v3433 = vmul.f32 %v248, %v3420
        %v3434 = vmul.f32 %v249, %v3420
        %v3435 = vmul.f32 %v251, %v3420
        %v3436 = vmul.f32 %v252, %v3420
        %v3437 = vmul.f32 %v254, %v3420
        %v3438 = vmul.f32 %v255, %v3420
        %v3439 = vmul.f32 %v257, %v3420
        %v3440 = vmul.f32 %v258, %v3420
        %v3441 = vmul.f32 %v260, %v3420
        %v3442 = vmul.f32 %v261, %v3420
        %v3443 = vmul.f32 %v263, %v3420
        %v3444 = vmul.f32 %v264, %v3420
        %v3445 = vmul.f32 %v266, %v3420
        %v3446 = vmul.f32 %v267, %v3420
        %v3447 = vmul.f32 %v269, %v3420
        %v3448 = vmul.f32 %v270, %v3420
        %v3449 = vmul.f32 %v272, %v3420
        %v3450 = vmul.f32 %v273, %v3420
        %v3451 = vmul.f32 %v275, %v3420
        %v3452 = vmul.f32 %v276, %v3420
        %v3453 = vadd.f32 %v3385, %v3421
        %v3454 = vadd.f32 %v3386, %v3422
        %v3455 = vadd.f32 %v3387, %v3423
        %v3456 = vadd.f32 %v3388, %v3424
        %v3457 = vadd.f32 %v3389, %v3425
        %v3458 = vadd.f32 %v3390, %v3426
        %v3459 = vadd.f32 %v3391, %v3427
        %v3460 = vadd.f32 %v3392, %v3428
        %v3461 = vadd.f32 %v3393, %v3429
        %v3462 = vadd.f32 %v3394, %v3430
        %v3463 = vadd.f32 %v3395, %v3431
        %v3464 = vadd.f32 %v3396, %v3432
        %v3465 = vadd.f32 %v3397, %v3433
        %v3466 = vadd.f32 %v3398, %v3434
        %v3467 = vadd.f32 %v3399, %v3435
        %v3468 = vadd.f32 %v3400, %v3436
        %v3469 = vadd.f32 %v3401, %v3437
        %v3470 = vadd.f32 %v3402, %v3438
        %v3471 = vadd.f32 %v3403, %v3439
        %v3472 = vadd.f32 %v3404, %v3440
        %v3473 = vadd.f32 %v3405, %v3441
        %v3474 = vadd.f32 %v3406, %v3442
        %v3475 = vadd.f32 %v3407, %v3443
        %v3476 = vadd.f32 %v3408, %v3444
        %v3477 = vadd.f32 %v3409, %v3445
        %v3478 = vadd.f32 %v3410, %v3446
        %v3479 = vadd.f32 %v3411, %v3447
        %v3480 = vadd.f32 %v3412, %v3448
        %v3481 = vadd.f32 %v3413, %v3449
        %v3482 = vadd.f32 %v3414, %v3450
        %v3483 = vadd.f32 %v3415, %v3451
        %v3484 = vadd.f32 %v3416, %v3452
        %v3485 = vlaneseq
        %v3486 = vshrl.u32 %v3485, 7
        %v3487 = vsub.s32 1, %v3486
        %v3488 = vrot.slane %v219, %v3487
        %v3489 = vmul.f32 %v230, %v3488
        %v3490 = vmul.f32 %v231, %v3488
        %v3491 = vmul.f32 %v232, %v3488
        %v3492 = vmul.f32 %v233, %v3488
        %v3493 = vmul.f32 %v234, %v3488
        %v3494 = vmul.f32 %v235, %v3488
        %v3495 = vmul.f32 %v236, %v3488
        %v3496 = vmul.f32 %v237, %v3488
        %v3497 = vmul.f32 %v238, %v3488
        %v3498 = vmul.f32 %v239, %v3488
        %v3499 = vmul.f32 %v240, %v3488
        %v3500 = vmul.f32 %v241, %v3488
        %v3501 = vmul.f32 %v242, %v3488
        %v3502 = vmul.f32 %v243, %v3488
        %v3503 = vmul.f32 %v244, %v3488
        %v3504 = vmul.f32 %v245, %v3488
        %v3505 = vmul.f32 %v246, %v3488
        %v3506 = vmul.f32 %v247, %v3488
        %v3507 = vmul.f32 %v248, %v3488
        %v3508 = vmul.f32 %v249, %v3488
        %v3509 = vmul.f32 %v250, %v3488
        %v3510 = vmul.f32 %v251, %v3488
        %v3511 = vmul.f32 %v252, %v3488
        %v3512 = vmul.f32 %v253, %v3488
        %v3513 = vmul.f32 %v254, %v3488
        %v3514 = vmul.f32 %v255, %v3488
        %v3515 = vmul.f32 %v256, %v3488
        %v3516 = vmul.f32 %v257, %v3488
        %v3517 = vmul.f32 %v258, %v3488
        %v3518 = vmul.f32 %v259, %v3488
        %v3519 = vmul.f32 %v260, %v3488
        %v3520 = vmul.f32 %v261, %v3488
        %v3521 = vmul.f32 %v262, %v3488
        %v3522 = vmul.f32 %v263, %v3488
        %v3523 = vmul.f32 %v264, %v3488
        %v3524 = vmul.f32 %v265, %v3488
        %v3525 = vmul.f32 %v266, %v3488
        %v3526 = vmul.f32 %v267, %v3488
        %v3527 = vmul.f32 %v268, %v3488
        %v3528 = vmul.f32 %v269, %v3488
        %v3529 = vmul.f32 %v270, %v3488
        %v3530 = vmul.f32 %v271, %v3488
        %v3531 = vmul.f32 %v272, %v3488
        %v3532 = vmul.f32 %v273, %v3488
        %v3533 = vmul.f32 %v274, %v3488
        %v3534 = vmul.f32 %v275, %v3488
        %v3535 = vmul.f32 %v276, %v3488
        %v3536 = vmul.f32 %v277, %v3488
        %v3585 = vrot.slane %v3489, 1
        %v3586 = vrot.slane %v3490, 1
        %v3587 = vsel %vm449, %v3585, %v3586
        %v3588 = vrot.slane %v3491, 1
        %v3589 = vsel %vm449, %v3586, %v3588
        %v3590 = vrot.slane %v3492, 1
        %v3591 = vrot.slane %v3493, 1
        %v3592 = vsel %vm449, %v3590, %v3591
        %v3593 = vrot.slane %v3494, 1
        %v3594 = vsel %vm449, %v3591, %v3593
        %v3595 = vrot.slane %v3495, 1
        %v3596 = vrot.slane %v3496, 1
        %v3597 = vsel %vm449, %v3595, %v3596
        %v3598 = vrot.slane %v3497, 1
        %v3599 = vsel %vm449, %v3596, %v3598
        %v3600 = vrot.slane %v3498, 1
        %v3601 = vrot.slane %v3499, 1
        %v3602 = vsel %vm449, %v3600, %v3601
        %v3603 = vrot.slane %v3500, 1
        %v3604 = vsel %vm449, %v3601, %v3603
        %v3605 = vrot.slane %v3501, 1
        %v3606 = vrot.slane %v3502, 1
        %v3607 = vsel %vm449, %v3605, %v3606
        %v3608 = vrot.slane %v3503, 1
        %v3609 = vsel %vm449, %v3606, %v3608
        %v3610 = vrot.slane %v3504, 1
        %v3611 = vrot.slane %v3505, 1
        %v3612 = vsel %vm449, %v3610, %v3611
        %v3613 = vrot.slane %v3506, 1
        %v3614 = vsel %vm449, %v3611, %v3613
        %v3615 = vrot.slane %v3507, 1
        %v3616 = vrot.slane %v3508, 1
        %v3617 = vsel %vm449, %v3615, %v3616
        %v3618 = vrot.slane %v3509, 1
        %v3619 = vsel %vm449, %v3616, %v3618
        %v3620 = vrot.slane %v3510, 1
        %v3621 = vrot.slane %v3511, 1
        %v3622 = vsel %vm449, %v3620, %v3621
        %v3623 = vrot.slane %v3512, 1
        %v3624 = vsel %vm449, %v3621, %v3623
        %v3625 = vrot.slane %v3513, 1
        %v3626 = vrot.slane %v3514, 1
        %v3627 = vsel %vm449, %v3625, %v3626
        %v3628 = vrot.slane %v3515, 1
        %v3629 = vsel %vm449, %v3626, %v3628
        %v3630 = vrot.slane %v3516, 1
        %v3631 = vrot.slane %v3517, 1
        %v3632 = vsel %vm449, %v3630, %v3631
        %v3633 = vrot.slane %v3518, 1
        %v3634 = vsel %vm449, %v3631, %v3633
        %v3635 = vrot.slane %v3519, 1
        %v3636 = vrot.slane %v3520, 1
        %v3637 = vsel %vm449, %v3635, %v3636
        %v3638 = vrot.slane %v3521, 1
        %v3639 = vsel %vm449, %v3636, %v3638
        %v3640 = vrot.slane %v3522, 1
        %v3641 = vrot.slane %v3523, 1
        %v3642 = vsel %vm449, %v3640, %v3641
        %v3643 = vrot.slane %v3524, 1
        %v3644 = vsel %vm449, %v3641, %v3643
        %v3645 = vrot.slane %v3525, 1
        %v3646 = vrot.slane %v3526, 1
        %v3647 = vsel %vm449, %v3645, %v3646
        %v3648 = vrot.slane %v3527, 1
        %v3649 = vsel %vm449, %v3646, %v3648
        %v3650 = vrot.slane %v3528, 1
        %v3651 = vrot.slane %v3529, 1
        %v3652 = vsel %vm449, %v3650, %v3651
        %v3653 = vrot.slane %v3530, 1
        %v3654 = vsel %vm449, %v3651, %v3653
        %v3655 = vrot.slane %v3531, 1
        %v3656 = vrot.slane %v3532, 1
        %v3657 = vsel %vm449, %v3655, %v3656
        %v3658 = vrot.slane %v3533, 1
        %v3659 = vsel %vm449, %v3656, %v3658
        %v3660 = vrot.slane %v3534, 1
        %v3661 = vrot.slane %v3535, 1
        %v3662 = vsel %vm449, %v3660, %v3661
        %v3663 = vrot.slane %v3536, 1
        %v3664 = vsel %vm449, %v3661, %v3663
        %v3697 = vadd.f32 %v3453, %v3587
        %v3698 = vadd.f32 %v3454, %v3589
        %v3699 = vadd.f32 %v3455, %v3592
        %v3700 = vadd.f32 %v3456, %v3594
        %v3701 = vadd.f32 %v3457, %v3597
        %v3702 = vadd.f32 %v3458, %v3599
        %v3703 = vadd.f32 %v3459, %v3602
        %v3704 = vadd.f32 %v3460, %v3604
        %v3705 = vadd.f32 %v3461, %v3607
        %v3706 = vadd.f32 %v3462, %v3609
        %v3707 = vadd.f32 %v3463, %v3612
        %v3708 = vadd.f32 %v3464, %v3614
        %v3709 = vadd.f32 %v3465, %v3617
        %v3710 = vadd.f32 %v3466, %v3619
        %v3711 = vadd.f32 %v3467, %v3622
        %v3712 = vadd.f32 %v3468, %v3624
        %v3713 = vadd.f32 %v3469, %v3627
        %v3714 = vadd.f32 %v3470, %v3629
        %v3715 = vadd.f32 %v3471, %v3632
        %v3716 = vadd.f32 %v3472, %v3634
        %v3717 = vadd.f32 %v3473, %v3637
        %v3718 = vadd.f32 %v3474, %v3639
        %v3719 = vadd.f32 %v3475, %v3642
        %v3720 = vadd.f32 %v3476, %v3644
        %v3721 = vadd.f32 %v3477, %v3647
        %v3722 = vadd.f32 %v3478, %v3649
        %v3723 = vadd.f32 %v3479, %v3652
        %v3724 = vadd.f32 %v3480, %v3654
        %v3725 = vadd.f32 %v3481, %v3657
        %v3726 = vadd.f32 %v3482, %v3659
        %v3727 = vadd.f32 %v3483, %v3662
        %v3728 = vadd.f32 %v3484, %v3664
        %v3729 = vlaneseq
        %v3730 = vshrl.u32 %v3729, 7
        %v3731 = vsub.s32 2, %v3730
        %v3732 = vrot.slane %v219, %v3731
        %v3733 = vmul.f32 %v230, %v3732
        %v3734 = vmul.f32 %v231, %v3732
        %v3735 = vmul.f32 %v232, %v3732
        %v3736 = vmul.f32 %v233, %v3732
        %v3737 = vmul.f32 %v234, %v3732
        %v3738 = vmul.f32 %v235, %v3732
        %v3739 = vmul.f32 %v236, %v3732
        %v3740 = vmul.f32 %v237, %v3732
        %v3741 = vmul.f32 %v238, %v3732
        %v3742 = vmul.f32 %v239, %v3732
        %v3743 = vmul.f32 %v240, %v3732
        %v3744 = vmul.f32 %v241, %v3732
        %v3745 = vmul.f32 %v242, %v3732
        %v3746 = vmul.f32 %v243, %v3732
        %v3747 = vmul.f32 %v244, %v3732
        %v3748 = vmul.f32 %v245, %v3732
        %v3749 = vmul.f32 %v246, %v3732
        %v3750 = vmul.f32 %v247, %v3732
        %v3751 = vmul.f32 %v248, %v3732
        %v3752 = vmul.f32 %v249, %v3732
        %v3753 = vmul.f32 %v250, %v3732
        %v3754 = vmul.f32 %v251, %v3732
        %v3755 = vmul.f32 %v252, %v3732
        %v3756 = vmul.f32 %v253, %v3732
        %v3757 = vmul.f32 %v254, %v3732
        %v3758 = vmul.f32 %v255, %v3732
        %v3759 = vmul.f32 %v256, %v3732
        %v3760 = vmul.f32 %v257, %v3732
        %v3761 = vmul.f32 %v258, %v3732
        %v3762 = vmul.f32 %v259, %v3732
        %v3763 = vmul.f32 %v260, %v3732
        %v3764 = vmul.f32 %v261, %v3732
        %v3765 = vmul.f32 %v262, %v3732
        %v3766 = vmul.f32 %v263, %v3732
        %v3767 = vmul.f32 %v264, %v3732
        %v3768 = vmul.f32 %v265, %v3732
        %v3769 = vmul.f32 %v266, %v3732
        %v3770 = vmul.f32 %v267, %v3732
        %v3771 = vmul.f32 %v268, %v3732
        %v3772 = vmul.f32 %v269, %v3732
        %v3773 = vmul.f32 %v270, %v3732
        %v3774 = vmul.f32 %v271, %v3732
        %v3775 = vmul.f32 %v272, %v3732
        %v3776 = vmul.f32 %v273, %v3732
        %v3777 = vmul.f32 %v274, %v3732
        %v3778 = vmul.f32 %v275, %v3732
        %v3779 = vmul.f32 %v276, %v3732
        %v3780 = vmul.f32 %v277, %v3732
        %v3829 = vrot.slane %v3733, 2
        %v3830 = vrot.slane %v3734, 2
        %v3831 = vsel %vm694, %v3829, %v3830
        %v3832 = vrot.slane %v3735, 2
        %v3833 = vsel %vm694, %v3830, %v3832
        %v3834 = vrot.slane %v3736, 2
        %v3835 = vrot.slane %v3737, 2
        %v3836 = vsel %vm694, %v3834, %v3835
        %v3837 = vrot.slane %v3738, 2
        %v3838 = vsel %vm694, %v3835, %v3837
        %v3839 = vrot.slane %v3739, 2
        %v3840 = vrot.slane %v3740, 2
        %v3841 = vsel %vm694, %v3839, %v3840
        %v3842 = vrot.slane %v3741, 2
        %v3843 = vsel %vm694, %v3840, %v3842
        %v3844 = vrot.slane %v3742, 2
        %v3845 = vrot.slane %v3743, 2
        %v3846 = vsel %vm694, %v3844, %v3845
        %v3847 = vrot.slane %v3744, 2
        %v3848 = vsel %vm694, %v3845, %v3847
        %v3849 = vrot.slane %v3745, 2
        %v3850 = vrot.slane %v3746, 2
        %v3851 = vsel %vm694, %v3849, %v3850
        %v3852 = vrot.slane %v3747, 2
        %v3853 = vsel %vm694, %v3850, %v3852
        %v3854 = vrot.slane %v3748, 2
        %v3855 = vrot.slane %v3749, 2
        %v3856 = vsel %vm694, %v3854, %v3855
        %v3857 = vrot.slane %v3750, 2
        %v3858 = vsel %vm694, %v3855, %v3857
        %v3859 = vrot.slane %v3751, 2
        %v3860 = vrot.slane %v3752, 2
        %v3861 = vsel %vm694, %v3859, %v3860
        %v3862 = vrot.slane %v3753, 2
        %v3863 = vsel %vm694, %v3860, %v3862
        %v3864 = vrot.slane %v3754, 2
        %v3865 = vrot.slane %v3755, 2
        %v3866 = vsel %vm694, %v3864, %v3865
        %v3867 = vrot.slane %v3756, 2
        %v3868 = vsel %vm694, %v3865, %v3867
        %v3869 = vrot.slane %v3757, 2
        %v3870 = vrot.slane %v3758, 2
        %v3871 = vsel %vm694, %v3869, %v3870
        %v3872 = vrot.slane %v3759, 2
        %v3873 = vsel %vm694, %v3870, %v3872
        %v3874 = vrot.slane %v3760, 2
        %v3875 = vrot.slane %v3761, 2
        %v3876 = vsel %vm694, %v3874, %v3875
        %v3877 = vrot.slane %v3762, 2
        %v3878 = vsel %vm694, %v3875, %v3877
        %v3879 = vrot.slane %v3763, 2
        %v3880 = vrot.slane %v3764, 2
        %v3881 = vsel %vm694, %v3879, %v3880
        %v3882 = vrot.slane %v3765, 2
        %v3883 = vsel %vm694, %v3880, %v3882
        %v3884 = vrot.slane %v3766, 2
        %v3885 = vrot.slane %v3767, 2
        %v3886 = vsel %vm694, %v3884, %v3885
        %v3887 = vrot.slane %v3768, 2
        %v3888 = vsel %vm694, %v3885, %v3887
        %v3889 = vrot.slane %v3769, 2
        %v3890 = vrot.slane %v3770, 2
        %v3891 = vsel %vm694, %v3889, %v3890
        %v3892 = vrot.slane %v3771, 2
        %v3893 = vsel %vm694, %v3890, %v3892
        %v3894 = vrot.slane %v3772, 2
        %v3895 = vrot.slane %v3773, 2
        %v3896 = vsel %vm694, %v3894, %v3895
        %v3897 = vrot.slane %v3774, 2
        %v3898 = vsel %vm694, %v3895, %v3897
        %v3899 = vrot.slane %v3775, 2
        %v3900 = vrot.slane %v3776, 2
        %v3901 = vsel %vm694, %v3899, %v3900
        %v3902 = vrot.slane %v3777, 2
        %v3903 = vsel %vm694, %v3900, %v3902
        %v3904 = vrot.slane %v3778, 2
        %v3905 = vrot.slane %v3779, 2
        %v3906 = vsel %vm694, %v3904, %v3905
        %v3907 = vrot.slane %v3780, 2
        %v3908 = vsel %vm694, %v3905, %v3907
        %v3941 = vadd.f32 %v3697, %v3831
        %v3942 = vadd.f32 %v3698, %v3833
        %v3943 = vadd.f32 %v3699, %v3836
        %v3944 = vadd.f32 %v3700, %v3838
        %v3945 = vadd.f32 %v3701, %v3841
        %v3946 = vadd.f32 %v3702, %v3843
        %v3947 = vadd.f32 %v3703, %v3846
        %v3948 = vadd.f32 %v3704, %v3848
        %v3949 = vadd.f32 %v3705, %v3851
        %v3950 = vadd.f32 %v3706, %v3853
        %v3951 = vadd.f32 %v3707, %v3856
        %v3952 = vadd.f32 %v3708, %v3858
        %v3953 = vadd.f32 %v3709, %v3861
        %v3954 = vadd.f32 %v3710, %v3863
        %v3955 = vadd.f32 %v3711, %v3866
        %v3956 = vadd.f32 %v3712, %v3868
        %v3957 = vadd.f32 %v3713, %v3871
        %v3958 = vadd.f32 %v3714, %v3873
        %v3959 = vadd.f32 %v3715, %v3876
        %v3960 = vadd.f32 %v3716, %v3878
        %v3961 = vadd.f32 %v3717, %v3881
        %v3962 = vadd.f32 %v3718, %v3883
        %v3963 = vadd.f32 %v3719, %v3886
        %v3964 = vadd.f32 %v3720, %v3888
        %v3965 = vadd.f32 %v3721, %v3891
        %v3966 = vadd.f32 %v3722, %v3893
        %v3967 = vadd.f32 %v3723, %v3896
        %v3968 = vadd.f32 %v3724, %v3898
        %v3969 = vadd.f32 %v3725, %v3901
        %v3970 = vadd.f32 %v3726, %v3903
        %v3971 = vadd.f32 %v3727, %v3906
        %v3972 = vadd.f32 %v3728, %v3908
        %v3973 = vlaneseq
        %v3974 = vshrl.u32 %v3973, 7
        %v3975 = vsub.s32 3, %v3974
        %v3976 = vrot.slane %v219, %v3975
        %v3977 = vmul.f32 %v230, %v3976
        %v3978 = vmul.f32 %v231, %v3976
        %v3979 = vmul.f32 %v232, %v3976
        %v3980 = vmul.f32 %v233, %v3976
        %v3981 = vmul.f32 %v234, %v3976
        %v3982 = vmul.f32 %v235, %v3976
        %v3983 = vmul.f32 %v236, %v3976
        %v3984 = vmul.f32 %v237, %v3976
        %v3985 = vmul.f32 %v238, %v3976
        %v3986 = vmul.f32 %v239, %v3976
        %v3987 = vmul.f32 %v240, %v3976
        %v3988 = vmul.f32 %v241, %v3976
        %v3989 = vmul.f32 %v242, %v3976
        %v3990 = vmul.f32 %v243, %v3976
        %v3991 = vmul.f32 %v244, %v3976
        %v3992 = vmul.f32 %v245, %v3976
        %v3993 = vmul.f32 %v246, %v3976
        %v3994 = vmul.f32 %v247, %v3976
        %v3995 = vmul.f32 %v248, %v3976
        %v3996 = vmul.f32 %v249, %v3976
        %v3997 = vmul.f32 %v250, %v3976
        %v3998 = vmul.f32 %v251, %v3976
        %v3999 = vmul.f32 %v252, %v3976
        %v4000 = vmul.f32 %v253, %v3976
        %v4001 = vmul.f32 %v254, %v3976
        %v4002 = vmul.f32 %v255, %v3976
        %v4003 = vmul.f32 %v256, %v3976
        %v4004 = vmul.f32 %v257, %v3976
        %v4005 = vmul.f32 %v258, %v3976
        %v4006 = vmul.f32 %v259, %v3976
        %v4007 = vmul.f32 %v260, %v3976
        %v4008 = vmul.f32 %v261, %v3976
        %v4009 = vmul.f32 %v262, %v3976
        %v4010 = vmul.f32 %v263, %v3976
        %v4011 = vmul.f32 %v264, %v3976
        %v4012 = vmul.f32 %v265, %v3976
        %v4013 = vmul.f32 %v266, %v3976
        %v4014 = vmul.f32 %v267, %v3976
        %v4015 = vmul.f32 %v268, %v3976
        %v4016 = vmul.f32 %v269, %v3976
        %v4017 = vmul.f32 %v270, %v3976
        %v4018 = vmul.f32 %v271, %v3976
        %v4019 = vmul.f32 %v272, %v3976
        %v4020 = vmul.f32 %v273, %v3976
        %v4021 = vmul.f32 %v274, %v3976
        %v4022 = vmul.f32 %v275, %v3976
        %v4023 = vmul.f32 %v276, %v3976
        %v4024 = vmul.f32 %v277, %v3976
        %v4073 = vrot.slane %v3977, 3
        %v4074 = vrot.slane %v3978, 3
        %v4075 = vsel %vm939, %v4073, %v4074
        %v4076 = vrot.slane %v3979, 3
        %v4077 = vsel %vm939, %v4074, %v4076
        %v4078 = vrot.slane %v3980, 3
        %v4079 = vrot.slane %v3981, 3
        %v4080 = vsel %vm939, %v4078, %v4079
        %v4081 = vrot.slane %v3982, 3
        %v4082 = vsel %vm939, %v4079, %v4081
        %v4083 = vrot.slane %v3983, 3
        %v4084 = vrot.slane %v3984, 3
        %v4085 = vsel %vm939, %v4083, %v4084
        %v4086 = vrot.slane %v3985, 3
        %v4087 = vsel %vm939, %v4084, %v4086
        %v4088 = vrot.slane %v3986, 3
        %v4089 = vrot.slane %v3987, 3
        %v4090 = vsel %vm939, %v4088, %v4089
        %v4091 = vrot.slane %v3988, 3
        %v4092 = vsel %vm939, %v4089, %v4091
        %v4093 = vrot.slane %v3989, 3
        %v4094 = vrot.slane %v3990, 3
        %v4095 = vsel %vm939, %v4093, %v4094
        %v4096 = vrot.slane %v3991, 3
        %v4097 = vsel %vm939, %v4094, %v4096
        %v4098 = vrot.slane %v3992, 3
        %v4099 = vrot.slane %v3993, 3
        %v4100 = vsel %vm939, %v4098, %v4099
        %v4101 = vrot.slane %v3994, 3
        %v4102 = vsel %vm939, %v4099, %v4101
        %v4103 = vrot.slane %v3995, 3
        %v4104 = vrot.slane %v3996, 3
        %v4105 = vsel %vm939, %v4103, %v4104
        %v4106 = vrot.slane %v3997, 3
        %v4107 = vsel %vm939, %v4104, %v4106
        %v4108 = vrot.slane %v3998, 3
        %v4109 = vrot.slane %v3999, 3
        %v4110 = vsel %vm939, %v4108, %v4109
        %v4111 = vrot.slane %v4000, 3
        %v4112 = vsel %vm939, %v4109, %v4111
        %v4113 = vrot.slane %v4001, 3
        %v4114 = vrot.slane %v4002, 3
        %v4115 = vsel %vm939, %v4113, %v4114
        %v4116 = vrot.slane %v4003, 3
        %v4117 = vsel %vm939, %v4114, %v4116
        %v4118 = vrot.slane %v4004, 3
        %v4119 = vrot.slane %v4005, 3
        %v4120 = vsel %vm939, %v4118, %v4119
        %v4121 = vrot.slane %v4006, 3
        %v4122 = vsel %vm939, %v4119, %v4121
        %v4123 = vrot.slane %v4007, 3
        %v4124 = vrot.slane %v4008, 3
        %v4125 = vsel %vm939, %v4123, %v4124
        %v4126 = vrot.slane %v4009, 3
        %v4127 = vsel %vm939, %v4124, %v4126
        %v4128 = vrot.slane %v4010, 3
        %v4129 = vrot.slane %v4011, 3
        %v4130 = vsel %vm939, %v4128, %v4129
        %v4131 = vrot.slane %v4012, 3
        %v4132 = vsel %vm939, %v4129, %v4131
        %v4133 = vrot.slane %v4013, 3
        %v4134 = vrot.slane %v4014, 3
        %v4135 = vsel %vm939, %v4133, %v4134
        %v4136 = vrot.slane %v4015, 3
        %v4137 = vsel %vm939, %v4134, %v4136
        %v4138 = vrot.slane %v4016, 3
        %v4139 = vrot.slane %v4017, 3
        %v4140 = vsel %vm939, %v4138, %v4139
        %v4141 = vrot.slane %v4018, 3
        %v4142 = vsel %vm939, %v4139, %v4141
        %v4143 = vrot.slane %v4019, 3
        %v4144 = vrot.slane %v4020, 3
        %v4145 = vsel %vm939, %v4143, %v4144
        %v4146 = vrot.slane %v4021, 3
        %v4147 = vsel %vm939, %v4144, %v4146
        %v4148 = vrot.slane %v4022, 3
        %v4149 = vrot.slane %v4023, 3
        %v4150 = vsel %vm939, %v4148, %v4149
        %v4151 = vrot.slane %v4024, 3
        %v4152 = vsel %vm939, %v4149, %v4151
        %v4185 = vadd.f32 %v3941, %v4075
        %v4186 = vadd.f32 %v3942, %v4077
        %v4187 = vadd.f32 %v3943, %v4080
        %v4188 = vadd.f32 %v3944, %v4082
        %v4189 = vadd.f32 %v3945, %v4085
        %v4190 = vadd.f32 %v3946, %v4087
        %v4191 = vadd.f32 %v3947, %v4090
        %v4192 = vadd.f32 %v3948, %v4092
        %v4193 = vadd.f32 %v3949, %v4095
        %v4194 = vadd.f32 %v3950, %v4097
        %v4195 = vadd.f32 %v3951, %v4100
        %v4196 = vadd.f32 %v3952, %v4102
        %v4197 = vadd.f32 %v3953, %v4105
        %v4198 = vadd.f32 %v3954, %v4107
        %v4199 = vadd.f32 %v3955, %v4110
        %v4200 = vadd.f32 %v3956, %v4112
        %v4201 = vadd.f32 %v3957, %v4115
        %v4202 = vadd.f32 %v3958, %v4117
        %v4203 = vadd.f32 %v3959, %v4120
        %v4204 = vadd.f32 %v3960, %v4122
        %v4205 = vadd.f32 %v3961, %v4125
        %v4206 = vadd.f32 %v3962, %v4127
        %v4207 = vadd.f32 %v3963, %v4130
        %v4208 = vadd.f32 %v3964, %v4132
        %v4209 = vadd.f32 %v3965, %v4135
        %v4210 = vadd.f32 %v3966, %v4137
        %v4211 = vadd.f32 %v3967, %v4140
        %v4212 = vadd.f32 %v3968, %v4142
        %v4213 = vadd.f32 %v3969, %v4145
        %v4214 = vadd.f32 %v3970, %v4147
        %v4215 = vadd.f32 %v3971, %v4150
        %v4216 = vadd.f32 %v3972, %v4152
        %v4217 = vlaneseq
        %v4218 = vshrl.u32 %v4217, 7
        %v4219 = vsub.s32 4, %v4218
        %v4220 = vrot.slane %v219, %v4219
        %v4221 = vmul.f32 %v230, %v4220
        %v4222 = vmul.f32 %v231, %v4220
        %v4223 = vmul.f32 %v232, %v4220
        %v4224 = vmul.f32 %v233, %v4220
        %v4225 = vmul.f32 %v234, %v4220
        %v4226 = vmul.f32 %v235, %v4220
        %v4227 = vmul.f32 %v236, %v4220
        %v4228 = vmul.f32 %v237, %v4220
        %v4229 = vmul.f32 %v238, %v4220
        %v4230 = vmul.f32 %v239, %v4220
        %v4231 = vmul.f32 %v240, %v4220
        %v4232 = vmul.f32 %v241, %v4220
        %v4233 = vmul.f32 %v242, %v4220
        %v4234 = vmul.f32 %v243, %v4220
        %v4235 = vmul.f32 %v244, %v4220
        %v4236 = vmul.f32 %v245, %v4220
        %v4237 = vmul.f32 %v246, %v4220
        %v4238 = vmul.f32 %v247, %v4220
        %v4239 = vmul.f32 %v248, %v4220
        %v4240 = vmul.f32 %v249, %v4220
        %v4241 = vmul.f32 %v250, %v4220
        %v4242 = vmul.f32 %v251, %v4220
        %v4243 = vmul.f32 %v252, %v4220
        %v4244 = vmul.f32 %v253, %v4220
        %v4245 = vmul.f32 %v254, %v4220
        %v4246 = vmul.f32 %v255, %v4220
        %v4247 = vmul.f32 %v256, %v4220
        %v4248 = vmul.f32 %v257, %v4220
        %v4249 = vmul.f32 %v258, %v4220
        %v4250 = vmul.f32 %v259, %v4220
        %v4251 = vmul.f32 %v260, %v4220
        %v4252 = vmul.f32 %v261, %v4220
        %v4253 = vmul.f32 %v262, %v4220
        %v4254 = vmul.f32 %v263, %v4220
        %v4255 = vmul.f32 %v264, %v4220
        %v4256 = vmul.f32 %v265, %v4220
        %v4257 = vmul.f32 %v266, %v4220
        %v4258 = vmul.f32 %v267, %v4220
        %v4259 = vmul.f32 %v268, %v4220
        %v4260 = vmul.f32 %v269, %v4220
        %v4261 = vmul.f32 %v270, %v4220
        %v4262 = vmul.f32 %v271, %v4220
        %v4263 = vmul.f32 %v272, %v4220
        %v4264 = vmul.f32 %v273, %v4220
        %v4265 = vmul.f32 %v274, %v4220
        %v4266 = vmul.f32 %v275, %v4220
        %v4267 = vmul.f32 %v276, %v4220
        %v4268 = vmul.f32 %v277, %v4220
        %v4317 = vrot.slane %v4221, 4
        %v4318 = vrot.slane %v4222, 4
        %v4319 = vsel %vm1184, %v4317, %v4318
        %v4320 = vrot.slane %v4223, 4
        %v4321 = vsel %vm1184, %v4318, %v4320
        %v4322 = vrot.slane %v4224, 4
        %v4323 = vrot.slane %v4225, 4
        %v4324 = vsel %vm1184, %v4322, %v4323
        %v4325 = vrot.slane %v4226, 4
        %v4326 = vsel %vm1184, %v4323, %v4325
        %v4327 = vrot.slane %v4227, 4
        %v4328 = vrot.slane %v4228, 4
        %v4329 = vsel %vm1184, %v4327, %v4328
        %v4330 = vrot.slane %v4229, 4
        %v4331 = vsel %vm1184, %v4328, %v4330
        %v4332 = vrot.slane %v4230, 4
        %v4333 = vrot.slane %v4231, 4
        %v4334 = vsel %vm1184, %v4332, %v4333
        %v4335 = vrot.slane %v4232, 4
        %v4336 = vsel %vm1184, %v4333, %v4335
        %v4337 = vrot.slane %v4233, 4
        %v4338 = vrot.slane %v4234, 4
        %v4339 = vsel %vm1184, %v4337, %v4338
        %v4340 = vrot.slane %v4235, 4
        %v4341 = vsel %vm1184, %v4338, %v4340
        %v4342 = vrot.slane %v4236, 4
        %v4343 = vrot.slane %v4237, 4
        %v4344 = vsel %vm1184, %v4342, %v4343
        %v4345 = vrot.slane %v4238, 4
        %v4346 = vsel %vm1184, %v4343, %v4345
        %v4347 = vrot.slane %v4239, 4
        %v4348 = vrot.slane %v4240, 4
        %v4349 = vsel %vm1184, %v4347, %v4348
        %v4350 = vrot.slane %v4241, 4
        %v4351 = vsel %vm1184, %v4348, %v4350
        %v4352 = vrot.slane %v4242, 4
        %v4353 = vrot.slane %v4243, 4
        %v4354 = vsel %vm1184, %v4352, %v4353
        %v4355 = vrot.slane %v4244, 4
        %v4356 = vsel %vm1184, %v4353, %v4355
        %v4357 = vrot.slane %v4245, 4
        %v4358 = vrot.slane %v4246, 4
        %v4359 = vsel %vm1184, %v4357, %v4358
        %v4360 = vrot.slane %v4247, 4
        %v4361 = vsel %vm1184, %v4358, %v4360
        %v4362 = vrot.slane %v4248, 4
        %v4363 = vrot.slane %v4249, 4
        %v4364 = vsel %vm1184, %v4362, %v4363
        %v4365 = vrot.slane %v4250, 4
        %v4366 = vsel %vm1184, %v4363, %v4365
        %v4367 = vrot.slane %v4251, 4
        %v4368 = vrot.slane %v4252, 4
        %v4369 = vsel %vm1184, %v4367, %v4368
        %v4370 = vrot.slane %v4253, 4
        %v4371 = vsel %vm1184, %v4368, %v4370
        %v4372 = vrot.slane %v4254, 4
        %v4373 = vrot.slane %v4255, 4
        %v4374 = vsel %vm1184, %v4372, %v4373
        %v4375 = vrot.slane %v4256, 4
        %v4376 = vsel %vm1184, %v4373, %v4375
        %v4377 = vrot.slane %v4257, 4
        %v4378 = vrot.slane %v4258, 4
        %v4379 = vsel %vm1184, %v4377, %v4378
        %v4380 = vrot.slane %v4259, 4
        %v4381 = vsel %vm1184, %v4378, %v4380
        %v4382 = vrot.slane %v4260, 4
        %v4383 = vrot.slane %v4261, 4
        %v4384 = vsel %vm1184, %v4382, %v4383
        %v4385 = vrot.slane %v4262, 4
        %v4386 = vsel %vm1184, %v4383, %v4385
        %v4387 = vrot.slane %v4263, 4
        %v4388 = vrot.slane %v4264, 4
        %v4389 = vsel %vm1184, %v4387, %v4388
        %v4390 = vrot.slane %v4265, 4
        %v4391 = vsel %vm1184, %v4388, %v4390
        %v4392 = vrot.slane %v4266, 4
        %v4393 = vrot.slane %v4267, 4
        %v4394 = vsel %vm1184, %v4392, %v4393
        %v4395 = vrot.slane %v4268, 4
        %v4396 = vsel %vm1184, %v4393, %v4395
        %v4429 = vadd.f32 %v4185, %v4319
        %v4430 = vadd.f32 %v4186, %v4321
        %v4431 = vadd.f32 %v4187, %v4324
        %v4432 = vadd.f32 %v4188, %v4326
        %v4433 = vadd.f32 %v4189, %v4329
        %v4434 = vadd.f32 %v4190, %v4331
        %v4435 = vadd.f32 %v4191, %v4334
        %v4436 = vadd.f32 %v4192, %v4336
        %v4437 = vadd.f32 %v4193, %v4339
        %v4438 = vadd.f32 %v4194, %v4341
        %v4439 = vadd.f32 %v4195, %v4344
        %v4440 = vadd.f32 %v4196, %v4346
        %v4441 = vadd.f32 %v4197, %v4349
        %v4442 = vadd.f32 %v4198, %v4351
        %v4443 = vadd.f32 %v4199, %v4354
        %v4444 = vadd.f32 %v4200, %v4356
        %v4445 = vadd.f32 %v4201, %v4359
        %v4446 = vadd.f32 %v4202, %v4361
        %v4447 = vadd.f32 %v4203, %v4364
        %v4448 = vadd.f32 %v4204, %v4366
        %v4449 = vadd.f32 %v4205, %v4369
        %v4450 = vadd.f32 %v4206, %v4371
        %v4451 = vadd.f32 %v4207, %v4374
        %v4452 = vadd.f32 %v4208, %v4376
        %v4453 = vadd.f32 %v4209, %v4379
        %v4454 = vadd.f32 %v4210, %v4381
        %v4455 = vadd.f32 %v4211, %v4384
        %v4456 = vadd.f32 %v4212, %v4386
        %v4457 = vadd.f32 %v4213, %v4389
        %v4458 = vadd.f32 %v4214, %v4391
        %v4459 = vadd.f32 %v4215, %v4394
        %v4460 = vadd.f32 %v4216, %v4396
        %v4461 = vlaneseq
        %v4462 = vshrl.u32 %v4461, 7
        %v4463 = vsub.s32 0, %v4462
        %v4464 = vrot.slane %v220, %v4463
        %v4465 = vmul.f32 %v233, %v4464
        %v4466 = vmul.f32 %v234, %v4464
        %v4467 = vmul.f32 %v236, %v4464
        %v4468 = vmul.f32 %v237, %v4464
        %v4469 = vmul.f32 %v239, %v4464
        %v4470 = vmul.f32 %v240, %v4464
        %v4471 = vmul.f32 %v242, %v4464
        %v4472 = vmul.f32 %v243, %v4464
        %v4473 = vmul.f32 %v245, %v4464
        %v4474 = vmul.f32 %v246, %v4464
        %v4475 = vmul.f32 %v248, %v4464
        %v4476 = vmul.f32 %v249, %v4464
        %v4477 = vmul.f32 %v251, %v4464
        %v4478 = vmul.f32 %v252, %v4464
        %v4479 = vmul.f32 %v254, %v4464
        %v4480 = vmul.f32 %v255, %v4464
        %v4481 = vmul.f32 %v257, %v4464
        %v4482 = vmul.f32 %v258, %v4464
        %v4483 = vmul.f32 %v260, %v4464
        %v4484 = vmul.f32 %v261, %v4464
        %v4485 = vmul.f32 %v263, %v4464
        %v4486 = vmul.f32 %v264, %v4464
        %v4487 = vmul.f32 %v266, %v4464
        %v4488 = vmul.f32 %v267, %v4464
        %v4489 = vmul.f32 %v269, %v4464
        %v4490 = vmul.f32 %v270, %v4464
        %v4491 = vmul.f32 %v272, %v4464
        %v4492 = vmul.f32 %v273, %v4464
        %v4493 = vmul.f32 %v275, %v4464
        %v4494 = vmul.f32 %v276, %v4464
        %v4495 = vmul.f32 %v278, %v4464
        %v4496 = vmul.f32 %v279, %v4464
        %v4497 = vadd.f32 %v4429, %v4465
        %v4498 = vadd.f32 %v4430, %v4466
        %v4499 = vadd.f32 %v4431, %v4467
        %v4500 = vadd.f32 %v4432, %v4468
        %v4501 = vadd.f32 %v4433, %v4469
        %v4502 = vadd.f32 %v4434, %v4470
        %v4503 = vadd.f32 %v4435, %v4471
        %v4504 = vadd.f32 %v4436, %v4472
        %v4505 = vadd.f32 %v4437, %v4473
        %v4506 = vadd.f32 %v4438, %v4474
        %v4507 = vadd.f32 %v4439, %v4475
        %v4508 = vadd.f32 %v4440, %v4476
        %v4509 = vadd.f32 %v4441, %v4477
        %v4510 = vadd.f32 %v4442, %v4478
        %v4511 = vadd.f32 %v4443, %v4479
        %v4512 = vadd.f32 %v4444, %v4480
        %v4513 = vadd.f32 %v4445, %v4481
        %v4514 = vadd.f32 %v4446, %v4482
        %v4515 = vadd.f32 %v4447, %v4483
        %v4516 = vadd.f32 %v4448, %v4484
        %v4517 = vadd.f32 %v4449, %v4485
        %v4518 = vadd.f32 %v4450, %v4486
        %v4519 = vadd.f32 %v4451, %v4487
        %v4520 = vadd.f32 %v4452, %v4488
        %v4521 = vadd.f32 %v4453, %v4489
        %v4522 = vadd.f32 %v4454, %v4490
        %v4523 = vadd.f32 %v4455, %v4491
        %v4524 = vadd.f32 %v4456, %v4492
        %v4525 = vadd.f32 %v4457, %v4493
        %v4526 = vadd.f32 %v4458, %v4494
        %v4527 = vadd.f32 %v4459, %v4495
        %v4528 = vadd.f32 %v4460, %v4496
        %v4529 = vlaneseq
        %v4530 = vshrl.u32 %v4529, 7
        %v4531 = vsub.s32 1, %v4530
        %v4532 = vrot.slane %v220, %v4531
        %v4533 = vmul.f32 %v233, %v4532
        %v4534 = vmul.f32 %v234, %v4532
        %v4535 = vmul.f32 %v235, %v4532
        %v4536 = vmul.f32 %v236, %v4532
        %v4537 = vmul.f32 %v237, %v4532
        %v4538 = vmul.f32 %v238, %v4532
        %v4539 = vmul.f32 %v239, %v4532
        %v4540 = vmul.f32 %v240, %v4532
        %v4541 = vmul.f32 %v241, %v4532
        %v4542 = vmul.f32 %v242, %v4532
        %v4543 = vmul.f32 %v243, %v4532
        %v4544 = vmul.f32 %v244, %v4532
        %v4545 = vmul.f32 %v245, %v4532
        %v4546 = vmul.f32 %v246, %v4532
        %v4547 = vmul.f32 %v247, %v4532
        %v4548 = vmul.f32 %v248, %v4532
        %v4549 = vmul.f32 %v249, %v4532
        %v4550 = vmul.f32 %v250, %v4532
        %v4551 = vmul.f32 %v251, %v4532
        %v4552 = vmul.f32 %v252, %v4532
        %v4553 = vmul.f32 %v253, %v4532
        %v4554 = vmul.f32 %v254, %v4532
        %v4555 = vmul.f32 %v255, %v4532
        %v4556 = vmul.f32 %v256, %v4532
        %v4557 = vmul.f32 %v257, %v4532
        %v4558 = vmul.f32 %v258, %v4532
        %v4559 = vmul.f32 %v259, %v4532
        %v4560 = vmul.f32 %v260, %v4532
        %v4561 = vmul.f32 %v261, %v4532
        %v4562 = vmul.f32 %v262, %v4532
        %v4563 = vmul.f32 %v263, %v4532
        %v4564 = vmul.f32 %v264, %v4532
        %v4565 = vmul.f32 %v265, %v4532
        %v4566 = vmul.f32 %v266, %v4532
        %v4567 = vmul.f32 %v267, %v4532
        %v4568 = vmul.f32 %v268, %v4532
        %v4569 = vmul.f32 %v269, %v4532
        %v4570 = vmul.f32 %v270, %v4532
        %v4571 = vmul.f32 %v271, %v4532
        %v4572 = vmul.f32 %v272, %v4532
        %v4573 = vmul.f32 %v273, %v4532
        %v4574 = vmul.f32 %v274, %v4532
        %v4575 = vmul.f32 %v275, %v4532
        %v4576 = vmul.f32 %v276, %v4532
        %v4577 = vmul.f32 %v277, %v4532
        %v4578 = vmul.f32 %v278, %v4532
        %v4579 = vmul.f32 %v279, %v4532
        %v4580 = vmul.f32 %v280, %v4532
        %v4629 = vrot.slane %v4533, 1
        %v4630 = vrot.slane %v4534, 1
        %v4631 = vsel %vm449, %v4629, %v4630
        %v4632 = vrot.slane %v4535, 1
        %v4633 = vsel %vm449, %v4630, %v4632
        %v4634 = vrot.slane %v4536, 1
        %v4635 = vrot.slane %v4537, 1
        %v4636 = vsel %vm449, %v4634, %v4635
        %v4637 = vrot.slane %v4538, 1
        %v4638 = vsel %vm449, %v4635, %v4637
        %v4639 = vrot.slane %v4539, 1
        %v4640 = vrot.slane %v4540, 1
        %v4641 = vsel %vm449, %v4639, %v4640
        %v4642 = vrot.slane %v4541, 1
        %v4643 = vsel %vm449, %v4640, %v4642
        %v4644 = vrot.slane %v4542, 1
        %v4645 = vrot.slane %v4543, 1
        %v4646 = vsel %vm449, %v4644, %v4645
        %v4647 = vrot.slane %v4544, 1
        %v4648 = vsel %vm449, %v4645, %v4647
        %v4649 = vrot.slane %v4545, 1
        %v4650 = vrot.slane %v4546, 1
        %v4651 = vsel %vm449, %v4649, %v4650
        %v4652 = vrot.slane %v4547, 1
        %v4653 = vsel %vm449, %v4650, %v4652
        %v4654 = vrot.slane %v4548, 1
        %v4655 = vrot.slane %v4549, 1
        %v4656 = vsel %vm449, %v4654, %v4655
        %v4657 = vrot.slane %v4550, 1
        %v4658 = vsel %vm449, %v4655, %v4657
        %v4659 = vrot.slane %v4551, 1
        %v4660 = vrot.slane %v4552, 1
        %v4661 = vsel %vm449, %v4659, %v4660
        %v4662 = vrot.slane %v4553, 1
        %v4663 = vsel %vm449, %v4660, %v4662
        %v4664 = vrot.slane %v4554, 1
        %v4665 = vrot.slane %v4555, 1
        %v4666 = vsel %vm449, %v4664, %v4665
        %v4667 = vrot.slane %v4556, 1
        %v4668 = vsel %vm449, %v4665, %v4667
        %v4669 = vrot.slane %v4557, 1
        %v4670 = vrot.slane %v4558, 1
        %v4671 = vsel %vm449, %v4669, %v4670
        %v4672 = vrot.slane %v4559, 1
        %v4673 = vsel %vm449, %v4670, %v4672
        %v4674 = vrot.slane %v4560, 1
        %v4675 = vrot.slane %v4561, 1
        %v4676 = vsel %vm449, %v4674, %v4675
        %v4677 = vrot.slane %v4562, 1
        %v4678 = vsel %vm449, %v4675, %v4677
        %v4679 = vrot.slane %v4563, 1
        %v4680 = vrot.slane %v4564, 1
        %v4681 = vsel %vm449, %v4679, %v4680
        %v4682 = vrot.slane %v4565, 1
        %v4683 = vsel %vm449, %v4680, %v4682
        %v4684 = vrot.slane %v4566, 1
        %v4685 = vrot.slane %v4567, 1
        %v4686 = vsel %vm449, %v4684, %v4685
        %v4687 = vrot.slane %v4568, 1
        %v4688 = vsel %vm449, %v4685, %v4687
        %v4689 = vrot.slane %v4569, 1
        %v4690 = vrot.slane %v4570, 1
        %v4691 = vsel %vm449, %v4689, %v4690
        %v4692 = vrot.slane %v4571, 1
        %v4693 = vsel %vm449, %v4690, %v4692
        %v4694 = vrot.slane %v4572, 1
        %v4695 = vrot.slane %v4573, 1
        %v4696 = vsel %vm449, %v4694, %v4695
        %v4697 = vrot.slane %v4574, 1
        %v4698 = vsel %vm449, %v4695, %v4697
        %v4699 = vrot.slane %v4575, 1
        %v4700 = vrot.slane %v4576, 1
        %v4701 = vsel %vm449, %v4699, %v4700
        %v4702 = vrot.slane %v4577, 1
        %v4703 = vsel %vm449, %v4700, %v4702
        %v4704 = vrot.slane %v4578, 1
        %v4705 = vrot.slane %v4579, 1
        %v4706 = vsel %vm449, %v4704, %v4705
        %v4707 = vrot.slane %v4580, 1
        %v4708 = vsel %vm449, %v4705, %v4707
        %v4741 = vadd.f32 %v4497, %v4631
        %v4742 = vadd.f32 %v4498, %v4633
        %v4743 = vadd.f32 %v4499, %v4636
        %v4744 = vadd.f32 %v4500, %v4638
        %v4745 = vadd.f32 %v4501, %v4641
        %v4746 = vadd.f32 %v4502, %v4643
        %v4747 = vadd.f32 %v4503, %v4646
        %v4748 = vadd.f32 %v4504, %v4648
        %v4749 = vadd.f32 %v4505, %v4651
        %v4750 = vadd.f32 %v4506, %v4653
        %v4751 = vadd.f32 %v4507, %v4656
        %v4752 = vadd.f32 %v4508, %v4658
        %v4753 = vadd.f32 %v4509, %v4661
        %v4754 = vadd.f32 %v4510, %v4663
        %v4755 = vadd.f32 %v4511, %v4666
        %v4756 = vadd.f32 %v4512, %v4668
        %v4757 = vadd.f32 %v4513, %v4671
        %v4758 = vadd.f32 %v4514, %v4673
        %v4759 = vadd.f32 %v4515, %v4676
        %v4760 = vadd.f32 %v4516, %v4678
        %v4761 = vadd.f32 %v4517, %v4681
        %v4762 = vadd.f32 %v4518, %v4683
        %v4763 = vadd.f32 %v4519, %v4686
        %v4764 = vadd.f32 %v4520, %v4688
        %v4765 = vadd.f32 %v4521, %v4691
        %v4766 = vadd.f32 %v4522, %v4693
        %v4767 = vadd.f32 %v4523, %v4696
        %v4768 = vadd.f32 %v4524, %v4698
        %v4769 = vadd.f32 %v4525, %v4701
        %v4770 = vadd.f32 %v4526, %v4703
        %v4771 = vadd.f32 %v4527, %v4706
        %v4772 = vadd.f32 %v4528, %v4708
        %v4773 = vlaneseq
        %v4774 = vshrl.u32 %v4773, 7
        %v4775 = vsub.s32 2, %v4774
        %v4776 = vrot.slane %v220, %v4775
        %v4777 = vmul.f32 %v233, %v4776
        %v4778 = vmul.f32 %v234, %v4776
        %v4779 = vmul.f32 %v235, %v4776
        %v4780 = vmul.f32 %v236, %v4776
        %v4781 = vmul.f32 %v237, %v4776
        %v4782 = vmul.f32 %v238, %v4776
        %v4783 = vmul.f32 %v239, %v4776
        %v4784 = vmul.f32 %v240, %v4776
        %v4785 = vmul.f32 %v241, %v4776
        %v4786 = vmul.f32 %v242, %v4776
        %v4787 = vmul.f32 %v243, %v4776
        %v4788 = vmul.f32 %v244, %v4776
        %v4789 = vmul.f32 %v245, %v4776
        %v4790 = vmul.f32 %v246, %v4776
        %v4791 = vmul.f32 %v247, %v4776
        %v4792 = vmul.f32 %v248, %v4776
        %v4793 = vmul.f32 %v249, %v4776
        %v4794 = vmul.f32 %v250, %v4776
        %v4795 = vmul.f32 %v251, %v4776
        %v4796 = vmul.f32 %v252, %v4776
        %v4797 = vmul.f32 %v253, %v4776
        %v4798 = vmul.f32 %v254, %v4776
        %v4799 = vmul.f32 %v255, %v4776
        %v4800 = vmul.f32 %v256, %v4776
        %v4801 = vmul.f32 %v257, %v4776
        %v4802 = vmul.f32 %v258, %v4776
        %v4803 = vmul.f32 %v259, %v4776
        %v4804 = vmul.f32 %v260, %v4776
        %v4805 = vmul.f32 %v261, %v4776
        %v4806 = vmul.f32 %v262, %v4776
        %v4807 = vmul.f32 %v263, %v4776
        %v4808 = vmul.f32 %v264, %v4776
        %v4809 = vmul.f32 %v265, %v4776
        %v4810 = vmul.f32 %v266, %v4776
        %v4811 = vmul.f32 %v267, %v4776
        %v4812 = vmul.f32 %v268, %v4776
        %v4813 = vmul.f32 %v269, %v4776
        %v4814 = vmul.f32 %v270, %v4776
        %v4815 = vmul.f32 %v271, %v4776
        %v4816 = vmul.f32 %v272, %v4776
        %v4817 = vmul.f32 %v273, %v4776
        %v4818 = vmul.f32 %v274, %v4776
        %v4819 = vmul.f32 %v275, %v4776
        %v4820 = vmul.f32 %v276, %v4776
        %v4821 = vmul.f32 %v277, %v4776
        %v4822 = vmul.f32 %v278, %v4776
        %v4823 = vmul.f32 %v279, %v4776
        %v4824 = vmul.f32 %v280, %v4776
        %v4873 = vrot.slane %v4777, 2
        %v4874 = vrot.slane %v4778, 2
        %v4875 = vsel %vm694, %v4873, %v4874
        %v4876 = vrot.slane %v4779, 2
        %v4877 = vsel %vm694, %v4874, %v4876
        %v4878 = vrot.slane %v4780, 2
        %v4879 = vrot.slane %v4781, 2
        %v4880 = vsel %vm694, %v4878, %v4879
        %v4881 = vrot.slane %v4782, 2
        %v4882 = vsel %vm694, %v4879, %v4881
        %v4883 = vrot.slane %v4783, 2
        %v4884 = vrot.slane %v4784, 2
        %v4885 = vsel %vm694, %v4883, %v4884
        %v4886 = vrot.slane %v4785, 2
        %v4887 = vsel %vm694, %v4884, %v4886
        %v4888 = vrot.slane %v4786, 2
        %v4889 = vrot.slane %v4787, 2
        %v4890 = vsel %vm694, %v4888, %v4889
        %v4891 = vrot.slane %v4788, 2
        %v4892 = vsel %vm694, %v4889, %v4891
        %v4893 = vrot.slane %v4789, 2
        %v4894 = vrot.slane %v4790, 2
        %v4895 = vsel %vm694, %v4893, %v4894
        %v4896 = vrot.slane %v4791, 2
        %v4897 = vsel %vm694, %v4894, %v4896
        %v4898 = vrot.slane %v4792, 2
        %v4899 = vrot.slane %v4793, 2
        %v4900 = vsel %vm694, %v4898, %v4899
        %v4901 = vrot.slane %v4794, 2
        %v4902 = vsel %vm694, %v4899, %v4901
        %v4903 = vrot.slane %v4795, 2
        %v4904 = vrot.slane %v4796, 2
        %v4905 = vsel %vm694, %v4903, %v4904
        %v4906 = vrot.slane %v4797, 2
        %v4907 = vsel %vm694, %v4904, %v4906
        %v4908 = vrot.slane %v4798, 2
        %v4909 = vrot.slane %v4799, 2
        %v4910 = vsel %vm694, %v4908, %v4909
        %v4911 = vrot.slane %v4800, 2
        %v4912 = vsel %vm694, %v4909, %v4911
        %v4913 = vrot.slane %v4801, 2
        %v4914 = vrot.slane %v4802, 2
        %v4915 = vsel %vm694, %v4913, %v4914
        %v4916 = vrot.slane %v4803, 2
        %v4917 = vsel %vm694, %v4914, %v4916
        %v4918 = vrot.slane %v4804, 2
        %v4919 = vrot.slane %v4805, 2
        %v4920 = vsel %vm694, %v4918, %v4919
        %v4921 = vrot.slane %v4806, 2
        %v4922 = vsel %vm694, %v4919, %v4921
        %v4923 = vrot.slane %v4807, 2
        %v4924 = vrot.slane %v4808, 2
        %v4925 = vsel %vm694, %v4923, %v4924
        %v4926 = vrot.slane %v4809, 2
        %v4927 = vsel %vm694, %v4924, %v4926
        %v4928 = vrot.slane %v4810, 2
        %v4929 = vrot.slane %v4811, 2
        %v4930 = vsel %vm694, %v4928, %v4929
        %v4931 = vrot.slane %v4812, 2
        %v4932 = vsel %vm694, %v4929, %v4931
        %v4933 = vrot.slane %v4813, 2
        %v4934 = vrot.slane %v4814, 2
        %v4935 = vsel %vm694, %v4933, %v4934
        %v4936 = vrot.slane %v4815, 2
        %v4937 = vsel %vm694, %v4934, %v4936
        %v4938 = vrot.slane %v4816, 2
        %v4939 = vrot.slane %v4817, 2
        %v4940 = vsel %vm694, %v4938, %v4939
        %v4941 = vrot.slane %v4818, 2
        %v4942 = vsel %vm694, %v4939, %v4941
        %v4943 = vrot.slane %v4819, 2
        %v4944 = vrot.slane %v4820, 2
        %v4945 = vsel %vm694, %v4943, %v4944
        %v4946 = vrot.slane %v4821, 2
        %v4947 = vsel %vm694, %v4944, %v4946
        %v4948 = vrot.slane %v4822, 2
        %v4949 = vrot.slane %v4823, 2
        %v4950 = vsel %vm694, %v4948, %v4949
        %v4951 = vrot.slane %v4824, 2
        %v4952 = vsel %vm694, %v4949, %v4951
        %v4985 = vadd.f32 %v4741, %v4875
        %v4986 = vadd.f32 %v4742, %v4877
        %v4987 = vadd.f32 %v4743, %v4880
        %v4988 = vadd.f32 %v4744, %v4882
        %v4989 = vadd.f32 %v4745, %v4885
        %v4990 = vadd.f32 %v4746, %v4887
        %v4991 = vadd.f32 %v4747, %v4890
        %v4992 = vadd.f32 %v4748, %v4892
        %v4993 = vadd.f32 %v4749, %v4895
        %v4994 = vadd.f32 %v4750, %v4897
        %v4995 = vadd.f32 %v4751, %v4900
        %v4996 = vadd.f32 %v4752, %v4902
        %v4997 = vadd.f32 %v4753, %v4905
        %v4998 = vadd.f32 %v4754, %v4907
        %v4999 = vadd.f32 %v4755, %v4910
        %v5000 = vadd.f32 %v4756, %v4912
        %v5001 = vadd.f32 %v4757, %v4915
        %v5002 = vadd.f32 %v4758, %v4917
        %v5003 = vadd.f32 %v4759, %v4920
        %v5004 = vadd.f32 %v4760, %v4922
        %v5005 = vadd.f32 %v4761, %v4925
        %v5006 = vadd.f32 %v4762, %v4927
        %v5007 = vadd.f32 %v4763, %v4930
        %v5008 = vadd.f32 %v4764, %v4932
        %v5009 = vadd.f32 %v4765, %v4935
        %v5010 = vadd.f32 %v4766, %v4937
        %v5011 = vadd.f32 %v4767, %v4940
        %v5012 = vadd.f32 %v4768, %v4942
        %v5013 = vadd.f32 %v4769, %v4945
        %v5014 = vadd.f32 %v4770, %v4947
        %v5015 = vadd.f32 %v4771, %v4950
        %v5016 = vadd.f32 %v4772, %v4952
        %v5017 = vlaneseq
        %v5018 = vshrl.u32 %v5017, 7
        %v5019 = vsub.s32 3, %v5018
        %v5020 = vrot.slane %v220, %v5019
        %v5021 = vmul.f32 %v233, %v5020
        %v5022 = vmul.f32 %v234, %v5020
        %v5023 = vmul.f32 %v235, %v5020
        %v5024 = vmul.f32 %v236, %v5020
        %v5025 = vmul.f32 %v237, %v5020
        %v5026 = vmul.f32 %v238, %v5020
        %v5027 = vmul.f32 %v239, %v5020
        %v5028 = vmul.f32 %v240, %v5020
        %v5029 = vmul.f32 %v241, %v5020
        %v5030 = vmul.f32 %v242, %v5020
        %v5031 = vmul.f32 %v243, %v5020
        %v5032 = vmul.f32 %v244, %v5020
        %v5033 = vmul.f32 %v245, %v5020
        %v5034 = vmul.f32 %v246, %v5020
        %v5035 = vmul.f32 %v247, %v5020
        %v5036 = vmul.f32 %v248, %v5020
        %v5037 = vmul.f32 %v249, %v5020
        %v5038 = vmul.f32 %v250, %v5020
        %v5039 = vmul.f32 %v251, %v5020
        %v5040 = vmul.f32 %v252, %v5020
        %v5041 = vmul.f32 %v253, %v5020
        %v5042 = vmul.f32 %v254, %v5020
        %v5043 = vmul.f32 %v255, %v5020
        %v5044 = vmul.f32 %v256, %v5020
        %v5045 = vmul.f32 %v257, %v5020
        %v5046 = vmul.f32 %v258, %v5020
        %v5047 = vmul.f32 %v259, %v5020
        %v5048 = vmul.f32 %v260, %v5020
        %v5049 = vmul.f32 %v261, %v5020
        %v5050 = vmul.f32 %v262, %v5020
        %v5051 = vmul.f32 %v263, %v5020
        %v5052 = vmul.f32 %v264, %v5020
        %v5053 = vmul.f32 %v265, %v5020
        %v5054 = vmul.f32 %v266, %v5020
        %v5055 = vmul.f32 %v267, %v5020
        %v5056 = vmul.f32 %v268, %v5020
        %v5057 = vmul.f32 %v269, %v5020
        %v5058 = vmul.f32 %v270, %v5020
        %v5059 = vmul.f32 %v271, %v5020
        %v5060 = vmul.f32 %v272, %v5020
        %v5061 = vmul.f32 %v273, %v5020
        %v5062 = vmul.f32 %v274, %v5020
        %v5063 = vmul.f32 %v275, %v5020
        %v5064 = vmul.f32 %v276, %v5020
        %v5065 = vmul.f32 %v277, %v5020
        %v5066 = vmul.f32 %v278, %v5020
        %v5067 = vmul.f32 %v279, %v5020
        %v5068 = vmul.f32 %v280, %v5020
        %v5117 = vrot.slane %v5021, 3
        %v5118 = vrot.slane %v5022, 3
        %v5119 = vsel %vm939, %v5117, %v5118
        %v5120 = vrot.slane %v5023, 3
        %v5121 = vsel %vm939, %v5118, %v5120
        %v5122 = vrot.slane %v5024, 3
        %v5123 = vrot.slane %v5025, 3
        %v5124 = vsel %vm939, %v5122, %v5123
        %v5125 = vrot.slane %v5026, 3
        %v5126 = vsel %vm939, %v5123, %v5125
        %v5127 = vrot.slane %v5027, 3
        %v5128 = vrot.slane %v5028, 3
        %v5129 = vsel %vm939, %v5127, %v5128
        %v5130 = vrot.slane %v5029, 3
        %v5131 = vsel %vm939, %v5128, %v5130
        %v5132 = vrot.slane %v5030, 3
        %v5133 = vrot.slane %v5031, 3
        %v5134 = vsel %vm939, %v5132, %v5133
        %v5135 = vrot.slane %v5032, 3
        %v5136 = vsel %vm939, %v5133, %v5135
        %v5137 = vrot.slane %v5033, 3
        %v5138 = vrot.slane %v5034, 3
        %v5139 = vsel %vm939, %v5137, %v5138
        %v5140 = vrot.slane %v5035, 3
        %v5141 = vsel %vm939, %v5138, %v5140
        %v5142 = vrot.slane %v5036, 3
        %v5143 = vrot.slane %v5037, 3
        %v5144 = vsel %vm939, %v5142, %v5143
        %v5145 = vrot.slane %v5038, 3
        %v5146 = vsel %vm939, %v5143, %v5145
        %v5147 = vrot.slane %v5039, 3
        %v5148 = vrot.slane %v5040, 3
        %v5149 = vsel %vm939, %v5147, %v5148
        %v5150 = vrot.slane %v5041, 3
        %v5151 = vsel %vm939, %v5148, %v5150
        %v5152 = vrot.slane %v5042, 3
        %v5153 = vrot.slane %v5043, 3
        %v5154 = vsel %vm939, %v5152, %v5153
        %v5155 = vrot.slane %v5044, 3
        %v5156 = vsel %vm939, %v5153, %v5155
        %v5157 = vrot.slane %v5045, 3
        %v5158 = vrot.slane %v5046, 3
        %v5159 = vsel %vm939, %v5157, %v5158
        %v5160 = vrot.slane %v5047, 3
        %v5161 = vsel %vm939, %v5158, %v5160
        %v5162 = vrot.slane %v5048, 3
        %v5163 = vrot.slane %v5049, 3
        %v5164 = vsel %vm939, %v5162, %v5163
        %v5165 = vrot.slane %v5050, 3
        %v5166 = vsel %vm939, %v5163, %v5165
        %v5167 = vrot.slane %v5051, 3
        %v5168 = vrot.slane %v5052, 3
        %v5169 = vsel %vm939, %v5167, %v5168
        %v5170 = vrot.slane %v5053, 3
        %v5171 = vsel %vm939, %v5168, %v5170
        %v5172 = vrot.slane %v5054, 3
        %v5173 = vrot.slane %v5055, 3
        %v5174 = vsel %vm939, %v5172, %v5173
        %v5175 = vrot.slane %v5056, 3
        %v5176 = vsel %vm939, %v5173, %v5175
        %v5177 = vrot.slane %v5057, 3
        %v5178 = vrot.slane %v5058, 3
        %v5179 = vsel %vm939, %v5177, %v5178
        %v5180 = vrot.slane %v5059, 3
        %v5181 = vsel %vm939, %v5178, %v5180
        %v5182 = vrot.slane %v5060, 3
        %v5183 = vrot.slane %v5061, 3
        %v5184 = vsel %vm939, %v5182, %v5183
        %v5185 = vrot.slane %v5062, 3
        %v5186 = vsel %vm939, %v5183, %v5185
        %v5187 = vrot.slane %v5063, 3
        %v5188 = vrot.slane %v5064, 3
        %v5189 = vsel %vm939, %v5187, %v5188
        %v5190 = vrot.slane %v5065, 3
        %v5191 = vsel %vm939, %v5188, %v5190
        %v5192 = vrot.slane %v5066, 3
        %v5193 = vrot.slane %v5067, 3
        %v5194 = vsel %vm939, %v5192, %v5193
        %v5195 = vrot.slane %v5068, 3
        %v5196 = vsel %vm939, %v5193, %v5195
        %v5229 = vadd.f32 %v4985, %v5119
        %v5230 = vadd.f32 %v4986, %v5121
        %v5231 = vadd.f32 %v4987, %v5124
        %v5232 = vadd.f32 %v4988, %v5126
        %v5233 = vadd.f32 %v4989, %v5129
        %v5234 = vadd.f32 %v4990, %v5131
        %v5235 = vadd.f32 %v4991, %v5134
        %v5236 = vadd.f32 %v4992, %v5136
        %v5237 = vadd.f32 %v4993, %v5139
        %v5238 = vadd.f32 %v4994, %v5141
        %v5239 = vadd.f32 %v4995, %v5144
        %v5240 = vadd.f32 %v4996, %v5146
        %v5241 = vadd.f32 %v4997, %v5149
        %v5242 = vadd.f32 %v4998, %v5151
        %v5243 = vadd.f32 %v4999, %v5154
        %v5244 = vadd.f32 %v5000, %v5156
        %v5245 = vadd.f32 %v5001, %v5159
        %v5246 = vadd.f32 %v5002, %v5161
        %v5247 = vadd.f32 %v5003, %v5164
        %v5248 = vadd.f32 %v5004, %v5166
        %v5249 = vadd.f32 %v5005, %v5169
        %v5250 = vadd.f32 %v5006, %v5171
        %v5251 = vadd.f32 %v5007, %v5174
        %v5252 = vadd.f32 %v5008, %v5176
        %v5253 = vadd.f32 %v5009, %v5179
        %v5254 = vadd.f32 %v5010, %v5181
        %v5255 = vadd.f32 %v5011, %v5184
        %v5256 = vadd.f32 %v5012, %v5186
        %v5257 = vadd.f32 %v5013, %v5189
        %v5258 = vadd.f32 %v5014, %v5191
        %v5259 = vadd.f32 %v5015, %v5194
        %v5260 = vadd.f32 %v5016, %v5196
        %v5261 = vlaneseq
        %v5262 = vshrl.u32 %v5261, 7
        %v5263 = vsub.s32 4, %v5262
        %v5264 = vrot.slane %v220, %v5263
        %v5265 = vmul.f32 %v233, %v5264
        %v5266 = vmul.f32 %v234, %v5264
        %v5267 = vmul.f32 %v235, %v5264
        %v5268 = vmul.f32 %v236, %v5264
        %v5269 = vmul.f32 %v237, %v5264
        %v5270 = vmul.f32 %v238, %v5264
        %v5271 = vmul.f32 %v239, %v5264
        %v5272 = vmul.f32 %v240, %v5264
        %v5273 = vmul.f32 %v241, %v5264
        %v5274 = vmul.f32 %v242, %v5264
        %v5275 = vmul.f32 %v243, %v5264
        %v5276 = vmul.f32 %v244, %v5264
        %v5277 = vmul.f32 %v245, %v5264
        %v5278 = vmul.f32 %v246, %v5264
        %v5279 = vmul.f32 %v247, %v5264
        %v5280 = vmul.f32 %v248, %v5264
        %v5281 = vmul.f32 %v249, %v5264
        %v5282 = vmul.f32 %v250, %v5264
        %v5283 = vmul.f32 %v251, %v5264
        %v5284 = vmul.f32 %v252, %v5264
        %v5285 = vmul.f32 %v253, %v5264
        %v5286 = vmul.f32 %v254, %v5264
        %v5287 = vmul.f32 %v255, %v5264
        %v5288 = vmul.f32 %v256, %v5264
        %v5289 = vmul.f32 %v257, %v5264
        %v5290 = vmul.f32 %v258, %v5264
        %v5291 = vmul.f32 %v259, %v5264
        %v5292 = vmul.f32 %v260, %v5264
        %v5293 = vmul.f32 %v261, %v5264
        %v5294 = vmul.f32 %v262, %v5264
        %v5295 = vmul.f32 %v263, %v5264
        %v5296 = vmul.f32 %v264, %v5264
        %v5297 = vmul.f32 %v265, %v5264
        %v5298 = vmul.f32 %v266, %v5264
        %v5299 = vmul.f32 %v267, %v5264
        %v5300 = vmul.f32 %v268, %v5264
        %v5301 = vmul.f32 %v269, %v5264
        %v5302 = vmul.f32 %v270, %v5264
        %v5303 = vmul.f32 %v271, %v5264
        %v5304 = vmul.f32 %v272, %v5264
        %v5305 = vmul.f32 %v273, %v5264
        %v5306 = vmul.f32 %v274, %v5264
        %v5307 = vmul.f32 %v275, %v5264
        %v5308 = vmul.f32 %v276, %v5264
        %v5309 = vmul.f32 %v277, %v5264
        %v5310 = vmul.f32 %v278, %v5264
        %v5311 = vmul.f32 %v279, %v5264
        %v5312 = vmul.f32 %v280, %v5264
        %v5361 = vrot.slane %v5265, 4
        %v5362 = vrot.slane %v5266, 4
        %v5363 = vsel %vm1184, %v5361, %v5362
        %v5364 = vrot.slane %v5267, 4
        %v5365 = vsel %vm1184, %v5362, %v5364
        %v5366 = vrot.slane %v5268, 4
        %v5367 = vrot.slane %v5269, 4
        %v5368 = vsel %vm1184, %v5366, %v5367
        %v5369 = vrot.slane %v5270, 4
        %v5370 = vsel %vm1184, %v5367, %v5369
        %v5371 = vrot.slane %v5271, 4
        %v5372 = vrot.slane %v5272, 4
        %v5373 = vsel %vm1184, %v5371, %v5372
        %v5374 = vrot.slane %v5273, 4
        %v5375 = vsel %vm1184, %v5372, %v5374
        %v5376 = vrot.slane %v5274, 4
        %v5377 = vrot.slane %v5275, 4
        %v5378 = vsel %vm1184, %v5376, %v5377
        %v5379 = vrot.slane %v5276, 4
        %v5380 = vsel %vm1184, %v5377, %v5379
        %v5381 = vrot.slane %v5277, 4
        %v5382 = vrot.slane %v5278, 4
        %v5383 = vsel %vm1184, %v5381, %v5382
        %v5384 = vrot.slane %v5279, 4
        %v5385 = vsel %vm1184, %v5382, %v5384
        %v5386 = vrot.slane %v5280, 4
        %v5387 = vrot.slane %v5281, 4
        %v5388 = vsel %vm1184, %v5386, %v5387
        %v5389 = vrot.slane %v5282, 4
        %v5390 = vsel %vm1184, %v5387, %v5389
        %v5391 = vrot.slane %v5283, 4
        %v5392 = vrot.slane %v5284, 4
        %v5393 = vsel %vm1184, %v5391, %v5392
        %v5394 = vrot.slane %v5285, 4
        %v5395 = vsel %vm1184, %v5392, %v5394
        %v5396 = vrot.slane %v5286, 4
        %v5397 = vrot.slane %v5287, 4
        %v5398 = vsel %vm1184, %v5396, %v5397
        %v5399 = vrot.slane %v5288, 4
        %v5400 = vsel %vm1184, %v5397, %v5399
        %v5401 = vrot.slane %v5289, 4
        %v5402 = vrot.slane %v5290, 4
        %v5403 = vsel %vm1184, %v5401, %v5402
        %v5404 = vrot.slane %v5291, 4
        %v5405 = vsel %vm1184, %v5402, %v5404
        %v5406 = vrot.slane %v5292, 4
        %v5407 = vrot.slane %v5293, 4
        %v5408 = vsel %vm1184, %v5406, %v5407
        %v5409 = vrot.slane %v5294, 4
        %v5410 = vsel %vm1184, %v5407, %v5409
        %v5411 = vrot.slane %v5295, 4
        %v5412 = vrot.slane %v5296, 4
        %v5413 = vsel %vm1184, %v5411, %v5412
        %v5414 = vrot.slane %v5297, 4
        %v5415 = vsel %vm1184, %v5412, %v5414
        %v5416 = vrot.slane %v5298, 4
        %v5417 = vrot.slane %v5299, 4
        %v5418 = vsel %vm1184, %v5416, %v5417
        %v5419 = vrot.slane %v5300, 4
        %v5420 = vsel %vm1184, %v5417, %v5419
        %v5421 = vrot.slane %v5301, 4
        %v5422 = vrot.slane %v5302, 4
        %v5423 = vsel %vm1184, %v5421, %v5422
        %v5424 = vrot.slane %v5303, 4
        %v5425 = vsel %vm1184, %v5422, %v5424
        %v5426 = vrot.slane %v5304, 4
        %v5427 = vrot.slane %v5305, 4
        %v5428 = vsel %vm1184, %v5426, %v5427
        %v5429 = vrot.slane %v5306, 4
        %v5430 = vsel %vm1184, %v5427, %v5429
        %v5431 = vrot.slane %v5307, 4
        %v5432 = vrot.slane %v5308, 4
        %v5433 = vsel %vm1184, %v5431, %v5432
        %v5434 = vrot.slane %v5309, 4
        %v5435 = vsel %vm1184, %v5432, %v5434
        %v5436 = vrot.slane %v5310, 4
        %v5437 = vrot.slane %v5311, 4
        %v5438 = vsel %vm1184, %v5436, %v5437
        %v5439 = vrot.slane %v5312, 4
        %v5440 = vsel %vm1184, %v5437, %v5439
        %v5473 = vadd.f32 %v5229, %v5363
        %v5474 = vadd.f32 %v5230, %v5365
        %v5475 = vadd.f32 %v5231, %v5368
        %v5476 = vadd.f32 %v5232, %v5370
        %v5477 = vadd.f32 %v5233, %v5373
        %v5478 = vadd.f32 %v5234, %v5375
        %v5479 = vadd.f32 %v5235, %v5378
        %v5480 = vadd.f32 %v5236, %v5380
        %v5481 = vadd.f32 %v5237, %v5383
        %v5482 = vadd.f32 %v5238, %v5385
        %v5483 = vadd.f32 %v5239, %v5388
        %v5484 = vadd.f32 %v5240, %v5390
        %v5485 = vadd.f32 %v5241, %v5393
        %v5486 = vadd.f32 %v5242, %v5395
        %v5487 = vadd.f32 %v5243, %v5398
        %v5488 = vadd.f32 %v5244, %v5400
        %v5489 = vadd.f32 %v5245, %v5403
        %v5490 = vadd.f32 %v5246, %v5405
        %v5491 = vadd.f32 %v5247, %v5408
        %v5492 = vadd.f32 %v5248, %v5410
        %v5493 = vadd.f32 %v5249, %v5413
        %v5494 = vadd.f32 %v5250, %v5415
        %v5495 = vadd.f32 %v5251, %v5418
        %v5496 = vadd.f32 %v5252, %v5420
        %v5497 = vadd.f32 %v5253, %v5423
        %v5498 = vadd.f32 %v5254, %v5425
        %v5499 = vadd.f32 %v5255, %v5428
        %v5500 = vadd.f32 %v5256, %v5430
        %v5501 = vadd.f32 %v5257, %v5433
        %v5502 = vadd.f32 %v5258, %v5435
        %v5503 = vadd.f32 %v5259, %v5438
        %v5504 = vadd.f32 %v5260, %v5440
        %v5505 = vld [vmem:[#allocation7] sm:$0x1]
        %v5507 = vlaneseq
        %v5508 = vshrl.u32 %v5507, 7
        %v5509 = vsub.s32 0, %v5508
        %v5510 = vrot.slane %v5505, %v5509
        %v5512 = vadd.f32 %v5473, %v5510
        %v5513 = vadd.f32 %v5474, %v5510
        %v5514 = vadd.f32 %v5475, %v5510
        %v5515 = vadd.f32 %v5476, %v5510
        %v5516 = vadd.f32 %v5477, %v5510
        %v5517 = vadd.f32 %v5478, %v5510
        %v5518 = vadd.f32 %v5479, %v5510
        %v5519 = vadd.f32 %v5480, %v5510
        %v5520 = vadd.f32 %v5481, %v5510
        %v5521 = vadd.f32 %v5482, %v5510
        %v5522 = vadd.f32 %v5483, %v5510
        %v5523 = vadd.f32 %v5484, %v5510
        %v5524 = vadd.f32 %v5485, %v5510
        %v5525 = vadd.f32 %v5486, %v5510
        %v5526 = vadd.f32 %v5487, %v5510
        %v5527 = vadd.f32 %v5488, %v5510
        %v5528 = vadd.f32 %v5489, %v5510
        %v5529 = vadd.f32 %v5490, %v5510
        %v5530 = vadd.f32 %v5491, %v5510
        %v5531 = vadd.f32 %v5492, %v5510
        %v5532 = vadd.f32 %v5493, %v5510
        %v5533 = vadd.f32 %v5494, %v5510
        %v5534 = vadd.f32 %v5495, %v5510
        %v5535 = vadd.f32 %v5496, %v5510
        %v5536 = vadd.f32 %v5497, %v5510
        %v5537 = vadd.f32 %v5498, %v5510
        %v5538 = vadd.f32 %v5499, %v5510
        %v5539 = vadd.f32 %v5500, %v5510
        %v5540 = vadd.f32 %v5501, %v5510
        %v5541 = vadd.f32 %v5502, %v5510
        %v5542 = vadd.f32 %v5503, %v5510
        %v5543 = vadd.f32 %v5504, %v5510
        %vm5544 = vcmask 64512
        %5545 = vst.msk [vmem:[%s215] sm:$0xff] %vm5544, %v5512
        %5546 = vst.msk [vmem:[%s215 + $0x8] sm:$0xff] %vm5544, %v5513
        %5547 = vst.msk [vmem:[%s215 + $0x10] sm:$0xff] %vm5544, %v5514
        %5548 = vst.msk [vmem:[%s215 + $0x18] sm:$0xff] %vm5544, %v5515
        %5549 = vst.msk [vmem:[%s215 + $0x20] sm:$0xff] %vm5544, %v5516
        %5550 = vst.msk [vmem:[%s215 + $0x28] sm:$0xff] %vm5544, %v5517
        %5551 = vst.msk [vmem:[%s215 + $0x30] sm:$0xff] %vm5544, %v5518
        %5552 = vst.msk [vmem:[%s215 + $0x38] sm:$0xff] %vm5544, %v5519
        %5553 = vst.msk [vmem:[%s215 + $0x40] sm:$0xff] %vm5544, %v5520
        %5554 = vst.msk [vmem:[%s215 + $0x48] sm:$0xff] %vm5544, %v5521
        %5555 = vst.msk [vmem:[%s215 + $0x50] sm:$0xff] %vm5544, %v5522
        %5556 = vst.msk [vmem:[%s215 + $0x58] sm:$0xff] %vm5544, %v5523
        %5557 = vst.msk [vmem:[%s215 + $0x60] sm:$0xff] %vm5544, %v5524
        %5558 = vst.msk [vmem:[%s215 + $0x68] sm:$0xff] %vm5544, %v5525
        %5559 = vst.msk [vmem:[%s215 + $0x70] sm:$0xff] %vm5544, %v5526
        %5560 = vst.msk [vmem:[%s215 + $0x78] sm:$0xff] %vm5544, %v5527
        %5561 = vst.msk [vmem:[%s215 + $0x80] sm:$0xff] %vm5544, %v5528
        %5562 = vst.msk [vmem:[%s215 + $0x88] sm:$0xff] %vm5544, %v5529
        %5563 = vst.msk [vmem:[%s215 + $0x90] sm:$0xff] %vm5544, %v5530
        %5564 = vst.msk [vmem:[%s215 + $0x98] sm:$0xff] %vm5544, %v5531
        %5565 = vst.msk [vmem:[%s215 + $0xa0] sm:$0xff] %vm5544, %v5532
        %5566 = vst.msk [vmem:[%s215 + $0xa8] sm:$0xff] %vm5544, %v5533
        %5567 = vst.msk [vmem:[%s215 + $0xb0] sm:$0xff] %vm5544, %v5534
        %5568 = vst.msk [vmem:[%s215 + $0xb8] sm:$0xff] %vm5544, %v5535
        %5569 = vst.msk [vmem:[%s215 + $0xc0] sm:$0xff] %vm5544, %v5536
        %5570 = vst.msk [vmem:[%s215 + $0xc8] sm:$0xff] %vm5544, %v5537
        %5571 = vst.msk [vmem:[%s215 + $0xd0] sm:$0xff] %vm5544, %v5538
        %5572 = vst.msk [vmem:[%s215 + $0xd8] sm:$0xff] %vm5544, %v5539
        %5573 = vst.msk [vmem:[%s215 + $0xe0] sm:$0xff] %vm5544, %v5540
        %5574 = vst.msk [vmem:[%s215 + $0xe8] sm:$0xff] %vm5544, %v5541
        %5575 = vst.msk [vmem:[%s215 + $0xf0] sm:$0xff] %vm5544, %v5542
        %5576 = vst.msk [vmem:[%s215 + $0xf8] sm:$0xff] %vm5544, %v5543
        %s5577 = sand.u32 %s97, 1
        %s5578 = scalar_lea.sflag [#allocation4], %s5577
        %s5579 = sand.u32 %s97, 1
        %s5580 = smul.addr %s5579, 256
        %s5581 = scalar_lea.vmem [#allocation8], %s5580
        // Predicated region
        $region45: #{tpu_custom_call.1} parent=31 // pred_check
          %p5582 = pneg %p107
        $region46: #{tpu_custom_call.1} parent=31 // pred_check_branch
          %5584 = sbr.rel (%p5582) target = $region48
        $region47: #{tpu_custom_call.1} parent=31 // pred_region
          %s5586 = ssub.s32 4096, 4096
          %5587 = vsyncadd %s5578, %s5586
          %s5588 = smul.addr %s21, 32
          %s5589 = smul.addr %s5588, 128
          %s5590 = scalar_lea.hbm %s3, %s5589
          %s5591 = sshll.u32 %s5581, 4
          %s5592 = int_to_ptr.vmem [resolvable:$true] %s5591
          %5597 = dma.vmem_to_hbm [thread:$0]  %s5592, 4096, %s5590, %s5578, 128, 128, 8
        $region48: #{tpu_custom_call.1} parent=31 // pred_fallthru
          _
      $region32: #{tpu_custom_call.1} parent=5 // pred_fallthru
        _
      %p5598 = scmp.le.s32.totalorder 2, %s16
      // Predicated region
      $region49: #{tpu_custom_call.1} parent=5 // pred_check
        %p5599 = pneg %p5598
      $region50: #{tpu_custom_call.1} parent=5 // pred_check_branch
        %5601 = sbr.rel (%p5599) target = $region52
      $region51: #{tpu_custom_call.1} parent=5 // pred_region
        %s5602 = ssub.s32 %s16, 2
        // Predicated region
        $region53: #{tpu_custom_call.1} parent=51 // pred_check
          %p5603 = pneg %p113
        $region54: #{tpu_custom_call.1} parent=51 // pred_check_branch
          %5605 = sbr.rel (%p5603) target = $region56
        $region55: #{tpu_custom_call.1} parent=51 // pred_region
          %s5606 = sand.u32 %s98, 1
          %s5607 = scalar_lea.sflag [#allocation4], %s5606
          %s5608 = sand.u32 %s98, 1
          %s5609 = smul.addr %s5608, 256
          %s5610 = scalar_lea.vmem [#allocation8], %s5609
          %5611 = dma.done %s5607, 4096
        $region56: #{tpu_custom_call.1} parent=51 // pred_fallthru
          _
      $region52: #{tpu_custom_call.1} parent=5 // pred_fallthru
        _
    $region6: #{tpu_custom_call.1} parent=1 // loop_footer
      %s20 = sadd.s32 1, %s16
    $region7: #{tpu_custom_call.1} parent=1 // loop_footer_branch
      %15 = sbr.rel target = $region3
    $region8: #{tpu_custom_call.1} parent=1 // loop_exit
      _
    %5612 = vsyncpa [#allocation3], 1
    %s5613 = scalar_lea.sflag [#allocation3], 1
    %5614 = vsyncpa %s5613, 1
    %5615 = vsyncpa [#allocation6], 1
    %5616 = vsyncpa [#allocation4], 1
    %s5617 = scalar_lea.sflag [#allocation4], 1
    %5618 = vsyncpa %s5617, 1

</llo_original>
